<compile_context>
chip_gen: v6e
topology: v6e:2x2x1
jax: 0.10.0
libtpu: 0.0.40
codegen_flags: <defaults>
</compile_context>

<pallas_src>
import functools

import jax
import jax.numpy as jnp
from jax.experimental import pallas as pl
from jax.experimental.pallas import tpu as pltpu


def _round_up(x, m):
    return (x + m - 1) // m * m


def _pick_row_tile(H, target, need_even):
    """Largest divisor of H that is <= target (and even when pooling)."""
    target = max(1, min(target, H))
    for cand in range(target, 0, -1):
        if H % cand == 0 and (not need_even or cand % 2 == 0):
            return cand
    return H


def _dblock_kernel(xt_ref, w1_ref, b1_ref, w31_ref, b31_ref, w32_ref, b32_ref,
                   out_ref, *scratch, H, W, TH, Tho, Wo, We, Cin_p, Cout_p,
                   relu_first, downsampling, compute_dtype):
    """One grid step == one (batch, row-tile) pair."""
    f32 = jnp.float32
    He_t = TH + 2                       # extended conv3_1 rows (incl. 1-row halo)
    t = pl.program_id(1)

    xp = xt_ref[0]                      # (TH+4, Wp, Cin_p), compute_dtype

    # ---------------- conv3_1 on the extended (He_t, We) grid -----------------
    # Accumulated over kw (dx): per dx one sublane-shifted copy (dx=0 is free),
    # the 3 kh taps are cheap leading-axis slices, K = 3*Cin_p per matmul.
    acc1 = None
    center = None                       # branch-1 input, reused from dx=2 copy
    for dx in range(3):
        sxd = xp[:, dx:dx + We, :]                              # (TH+4, We, Cin_p)
        if dx == 2:
            center = sxd[2:TH + 2, 0:W, :]                      # pre-relu
        rxd = jnp.maximum(sxd, 0) if relu_first else sxd        # relu3_1
        col = jnp.concatenate(
            [rxd[0:He_t], rxd[1:He_t + 1], rxd[2:He_t + 2]],
            axis=-1).reshape(He_t * We, 3 * Cin_p)
        part = jnp.dot(col, w31_ref[dx], preferred_element_type=f32)
        acc1 = part if acc1 is None else acc1 + part

    y1 = jnp.maximum(acc1 + b31_ref[...], 0.0)                  # relu3_2 (f32)
    y1 = y1.reshape(He_t, We, Cin_p)

    # Zero the ring that plays the role of conv3_2's zero padding.
    ge = t * TH + jax.lax.broadcasted_iota(jnp.int32, (He_t, We, 1), 0)
    ce = jax.lax.broadcasted_iota(jnp.int32, (He_t, We, 1), 1)
    interior = ((ge >= 1) & (ge <= H) & (ce >= 1) & (ce <= W)).astype(f32)
    y1p = (y1 * interior).astype(compute_dtype)                 # cast once

    # ---------------- conv3_2 on the (TH, W) grid, same scheme ----------------
    acc2 = None
    for dx in range(3):
        syd = y1p[:, dx:dx + W, :]                              # (He_t, W, Cin_p)
        col = jnp.concatenate(
            [syd[0:TH], syd[1:TH + 1], syd[2:TH + 2]],
            axis=-1).reshape(TH * W, 3 * Cin_p)
        part = jnp.dot(col, w32_ref[dx], preferred_element_type=f32)
        acc2 = part if acc2 is None else acc2 + part

    # ---------------- branch 1: 1x1 conv == one channel matmul ----------------
    x1 = jnp.dot(center.reshape(TH * W, Cin_p), w1_ref[...],
                 preferred_element_type=f32)
    full = x1 + b1_ref[...] + acc2 + b32_ref[...]               # (TH*W, Cout_p)

    # --------------------------- AvgPool2d(2, 2) ------------------------------
    if downsampling:
        ps_ref = scratch[0]                                     # (Tho, W, Cout_p)
        fr = full.reshape(Tho, 2, W, Cout_p)
        ps_ref[...] = fr[:, 0] + fr[:, 1]                       # row pairs (value op)
        pooled = (ps_ref[:, pl.ds(0, Wo, stride=2), :] +
                  ps_ref[:, pl.ds(1, Wo, stride=2), :]) * 0.25  # column pairs
    else:
        pooled = full.reshape(TH, W, Cout_p)

    out_ref[0] = pooled.astype(out_ref.dtype)        # lane-dense (Cout_p) store


def dblock_pallas(x_nchw, params, *, relu_first=True, downsampling=True,
                  compute_dtype=jnp.bfloat16, row_tile=32):
    """PyTorch NCHW in / NCHW out; weights in torch OIHW layout."""
    w1, b1, w31, b31, w32, b32 = params
    N, Cin, H, W = x_nchw.shape
    Cout = w1.shape[0]
    if downsampling:
        assert H % 2 == 0 and W % 2 == 0, "AvgPool2d(2,2) path assumes even H, W"
        Ho, Wo = H // 2, W // 2
    else:
        Ho, Wo = H, W

    Cin_p = _round_up(Cin, 128)        # lane-dense channels (MXU K / N dims)
    Cout_p = _round_up(Cout, 128)      # lane-dense output (unmasked stores)
    We = _round_up(W + 2, 8)           # extended conv3_1 width (sublane-aligned)
    Wp = We + 2                        # padded input width

    TH = _pick_row_tile(H, row_tile, downsampling)   # output rows per tile
    n_tiles = H // TH
    Tho = TH // 2 if downsampling else TH
    cd = compute_dtype

    # NCHW -> NHWC, pad (2-row/col halo + width alignment + channels to 128),
    # cast once to the compute dtype (halves the input DMA when bf16), and
    # pre-gather overlapping row tiles carrying their 2-row halo.
    x = jnp.transpose(x_nchw, (0, 2, 3, 1)).astype(cd)
    xp = jnp.pad(x, ((0, 0), (2, 2), (2, Wp - W - 2), (0, Cin_p - Cin)))
    row_idx = jnp.arange(n_tiles)[:, None] * TH + jnp.arange(TH + 4)[None, :]
    xt = xp[:, row_idx].reshape(N * n_tiles, TH + 4, Wp, Cin_p)

    # Conv weights -> per-dx matmul layout: w[kw] has row index kh*Cin_p + ic.
    def pack3x3(w, co_p):
        co, ci = w.shape[0], w.shape[1]
        wt = jnp.transpose(w, (3, 2, 1, 0))                     # (kw, kh, ci, co)
        wt = jnp.pad(wt, ((0, 0), (0, 0), (0, Cin_p - ci), (0, co_p - co)))
        return wt.reshape(3, 3 * Cin_p, co_p).astype(cd)

    w1m = jnp.pad(jnp.transpose(w1[:, :, 0, 0], (1, 0)),
                  ((0, Cin_p - Cin), (0, Cout_p - Cout))).astype(cd)
    w31m = pack3x3(w31, Cin_p)
    w32m = pack3x3(w32, Cout_p)
    b1m = jnp.pad(b1, (0, Cout_p - Cout)).reshape(1, Cout_p).astype(jnp.float32)
    b31m = jnp.pad(b31, (0, Cin_p - Cin)).reshape(1, Cin_p).astype(jnp.float32)
    b32m = jnp.pad(b32, (0, Cout_p - Cout)).reshape(1, Cout_p).astype(jnp.float32)

    kernel = functools.partial(
        _dblock_kernel, H=H, W=W, TH=TH, Tho=Tho, Wo=Wo, We=We, Cin_p=Cin_p,
        Cout_p=Cout_p, relu_first=relu_first, downsampling=downsampling,
        compute_dtype=cd)

    scratch_shapes = ([pltpu.VMEM((Tho, W, Cout_p), jnp.float32)]
                      if downsampling else [])

    # VMEM budget from the actual (double-buffered) block sizes + working set.
    isz = jnp.dtype(cd).itemsize
    He_t = TH + 2
    in_block = (TH + 4) * Wp * Cin_p * isz
    w_bytes = (Cin_p * Cout_p + 9 * Cin_p * (Cin_p + Cout_p)) * isz \
        + (2 * Cout_p + Cin_p) * 4
    out_block = Tho * Wo * Cout_p * 4
    work = (He_t * We * (3 * Cin_p * isz + Cin_p * 4 + Cin_p * isz)
            + (TH + 4) * We * Cin_p * isz
            + 2 * TH * W * Cout_p * 4
            + (Tho * W * Cout_p * 4 if downsampling else 0))
    vmem_limit = int(min(max(2 * (in_block + out_block + w_bytes) + work
                             + (8 << 20), 24 << 20), 64 << 20))

    out = pl.pallas_call(
        kernel,
        out_shape=jax.ShapeDtypeStruct((N, Ho, Wo, Cout_p), jnp.float32),
        grid=(N, n_tiles),
        in_specs=[
            pl.BlockSpec((1, TH + 4, Wp, Cin_p),
                         lambda n, t: (n * n_tiles + t, 0, 0, 0)),
            pl.BlockSpec((Cin_p, Cout_p), lambda n, t: (0, 0)),
            pl.BlockSpec((1, Cout_p), lambda n, t: (0, 0)),
            pl.BlockSpec((3, 3 * Cin_p, Cin_p), lambda n, t: (0, 0, 0)),
            pl.BlockSpec((1, Cin_p), lambda n, t: (0, 0)),
            pl.BlockSpec((3, 3 * Cin_p, Cout_p), lambda n, t: (0, 0, 0)),
            pl.BlockSpec((1, Cout_p), lambda n, t: (0, 0)),
        ],
        out_specs=pl.BlockSpec((1, Tho, Wo, Cout_p), lambda n, t: (n, t, 0, 0)),
        scratch_shapes=scratch_shapes,
        compiler_params=pltpu.CompilerParams(
            dimension_semantics=("parallel", "parallel"),
            vmem_limit_bytes=vmem_limit),
    )(xt, w1m, b1m, w31m, b31m, w32m, b32m)

    out = out[..., :Cout]                       # drop lane padding
    return jnp.transpose(out, (0, 3, 1, 2))     # NHWC -> NCHW


# ------------------------------ pure-JAX reference ------------------------------
def dblock_ref(x, params, *, relu_first=True, downsampling=True):
    w1, b1, w31, b31, w32, b32 = params

    def conv(t, w, b, pad):
        y = jax.lax.conv_general_dilated(
            t, w, (1, 1), [(pad, pad), (pad, pad)],
            dimension_numbers=("NCHW", "OIHW", "NCHW"))
        return y + b[None, :, None, None]

    def pool(t):
        if not downsampling:
            return t
        n, c, h, w = t.shape
        return t.reshape(n, c, h // 2, 2, w // 2, 2).mean(axis=(3, 5))

    x1 = pool(conv(x, w1, b1, 0))
    x2 = jnp.maximum(x, 0.0) if relu_first else x
    x2 = conv(x2, w31, b31, 1)
    x2 = jnp.maximum(x2, 0.0)
    x2 = pool(conv(x2, w32, b32, 1))
    return x1 + x2


if __name__ == "__main__":
    N, Cin, H, W, Cout = 2, 4, 16, 16, 8

    key = jax.random.PRNGKey(0)
    kx, k1, k2, k3, k4, k5, k6 = jax.random.split(key, 7)

    def uniform(k, shape, bound):
        return jax.random.uniform(k, shape, jnp.float32, -bound, bound)

    x = jax.random.normal(kx, (N, Cin, H, W), jnp.float32)

    bnd1 = 1.0 / (Cin ** 0.5)          # PyTorch-style fan-in bounds (deterministic)
    bnd3 = 1.0 / ((Cin * 9) ** 0.5)
    params = (
        uniform(k1, (Cout, Cin, 1, 1), bnd1),   # conv1.weight
        uniform(k2, (Cout,), bnd1),             # conv1.bias
        uniform(k3, (Cin, Cin, 3, 3), bnd3),    # conv3_1.weight
        uniform(k4, (Cin,), bnd3),              # conv3_1.bias
        uniform(k5, (Cout, Cin, 3, 3), bnd3),   # conv3_2.weight
        uniform(k6, (Cout,), bnd3),             # conv3_2.bias
    )

    # f32 MXU path: near-exact vs. reference, across configs and row tilings
    # (row_tile=8 exercises the multi-tile halo path, 32 the single-tile path).
    for relu_first, downsampling, row_tile in [(True, True, 8),
                                               (True, True, 32),
                                               (True, False, 8),
                                               (False, True, 8)]:
        out = jax.block_until_ready(
            dblock_pallas(x, params, relu_first=relu_first,
                          downsampling=downsampling,
                          compute_dtype=jnp.float32, row_tile=row_tile))
        ref = jax.block_until_ready(
            dblock_ref(x, params, relu_first=relu_first,
                       downsampling=downsampling))
        assert out.shape == ref.shape, (out.shape, ref.shape)
        err = float(jnp.max(jnp.abs(out - ref)))
        assert jnp.allclose(out, ref, atol=2e-3, rtol=2e-3), \
            (relu_first, downsampling, row_tile, err)

    # Default path: bf16 input DMA + bf16 MXU operands, f32 accumulation.
    out_bf16 = jax.block_until_ready(dblock_pallas(x, params, row_tile=8))
    ref = jax.block_until_ready(dblock_ref(x, params))
    err = float(jnp.max(jnp.abs(out_bf16 - ref)))
    assert jnp.allclose(out_bf16, ref, atol=1e-1, rtol=1e-1), err

    print("KERNEL_OK")
</pallas_src>

<mosaic_0001>
module attributes {stable_mosaic.version = 11 : i64} {
  func.func @_dblock_kernel(%arg0: i32, %arg1: i32, %arg2: memref<1x12x26x128xf32, #tpu.memory_space<vmem>>, %arg3: memref<128x128xf32, #tpu.memory_space<vmem>>, %arg4: memref<1x128xf32, #tpu.memory_space<vmem>>, %arg5: memref<3x384x128xf32, #tpu.memory_space<vmem>>, %arg6: memref<1x128xf32, #tpu.memory_space<vmem>>, %arg7: memref<3x384x128xf32, #tpu.memory_space<vmem>>, %arg8: memref<1x128xf32, #tpu.memory_space<vmem>>, %arg9: memref<1x4x8x128xf32, #tpu.memory_space<vmem>>, %arg10: memref<4x16x128xf32, #tpu.memory_space<vmem>>) attributes {dimension_semantics = [#tpu.dimension_semantics<parallel>, #tpu.dimension_semantics<parallel>], iteration_bounds = array<i64: 2, 2>, scalar_prefetch = 0 : i64, scratch_operands = 1 : i64, tpu.core_type = #tpu.core_type<tc>, window_params = [{transform_indices = @transform_0, window_bounds = array<i64: 1, 12, 26, 128>}, {pipeline_mode = #tpu.pipeline_mode<synchronous>, transform_indices = @transform_1, window_bounds = array<i64: 128, 128>}, {pipeline_mode = #tpu.pipeline_mode<synchronous>, transform_indices = @transform_2, window_bounds = array<i64: 1, 128>}, {pipeline_mode = #tpu.pipeline_mode<synchronous>, transform_indices = @transform_3, window_bounds = array<i64: 3, 384, 128>}, {pipeline_mode = #tpu.pipeline_mode<synchronous>, transform_indices = @transform_4, window_bounds = array<i64: 1, 128>}, {pipeline_mode = #tpu.pipeline_mode<synchronous>, transform_indices = @transform_5, window_bounds = array<i64: 3, 384, 128>}, {pipeline_mode = #tpu.pipeline_mode<synchronous>, transform_indices = @transform_6, window_bounds = array<i64: 1, 128>}, {transform_indices = @transform_7, window_bounds = array<i64: 1, 4, 8, 128>}]} {
    %c0 = arith.constant 0 : index
    %c0_0 = arith.constant 0 : index
    %c0_1 = arith.constant 0 : index
    %c0_2 = arith.constant 0 : index
    %0 = vector.load %arg2[%c0, %c0_0, %c0_1, %c0_2] : memref<1x12x26x128xf32, #tpu.memory_space<vmem>>, vector<1x12x26x128xf32>
    %1 = vector.shape_cast %0 : vector<1x12x26x128xf32> to vector<12x26x128xf32>
    %2 = vector.extract_strided_slice %1 {offsets = [0, 0, 0], sizes = [12, 24, 128], strides = [1, 1, 1]} : vector<12x26x128xf32> to vector<12x24x128xf32>
    %cst = arith.constant 0.000000e+00 : f32
    %3 = vector.broadcast %cst : f32 to vector<12x24x128xf32>
    %4 = arith.maximumf %2, %3 : vector<12x24x128xf32>
    %5 = vector.extract_strided_slice %4 {offsets = [0, 0, 0], sizes = [10, 24, 128], strides = [1, 1, 1]} : vector<12x24x128xf32> to vector<10x24x128xf32>
    %6 = vector.extract_strided_slice %4 {offsets = [1, 0, 0], sizes = [10, 24, 128], strides = [1, 1, 1]} : vector<12x24x128xf32> to vector<10x24x128xf32>
    %7 = vector.extract_strided_slice %4 {offsets = [2, 0, 0], sizes = [10, 24, 128], strides = [1, 1, 1]} : vector<12x24x128xf32> to vector<10x24x128xf32>
    %8 = tpu.concatenate %5, %6, %7 in 2 : vector<10x24x128xf32>, vector<10x24x128xf32>, vector<10x24x128xf32> -> vector<10x24x384xf32>
    %9 = vector.shape_cast %8 : vector<10x24x384xf32> to vector<240x384xf32>
    %c0_3 = arith.constant 0 : index
    %c0_4 = arith.constant 0 : index
    %c0_5 = arith.constant 0 : index
    %10 = vector.load %arg5[%c0_3, %c0_4, %c0_5] : memref<3x384x128xf32, #tpu.memory_space<vmem>>, vector<1x384x128xf32>
    %11 = vector.shape_cast %10 : vector<1x384x128xf32> to vector<384x128xf32>
    %cst_6 = arith.constant dense<0.000000e+00> : vector<240x128xf32>
    %12 = tpu.matmul %9, %11, %cst_6 {dimension_numbers = #tpu.dot_dimension_numbers<[1], [0], [0], [1], [0, 0, 1, 1], [], []>} : vector<240x384xf32>, vector<384x128xf32>, vector<240x128xf32> -> vector<240x128xf32>
    %13 = vector.extract_strided_slice %1 {offsets = [0, 1, 0], sizes = [12, 24, 128], strides = [1, 1, 1]} : vector<12x26x128xf32> to vector<12x24x128xf32>
    %cst_7 = arith.constant 0.000000e+00 : f32
    %14 = vector.broadcast %cst_7 : f32 to vector<12x24x128xf32>
    %15 = arith.maximumf %13, %14 : vector<12x24x128xf32>
    %16 = vector.extract_strided_slice %15 {offsets = [0, 0, 0], sizes = [10, 24, 128], strides = [1, 1, 1]} : vector<12x24x128xf32> to vector<10x24x128xf32>
    %17 = vector.extract_strided_slice %15 {offsets = [1, 0, 0], sizes = [10, 24, 128], strides = [1, 1, 1]} : vector<12x24x128xf32> to vector<10x24x128xf32>
    %18 = vector.extract_strided_slice %15 {offsets = [2, 0, 0], sizes = [10, 24, 128], strides = [1, 1, 1]} : vector<12x24x128xf32> to vector<10x24x128xf32>
    %19 = tpu.concatenate %16, %17, %18 in 2 : vector<10x24x128xf32>, vector<10x24x128xf32>, vector<10x24x128xf32> -> vector<10x24x384xf32>
    %20 = vector.shape_cast %19 : vector<10x24x384xf32> to vector<240x384xf32>
    %c1 = arith.constant 1 : index
    %c0_8 = arith.constant 0 : index
    %c0_9 = arith.constant 0 : index
    %21 = vector.load %arg5[%c1, %c0_8, %c0_9] : memref<3x384x128xf32, #tpu.memory_space<vmem>>, vector<1x384x128xf32>
    %22 = vector.shape_cast %21 : vector<1x384x128xf32> to vector<384x128xf32>
    %cst_10 = arith.constant dense<0.000000e+00> : vector<240x128xf32>
    %23 = tpu.matmul %20, %22, %cst_10 {dimension_numbers = #tpu.dot_dimension_numbers<[1], [0], [0], [1], [0, 0, 1, 1], [], []>} : vector<240x384xf32>, vector<384x128xf32>, vector<240x128xf32> -> vector<240x128xf32>
    %24 = arith.addf %12, %23 : vector<240x128xf32>
    %25 = vector.extract_strided_slice %1 {offsets = [0, 2, 0], sizes = [12, 24, 128], strides = [1, 1, 1]} : vector<12x26x128xf32> to vector<12x24x128xf32>
    %26 = vector.extract_strided_slice %25 {offsets = [2, 0, 0], sizes = [8, 16, 128], strides = [1, 1, 1]} : vector<12x24x128xf32> to vector<8x16x128xf32>
    %cst_11 = arith.constant 0.000000e+00 : f32
    %27 = vector.broadcast %cst_11 : f32 to vector<12x24x128xf32>
    %28 = arith.maximumf %25, %27 : vector<12x24x128xf32>
    %29 = vector.extract_strided_slice %28 {offsets = [0, 0, 0], sizes = [10, 24, 128], strides = [1, 1, 1]} : vector<12x24x128xf32> to vector<10x24x128xf32>
    %30 = vector.extract_strided_slice %28 {offsets = [1, 0, 0], sizes = [10, 24, 128], strides = [1, 1, 1]} : vector<12x24x128xf32> to vector<10x24x128xf32>
    %31 = vector.extract_strided_slice %28 {offsets = [2, 0, 0], sizes = [10, 24, 128], strides = [1, 1, 1]} : vector<12x24x128xf32> to vector<10x24x128xf32>
    %32 = tpu.concatenate %29, %30, %31 in 2 : vector<10x24x128xf32>, vector<10x24x128xf32>, vector<10x24x128xf32> -> vector<10x24x384xf32>
    %33 = vector.shape_cast %32 : vector<10x24x384xf32> to vector<240x384xf32>
    %c2 = arith.constant 2 : index
    %c0_12 = arith.constant 0 : index
    %c0_13 = arith.constant 0 : index
    %34 = vector.load %arg5[%c2, %c0_12, %c0_13] : memref<3x384x128xf32, #tpu.memory_space<vmem>>, vector<1x384x128xf32>
    %35 = vector.shape_cast %34 : vector<1x384x128xf32> to vector<384x128xf32>
    %cst_14 = arith.constant dense<0.000000e+00> : vector<240x128xf32>
    %36 = tpu.matmul %33, %35, %cst_14 {dimension_numbers = #tpu.dot_dimension_numbers<[1], [0], [0], [1], [0, 0, 1, 1], [], []>} : vector<240x384xf32>, vector<384x128xf32>, vector<240x128xf32> -> vector<240x128xf32>
    %37 = arith.addf %24, %36 : vector<240x128xf32>
    %c0_15 = arith.constant 0 : index
    %c0_16 = arith.constant 0 : index
    %38 = vector.load %arg6[%c0_15, %c0_16] : memref<1x128xf32, #tpu.memory_space<vmem>>, vector<1x128xf32>
    %39 = vector.broadcast %38 : vector<1x128xf32> to vector<240x128xf32>
    %40 = arith.addf %37, %39 : vector<240x128xf32>
    %cst_17 = arith.constant 0.000000e+00 : f32
    %41 = vector.broadcast %cst_17 : f32 to vector<240x128xf32>
    %42 = arith.maximumf %40, %41 : vector<240x128xf32>
    %43 = vector.shape_cast %42 : vector<240x128xf32> to vector<10x24x128xf32>
    %c8_i32 = arith.constant 8 : i32
    %44 = arith.muli %arg1, %c8_i32 : i32
    %45 = tpu.iota {dimensions = array<i32: 0>} : vector<10x24x1xi32>
    %46 = vector.broadcast %44 : i32 to vector<10x24x1xi32>
    %47 = arith.addi %46, %45 : vector<10x24x1xi32>
    %48 = tpu.iota {dimensions = array<i32: 1>} : vector<10x24x1xi32>
    %c1_i32 = arith.constant 1 : i32
    %49 = vector.broadcast %c1_i32 : i32 to vector<10x24x1xi32>
    %50 = arith.cmpi sge, %47, %49 : vector<10x24x1xi32>
    %c16_i32 = arith.constant 16 : i32
    %51 = vector.broadcast %c16_i32 : i32 to vector<10x24x1xi32>
    %52 = arith.cmpi sle, %47, %51 : vector<10x24x1xi32>
    %53 = arith.andi %50, %52 : vector<10x24x1xi1>
    %c1_i32_18 = arith.constant 1 : i32
    %54 = vector.broadcast %c1_i32_18 : i32 to vector<10x24x1xi32>
    %55 = arith.cmpi sge, %48, %54 : vector<10x24x1xi32>
    %56 = arith.andi %53, %55 : vector<10x24x1xi1>
    %c16_i32_19 = arith.constant 16 : i32
    %57 = vector.broadcast %c16_i32_19 : i32 to vector<10x24x1xi32>
    %58 = arith.cmpi sle, %48, %57 : vector<10x24x1xi32>
    %59 = arith.andi %56, %58 : vector<10x24x1xi1>
    %60 = arith.extui %59 : vector<10x24x1xi1> to vector<10x24x1xi32>
    %61 = arith.sitofp %60 : vector<10x24x1xi32> to vector<10x24x1xf32>
    %62 = vector.broadcast %61 : vector<10x24x1xf32> to vector<10x24x128xf32>
    %63 = arith.mulf %43, %62 : vector<10x24x128xf32>
    %64 = vector.extract_strided_slice %63 {offsets = [0, 0, 0], sizes = [10, 16, 128], strides = [1, 1, 1]} : vector<10x24x128xf32> to vector<10x16x128xf32>
    %65 = vector.extract_strided_slice %64 {offsets = [0, 0, 0], sizes = [8, 16, 128], strides = [1, 1, 1]} : vector<10x16x128xf32> to vector<8x16x128xf32>
    %66 = vector.extract_strided_slice %64 {offsets = [1, 0, 0], sizes = [8, 16, 128], strides = [1, 1, 1]} : vector<10x16x128xf32> to vector<8x16x128xf32>
    %67 = vector.extract_strided_slice %64 {offsets = [2, 0, 0], sizes = [8, 16, 128], strides = [1, 1, 1]} : vector<10x16x128xf32> to vector<8x16x128xf32>
    %68 = tpu.concatenate %65, %66, %67 in 2 : vector<8x16x128xf32>, vector<8x16x128xf32>, vector<8x16x128xf32> -> vector<8x16x384xf32>
    %69 = vector.shape_cast %68 : vector<8x16x384xf32> to vector<128x384xf32>
    %c0_20 = arith.constant 0 : index
    %c0_21 = arith.constant 0 : index
    %c0_22 = arith.constant 0 : index
    %70 = vector.load %arg7[%c0_20, %c0_21, %c0_22] : memref<3x384x128xf32, #tpu.memory_space<vmem>>, vector<1x384x128xf32>
    %71 = vector.shape_cast %70 : vector<1x384x128xf32> to vector<384x128xf32>
    %cst_23 = arith.constant dense<0.000000e+00> : vector<128x128xf32>
    %72 = tpu.matmul %69, %71, %cst_23 {dimension_numbers = #tpu.dot_dimension_numbers<[1], [0], [0], [1], [0, 0, 1, 1], [], []>} : vector<128x384xf32>, vector<384x128xf32>, vector<128x128xf32> -> vector<128x128xf32>
    %73 = vector.extract_strided_slice %63 {offsets = [0, 1, 0], sizes = [10, 16, 128], strides = [1, 1, 1]} : vector<10x24x128xf32> to vector<10x16x128xf32>
    %74 = vector.extract_strided_slice %73 {offsets = [0, 0, 0], sizes = [8, 16, 128], strides = [1, 1, 1]} : vector<10x16x128xf32> to vector<8x16x128xf32>
    %75 = vector.extract_strided_slice %73 {offsets = [1, 0, 0], sizes = [8, 16, 128], strides = [1, 1, 1]} : vector<10x16x128xf32> to vector<8x16x128xf32>
    %76 = vector.extract_strided_slice %73 {offsets = [2, 0, 0], sizes = [8, 16, 128], strides = [1, 1, 1]} : vector<10x16x128xf32> to vector<8x16x128xf32>
    %77 = tpu.concatenate %74, %75, %76 in 2 : vector<8x16x128xf32>, vector<8x16x128xf32>, vector<8x16x128xf32> -> vector<8x16x384xf32>
    %78 = vector.shape_cast %77 : vector<8x16x384xf32> to vector<128x384xf32>
    %c1_24 = arith.constant 1 : index
    %c0_25 = arith.constant 0 : index
    %c0_26 = arith.constant 0 : index
    %79 = vector.load %arg7[%c1_24, %c0_25, %c0_26] : memref<3x384x128xf32, #tpu.memory_space<vmem>>, vector<1x384x128xf32>
    %80 = vector.shape_cast %79 : vector<1x384x128xf32> to vector<384x128xf32>
    %cst_27 = arith.constant dense<0.000000e+00> : vector<128x128xf32>
    %81 = tpu.matmul %78, %80, %cst_27 {dimension_numbers = #tpu.dot_dimension_numbers<[1], [0], [0], [1], [0, 0, 1, 1], [], []>} : vector<128x384xf32>, vector<384x128xf32>, vector<128x128xf32> -> vector<128x128xf32>
    %82 = arith.addf %72, %81 : vector<128x128xf32>
    %83 = vector.extract_strided_slice %63 {offsets = [0, 2, 0], sizes = [10, 16, 128], strides = [1, 1, 1]} : vector<10x24x128xf32> to vector<10x16x128xf32>
    %84 = vector.extract_strided_slice %83 {offsets = [0, 0, 0], sizes = [8, 16, 128], strides = [1, 1, 1]} : vector<10x16x128xf32> to vector<8x16x128xf32>
    %85 = vector.extract_strided_slice %83 {offsets = [1, 0, 0], sizes = [8, 16, 128], strides = [1, 1, 1]} : vector<10x16x128xf32> to vector<8x16x128xf32>
    %86 = vector.extract_strided_slice %83 {offsets = [2, 0, 0], sizes = [8, 16, 128], strides = [1, 1, 1]} : vector<10x16x128xf32> to vector<8x16x128xf32>
    %87 = tpu.concatenate %84, %85, %86 in 2 : vector<8x16x128xf32>, vector<8x16x128xf32>, vector<8x16x128xf32> -> vector<8x16x384xf32>
    %88 = vector.shape_cast %87 : vector<8x16x384xf32> to vector<128x384xf32>
    %c2_28 = arith.constant 2 : index
    %c0_29 = arith.constant 0 : index
    %c0_30 = arith.constant 0 : index
    %89 = vector.load %arg7[%c2_28, %c0_29, %c0_30] : memref<3x384x128xf32, #tpu.memory_space<vmem>>, vector<1x384x128xf32>
    %90 = vector.shape_cast %89 : vector<1x384x128xf32> to vector<384x128xf32>
    %cst_31 = arith.constant dense<0.000000e+00> : vector<128x128xf32>
    %91 = tpu.matmul %88, %90, %cst_31 {dimension_numbers = #tpu.dot_dimension_numbers<[1], [0], [0], [1], [0, 0, 1, 1], [], []>} : vector<128x384xf32>, vector<384x128xf32>, vector<128x128xf32> -> vector<128x128xf32>
    %92 = arith.addf %82, %91 : vector<128x128xf32>
    %93 = vector.shape_cast %26 : vector<8x16x128xf32> to vector<128x128xf32>
    %c0_32 = arith.constant 0 : index
    %c0_33 = arith.constant 0 : index
    %94 = vector.load %arg3[%c0_32, %c0_33] : memref<128x128xf32, #tpu.memory_space<vmem>>, vector<128x128xf32>
    %cst_34 = arith.constant dense<0.000000e+00> : vector<128x128xf32>
    %95 = tpu.matmul %93, %94, %cst_34 {dimension_numbers = #tpu.dot_dimension_numbers<[1], [0], [0], [1], [0, 0, 1, 1], [], []>} : vector<128x128xf32>, vector<128x128xf32>, vector<128x128xf32> -> vector<128x128xf32>
    %c0_35 = arith.constant 0 : index
    %c0_36 = arith.constant 0 : index
    %96 = vector.load %arg4[%c0_35, %c0_36] : memref<1x128xf32, #tpu.memory_space<vmem>>, vector<1x128xf32>
    %97 = vector.broadcast %96 : vector<1x128xf32> to vector<128x128xf32>
    %98 = arith.addf %95, %97 : vector<128x128xf32>
    %99 = arith.addf %98, %92 : vector<128x128xf32>
    %c0_37 = arith.constant 0 : index
    %c0_38 = arith.constant 0 : index
    %100 = vector.load %arg8[%c0_37, %c0_38] : memref<1x128xf32, #tpu.memory_space<vmem>>, vector<1x128xf32>
    %101 = vector.broadcast %100 : vector<1x128xf32> to vector<128x128xf32>
    %102 = arith.addf %99, %101 : vector<128x128xf32>
    %103 = vector.shape_cast %102 : vector<128x128xf32> to vector<4x2x16x128xf32>
    %104 = vector.extract_strided_slice %103 {offsets = [0, 0, 0, 0], sizes = [4, 1, 16, 128], strides = [1, 1, 1, 1]} : vector<4x2x16x128xf32> to vector<4x1x16x128xf32>
    %105 = vector.shape_cast %104 : vector<4x1x16x128xf32> to vector<4x16x128xf32>
    %106 = vector.extract_strided_slice %103 {offsets = [0, 1, 0, 0], sizes = [4, 1, 16, 128], strides = [1, 1, 1, 1]} : vector<4x2x16x128xf32> to vector<4x1x16x128xf32>
    %107 = vector.shape_cast %106 : vector<4x1x16x128xf32> to vector<4x16x128xf32>
    %108 = arith.addf %105, %107 : vector<4x16x128xf32>
    %c0_39 = arith.constant 0 : index
    %c0_40 = arith.constant 0 : index
    %c0_41 = arith.constant 0 : index
    %109 = vector.load %arg10[%c0_39, %c0_40, %c0_41] : memref<4x16x128xf32, #tpu.memory_space<vmem>>, vector<4x16x128xf32>
    tpu.vector_store %arg10[%c0_39, %c0_40, %c0_41], %108 {strides = array<i32>} : memref<4x16x128xf32, #tpu.memory_space<vmem>>, vector<4x16x128xf32>,
    %c0_42 = arith.constant 0 : index
    %c0_43 = arith.constant 0 : index
    %c0_44 = arith.constant 0 : index
    %110 = tpu.strided_load %arg10[%c0_42, %c0_43, %c0_44] {strides = array<i32: 1, 2, 1>} : memref<4x16x128xf32, #tpu.memory_space<vmem>>, vector<4x8x128xf32>
    %c0_45 = arith.constant 0 : index
    %c1_46 = arith.constant 1 : index
    %c0_47 = arith.constant 0 : index
    %111 = tpu.strided_load %arg10[%c0_45, %c1_46, %c0_47] {strides = array<i32: 1, 2, 1>} : memref<4x16x128xf32, #tpu.memory_space<vmem>>, vector<4x8x128xf32>
    %112 = arith.addf %110, %111 : vector<4x8x128xf32>
    %cst_48 = arith.constant 2.500000e-01 : f32
    %113 = vector.broadcast %cst_48 : f32 to vector<4x8x128xf32>
    %114 = arith.mulf %112, %113 : vector<4x8x128xf32>
    %c0_49 = arith.constant 0 : index
    %c0_50 = arith.constant 0 : index
    %c0_51 = arith.constant 0 : index
    %c0_52 = arith.constant 0 : index
    %115 = vector.load %arg9[%c0_49, %c0_50, %c0_51, %c0_52] : memref<1x4x8x128xf32, #tpu.memory_space<vmem>>, vector<1x4x8x128xf32>
    %116 = vector.shape_cast %115 : vector<1x4x8x128xf32> to vector<4x8x128xf32>
    %117 = vector.shape_cast %114 : vector<4x8x128xf32> to vector<1x4x8x128xf32>
    tpu.vector_store %arg9[%c0_49, %c0_50, %c0_51, %c0_52], %117 {strides = array<i32>} : memref<1x4x8x128xf32, #tpu.memory_space<vmem>>, vector<1x4x8x128xf32>,
    return
  }
  func.func @transform_0(%arg0: i32, %arg1: i32) -> (i32, i32, i32, i32) {
    %c2_i32 = arith.constant 2 : i32
    %0 = arith.muli %arg0, %c2_i32 : i32
    %1 = arith.addi %0, %arg1 : i32
    %c0_i32 = arith.constant 0 : i32
    %c0_i32_0 = arith.constant 0 : i32
    %c0_i32_1 = arith.constant 0 : i32
    %c0_i32_2 = arith.constant 0 : i32
    return %1, %c0_i32, %c0_i32_0, %c0_i32_1 : i32, i32, i32, i32
  }
  func.func @transform_1(%arg0: i32, %arg1: i32) -> (i32, i32) {
    %c0_i32 = arith.constant 0 : i32
    %c0_i32_0 = arith.constant 0 : i32
    %c0_i32_1 = arith.constant 0 : i32
    return %c0_i32, %c0_i32_0 : i32, i32
  }
  func.func @transform_2(%arg0: i32, %arg1: i32) -> (i32, i32) {
    %c0_i32 = arith.constant 0 : i32
    %c0_i32_0 = arith.constant 0 : i32
    %c0_i32_1 = arith.constant 0 : i32
    return %c0_i32, %c0_i32_0 : i32, i32
  }
  func.func @transform_3(%arg0: i32, %arg1: i32) -> (i32, i32, i32) {
    %c0_i32 = arith.constant 0 : i32
    %c0_i32_0 = arith.constant 0 : i32
    %c0_i32_1 = arith.constant 0 : i32
    %c0_i32_2 = arith.constant 0 : i32
    return %c0_i32, %c0_i32_0, %c0_i32_1 : i32, i32, i32
  }
  func.func @transform_4(%arg0: i32, %arg1: i32) -> (i32, i32) {
    %c0_i32 = arith.constant 0 : i32
    %c0_i32_0 = arith.constant 0 : i32
    %c0_i32_1 = arith.constant 0 : i32
    return %c0_i32, %c0_i32_0 : i32, i32
  }
  func.func @transform_5(%arg0: i32, %arg1: i32) -> (i32, i32, i32) {
    %c0_i32 = arith.constant 0 : i32
    %c0_i32_0 = arith.constant 0 : i32
    %c0_i32_1 = arith.constant 0 : i32
    %c0_i32_2 = arith.constant 0 : i32
    return %c0_i32, %c0_i32_0, %c0_i32_1 : i32, i32, i32
  }
  func.func @transform_6(%arg0: i32, %arg1: i32) -> (i32, i32) {
    %c0_i32 = arith.constant 0 : i32
    %c0_i32_0 = arith.constant 0 : i32
    %c0_i32_1 = arith.constant 0 : i32
    return %c0_i32, %c0_i32_0 : i32, i32
  }
  func.func @transform_7(%arg0: i32, %arg1: i32) -> (i32, i32, i32, i32) {
    %c0_i32 = arith.constant 0 : i32
    %c0_i32_0 = arith.constant 0 : i32
    %c0_i32_1 = arith.constant 0 : i32
    return %arg0, %arg1, %c0_i32, %c0_i32_0 : i32, i32, i32, i32
  }
}

</mosaic_0001>

<llo_original>
// kernel: tpu_custom_call.1
$region0: #{tpu_custom_call.1}
  #allocation0 [shape = 'u32[]', space=smem, size = 0x4, offset = 0x4, fixed_abs, tag = 'smem constant byte address 0x4 - core index']
  #allocation1 [shape = 'u32[144,128]{1,0:T(1,128)}', space=vmem, size = 0x12000, scoped, tag = 'internal scratch']
  #allocation2 [shape = 'f32[4,16,128]{2,1,0:T(8,128)}', space=vmem, size = 0x8000, scoped, tag = 'scratch operand']
  %s0 = inlined_call_operand.vmem [shape: f32[4,12,26,128], index: 0, kind: input, shape index: {}]
  %s1 = inlined_call_operand.vmem [shape: f32[128,128], index: 1, kind: input, shape index: {}]
  %s2 = inlined_call_operand.vmem [shape: f32[1,128], index: 2, kind: input, shape index: {}]
  %s3 = inlined_call_operand.vmem [shape: f32[3,384,128], index: 3, kind: input, shape index: {}]
  %s4 = inlined_call_operand.vmem [shape: f32[1,128], index: 4, kind: input, shape index: {}]
  %s5 = inlined_call_operand.vmem [shape: f32[3,384,128], index: 5, kind: input, shape index: {}]
  %s6 = inlined_call_operand.vmem [shape: f32[1,128], index: 6, kind: input, shape index: {}]
  %s7 = inlined_call_operand.hbm [shape: f32[2,8,8,128], index: 7, kind: output, shape index: {}]
  %s8 = sld [smem:[#allocation0]]
  $region61: #{tpu_custom_call.1} parent=0
    _
  %s10 = ssub.s32 1, %s8
  %s11 = scalar_select 0, %s10, %s8
  $region1: #{tpu_custom_call.1} parent=0
    #allocation3 [shape = 'u8[32768]{0}', space=vmem, size = 0x8000, scoped, tag = 'output window, operand 0']
    #allocation4 [shape = 's32[2]{0}', space=sflag, size = 0x8, scoped, tag = 'scoped memory for tpu_custom_call.1']
    %12 = vsyncpa [#allocation4], 0
    %s13 = scalar_lea.sflag [#allocation4], 1
    %14 = vsyncpa %s13, 0
    loop: start=0, step=1, limit=6
    $region2: #{tpu_custom_call.1} parent=1 // loop_pre_header
      _
    $region3: #{tpu_custom_call.1} parent=1 // loop_header
      %s16 = sphi 0, %s20
      %p17 = scmp.ge.s32.totalorder %s16, 6
      %s23 = sphi 0, %s35
      %s24 = sphi 0, %s31
      %s25 = sphi 0, %s23
      %s26 = sphi 0, %s24
      %s27 = sphi 0, %s25
      %s28 = sphi 0, %s26
      %s42 = sphi 0, %s44
      %s45 = sphi 0, %s42
      %s46 = sphi 0, %s45
      %s62 = sphi 0, %s46
      %s66 = sphi 0, %s66
      %s68 = sphi 0, %s66
      %s69 = sphi 0, %s68
      %s83 = sphi 0, %s69
      %s87 = sphi 0, %s87
      %s89 = sphi 0, %s87
      %s90 = sphi 0, %s89
      %s104 = sphi 0, %s90
      %s108 = sphi 0, %s108
      %s110 = sphi 0, %s108
      %s111 = sphi 0, %s110
      %s125 = sphi 0, %s111
      %s129 = sphi 0, %s129
      %s131 = sphi 0, %s129
      %s132 = sphi 0, %s131
      %s146 = sphi 0, %s132
      %s150 = sphi 0, %s150
      %s152 = sphi 0, %s150
      %s153 = sphi 0, %s152
      %s167 = sphi 0, %s153
      %s171 = sphi 0, %s171
      %s173 = sphi 0, %s171
      %s174 = sphi 0, %s173
      %s188 = sphi 0, %s174
      %s196 = sphi 0, %s198
      %s199 = sphi 0, %s196
      %s200 = sphi 0, %s199
      %s216 = sphi 0, %s200
    $region4: #{tpu_custom_call.1} parent=1 // loop_header_branch
      %19 = sbr.rel (%p17) target = $region8
    $region5: #{tpu_custom_call.1} parent=1 // loop_body
      %s21 = ssub.s32 %s16, 1
      %s22 = ssub.s32 %s16, 2
      %s29 = sadd.s32 1, %s24
      %p30 = scmp.ge.s32.totalorder %s29, 2
      %s31 = scalar_select %p30, 0, %s29
      %s32 = sadd.s32 1, %s23
      %s33 = scalar_select %p30, %s32, %s23
      %p34 = scmp.ge.s32.totalorder %s33, 2
      %s35 = scalar_select %p34, 0, %s33
      %s36 = smul.u32 %s23, 2
      %s37 = sadd.s32 %s36, %s24
      %s38 = smul.u32 %s35, 2
      %s39 = sadd.s32 %s38, %s31
      %s40 = ssub.s32 %s37, %s39
      %p41 = scmp.eq.s32.totalorder %s40, 0
      %s43 = sadd.s32 %s42, 1
      %s44 = scalar_select %p41, %s42, %s43
      %p47 = pneg %p41
      %p48 = scmp.eq.s32.totalorder %s16, 3
      %p49 = por %p47, %p48
      %p50 = scmp.ne.s32.totalorder %s42, %s45
      %p51 = scmp.eq.s32.totalorder %s16, 0
      %p52 = por %p50, %p51
      %p53 = scmp.ne.s32.totalorder %s42, %s45
      %p54 = scmp.eq.s32.totalorder %s21, 3
      %p55 = por %p53, %p54
      %p56 = scmp.ne.s32.totalorder %s45, %s46
      %p57 = scmp.eq.s32.totalorder %s21, 0
      %p58 = por %p56, %p57
      %p59 = scmp.ne.s32.totalorder %s45, %s46
      %p60 = scmp.eq.s32.totalorder %s22, 3
      %p61 = por %p59, %p60
      %p63 = scmp.ne.s32.totalorder %s46, %s62
      %p64 = scmp.eq.s32.totalorder %s22, 0
      %p65 = por %p63, %p64
      %s67 = sadd.s32 %s66, 1
      %p70 = scmp.eq.s32.totalorder %s16, 3
      %p71 = scmp.ne.s32.totalorder %s66, %s68
      %p72 = scmp.eq.s32.totalorder %s16, 0
      %p73 = por %p71, %p72
      %p74 = scmp.ne.s32.totalorder %s66, %s68
      %p75 = scmp.eq.s32.totalorder %s21, 3
      %p76 = por %p74, %p75
      %p77 = scmp.ne.s32.totalorder %s68, %s69
      %p78 = scmp.eq.s32.totalorder %s21, 0
      %p79 = por %p77, %p78
      %p80 = scmp.ne.s32.totalorder %s68, %s69
      %p81 = scmp.eq.s32.totalorder %s22, 3
      %p82 = por %p80, %p81
      %p84 = scmp.ne.s32.totalorder %s69, %s83
      %p85 = scmp.eq.s32.totalorder %s22, 0
      %p86 = por %p84, %p85
      %s88 = sadd.s32 %s87, 1
      %p91 = scmp.eq.s32.totalorder %s16, 3
      %p92 = scmp.ne.s32.totalorder %s87, %s89
      %p93 = scmp.eq.s32.totalorder %s16, 0
      %p94 = por %p92, %p93
      %p95 = scmp.ne.s32.totalorder %s87, %s89
      %p96 = scmp.eq.s32.totalorder %s21, 3
      %p97 = por %p95, %p96
      %p98 = scmp.ne.s32.totalorder %s89, %s90
      %p99 = scmp.eq.s32.totalorder %s21, 0
      %p100 = por %p98, %p99
      %p101 = scmp.ne.s32.totalorder %s89, %s90
      %p102 = scmp.eq.s32.totalorder %s22, 3
      %p103 = por %p101, %p102
      %p105 = scmp.ne.s32.totalorder %s90, %s104
      %p106 = scmp.eq.s32.totalorder %s22, 0
      %p107 = por %p105, %p106
      %s109 = sadd.s32 %s108, 1
      %p112 = scmp.eq.s32.totalorder %s16, 3
      %p113 = scmp.ne.s32.totalorder %s108, %s110
      %p114 = scmp.eq.s32.totalorder %s16, 0
      %p115 = por %p113, %p114
      %p116 = scmp.ne.s32.totalorder %s108, %s110
      %p117 = scmp.eq.s32.totalorder %s21, 3
      %p118 = por %p116, %p117
      %p119 = scmp.ne.s32.totalorder %s110, %s111
      %p120 = scmp.eq.s32.totalorder %s21, 0
      %p121 = por %p119, %p120
      %p122 = scmp.ne.s32.totalorder %s110, %s111
      %p123 = scmp.eq.s32.totalorder %s22, 3
      %p124 = por %p122, %p123
      %p126 = scmp.ne.s32.totalorder %s111, %s125
      %p127 = scmp.eq.s32.totalorder %s22, 0
      %p128 = por %p126, %p127
      %s130 = sadd.s32 %s129, 1
      %p133 = scmp.eq.s32.totalorder %s16, 3
      %p134 = scmp.ne.s32.totalorder %s129, %s131
      %p135 = scmp.eq.s32.totalorder %s16, 0
      %p136 = por %p134, %p135
      %p137 = scmp.ne.s32.totalorder %s129, %s131
      %p138 = scmp.eq.s32.totalorder %s21, 3
      %p139 = por %p137, %p138
      %p140 = scmp.ne.s32.totalorder %s131, %s132
      %p141 = scmp.eq.s32.totalorder %s21, 0
      %p142 = por %p140, %p141
      %p143 = scmp.ne.s32.totalorder %s131, %s132
      %p144 = scmp.eq.s32.totalorder %s22, 3
      %p145 = por %p143, %p144
      %p147 = scmp.ne.s32.totalorder %s132, %s146
      %p148 = scmp.eq.s32.totalorder %s22, 0
      %p149 = por %p147, %p148
      %s151 = sadd.s32 %s150, 1
      %p154 = scmp.eq.s32.totalorder %s16, 3
      %p155 = scmp.ne.s32.totalorder %s150, %s152
      %p156 = scmp.eq.s32.totalorder %s16, 0
      %p157 = por %p155, %p156
      %p158 = scmp.ne.s32.totalorder %s150, %s152
      %p159 = scmp.eq.s32.totalorder %s21, 3
      %p160 = por %p158, %p159
      %p161 = scmp.ne.s32.totalorder %s152, %s153
      %p162 = scmp.eq.s32.totalorder %s21, 0
      %p163 = por %p161, %p162
      %p164 = scmp.ne.s32.totalorder %s152, %s153
      %p165 = scmp.eq.s32.totalorder %s22, 3
      %p166 = por %p164, %p165
      %p168 = scmp.ne.s32.totalorder %s153, %s167
      %p169 = scmp.eq.s32.totalorder %s22, 0
      %p170 = por %p168, %p169
      %s172 = sadd.s32 %s171, 1
      %p175 = scmp.eq.s32.totalorder %s16, 3
      %p176 = scmp.ne.s32.totalorder %s171, %s173
      %p177 = scmp.eq.s32.totalorder %s16, 0
      %p178 = por %p176, %p177
      %p179 = scmp.ne.s32.totalorder %s171, %s173
      %p180 = scmp.eq.s32.totalorder %s21, 3
      %p181 = por %p179, %p180
      %p182 = scmp.ne.s32.totalorder %s173, %s174
      %p183 = scmp.eq.s32.totalorder %s21, 0
      %p184 = por %p182, %p183
      %p185 = scmp.ne.s32.totalorder %s173, %s174
      %p186 = scmp.eq.s32.totalorder %s22, 3
      %p187 = por %p185, %p186
      %p189 = scmp.ne.s32.totalorder %s174, %s188
      %p190 = scmp.eq.s32.totalorder %s22, 0
      %p191 = por %p189, %p190
      %s192 = ssub.s32 %s23, %s35
      %s193 = ssub.s32 %s24, %s31
      %s194 = sor.u32 %s192, %s193
      %p195 = scmp.eq.s32.totalorder %s194, 0
      %s197 = sadd.s32 %s196, 1
      %s198 = scalar_select %p195, %s196, %s197
      %p201 = pneg %p195
      %p202 = scmp.eq.s32.totalorder %s16, 3
      %p203 = por %p201, %p202
      %p204 = scmp.ne.s32.totalorder %s196, %s199
      %p205 = scmp.eq.s32.totalorder %s16, 0
      %p206 = por %p204, %p205
      %p207 = scmp.ne.s32.totalorder %s196, %s199
      %p208 = scmp.eq.s32.totalorder %s21, 3
      %p209 = por %p207, %p208
      %p210 = scmp.ne.s32.totalorder %s199, %s200
      %p211 = scmp.eq.s32.totalorder %s21, 0
      %p212 = por %p210, %p211
      %p213 = scmp.ne.s32.totalorder %s199, %s200
      %p214 = scmp.eq.s32.totalorder %s22, 3
      %p215 = por %p213, %p214
      %p217 = scmp.ne.s32.totalorder %s200, %s216
      %p218 = scmp.eq.s32.totalorder %s22, 0
      %p219 = por %p217, %p218
      %p220 = scmp.le.s32.totalorder 1, %s16
      %p221 = scmp.lt.s32.totalorder %s16, 5
      %p222 = pnand %p220, %p221
      %p223 = pneg %p222
      // Predicated region
      $region9: #{tpu_custom_call.1} parent=5 // pred_check
        _
      $region10: #{tpu_custom_call.1} parent=5 // pred_check_branch
        %225 = sbr.rel (%p222) target = $region12
      $region11: #{tpu_custom_call.1} parent=5 // pred_region
        %s226 = ssub.s32 %s16, 1
        // Predicated region
        $region13: #{tpu_custom_call.1} parent=11 // pred_check
          %p227 = pneg %p79
        $region14: #{tpu_custom_call.1} parent=11 // pred_check_branch
          %229 = sbr.rel (%p227) target = $region16
        $region15: #{tpu_custom_call.1} parent=11 // pred_region
          _
        $region16: #{tpu_custom_call.1} parent=11 // pred_fallthru
          _
        // Predicated region
        $region17: #{tpu_custom_call.1} parent=11 // pred_check
          %p230 = pneg %p100
        $region18: #{tpu_custom_call.1} parent=11 // pred_check_branch
          %232 = sbr.rel (%p230) target = $region20
        $region19: #{tpu_custom_call.1} parent=11 // pred_region
          _
        $region20: #{tpu_custom_call.1} parent=11 // pred_fallthru
          _
        // Predicated region
        $region21: #{tpu_custom_call.1} parent=11 // pred_check
          %p233 = pneg %p121
        $region22: #{tpu_custom_call.1} parent=11 // pred_check_branch
          %235 = sbr.rel (%p233) target = $region24
        $region23: #{tpu_custom_call.1} parent=11 // pred_region
          _
        $region24: #{tpu_custom_call.1} parent=11 // pred_fallthru
          _
        // Predicated region
        $region25: #{tpu_custom_call.1} parent=11 // pred_check
          %p236 = pneg %p142
        $region26: #{tpu_custom_call.1} parent=11 // pred_check_branch
          %238 = sbr.rel (%p236) target = $region28
        $region27: #{tpu_custom_call.1} parent=11 // pred_region
          _
        $region28: #{tpu_custom_call.1} parent=11 // pred_fallthru
          _
        // Predicated region
        $region29: #{tpu_custom_call.1} parent=11 // pred_check
          %p239 = pneg %p163
        $region30: #{tpu_custom_call.1} parent=11 // pred_check_branch
          %241 = sbr.rel (%p239) target = $region32
        $region31: #{tpu_custom_call.1} parent=11 // pred_region
          _
        $region32: #{tpu_custom_call.1} parent=11 // pred_fallthru
          _
        // Predicated region
        $region33: #{tpu_custom_call.1} parent=11 // pred_check
          %p242 = pneg %p184
        $region34: #{tpu_custom_call.1} parent=11 // pred_check_branch
          %244 = sbr.rel (%p242) target = $region36
        $region35: #{tpu_custom_call.1} parent=11 // pred_region
          _
        $region36: #{tpu_custom_call.1} parent=11 // pred_fallthru
          _
      $region12: #{tpu_custom_call.1} parent=5 // pred_fallthru
        _
      %p245 = scmp.lt.s32.totalorder %s16, 4
      // Predicated region
      $region37: #{tpu_custom_call.1} parent=5 // pred_check
        %p246 = pneg %p245
      $region38: #{tpu_custom_call.1} parent=5 // pred_check_branch
        %248 = sbr.rel (%p246) target = $region40
      $region39: #{tpu_custom_call.1} parent=5 // pred_region
        // Predicated region
        $region41: #{tpu_custom_call.1} parent=39 // pred_check
          %p249 = pneg %p52
        $region42: #{tpu_custom_call.1} parent=39 // pred_check_branch
          %251 = sbr.rel (%p249) target = $region44
        $region43: #{tpu_custom_call.1} parent=39 // pred_region
          %s252 = smul.u32 %s23, 2
          %s253 = sadd.s32 %s252, %s24
          %p254 = scmp.lt.s32.totalorder %s253, 3
          %s255 = scalar_select %p254, %s253, 3
          %s256 = smul.addr %s255, 48
          %s257 = smul.addr %s256, 8
          %s258 = scalar_lea.vmem %s0, %s257
          %s259 = smul.u32 %s23, 2
          %s260 = sadd.s32 %s259, %s24
        $region44: #{tpu_custom_call.1} parent=39 // pred_fallthru
          _
      $region40: #{tpu_custom_call.1} parent=5 // pred_fallthru
        _
      %p261 = scmp.le.s32.totalorder 1, %s16
      %p262 = scmp.lt.s32.totalorder %s16, 5
      %p263 = pnand %p261, %p262
      %p264 = pneg %p263
      // Predicated region
      $region45: #{tpu_custom_call.1} parent=5 // pred_check
        _
      $region46: #{tpu_custom_call.1} parent=5 // pred_check_branch
        %266 = sbr.rel (%p263) target = $region48
      $region47: #{tpu_custom_call.1} parent=5 // pred_region
        %s267 = ssub.s32 %s16, 1
        %s268 = smul.u32 %s25, 2
        %s269 = sadd.s32 %s268, %s26
        %p270 = scmp.lt.s32.totalorder %s269, 3
        %s271 = scalar_select %p270, %s269, 3
        %s272 = smul.addr %s271, 48
        %s273 = smul.addr %s272, 8
        %s274 = scalar_lea.vmem %s0, %s273
        %p275 = pneg %p58
        %p276 = pneg %p55
        %p277 = pneg %p79
        %p278 = pneg %p76
        %p279 = pneg %p100
        %p280 = pneg %p97
        %p281 = pneg %p121
        %p282 = pneg %p118
        %p283 = pneg %p142
        %p284 = pneg %p139
        %p285 = pneg %p163
        %p286 = pneg %p160
        %p287 = pneg %p184
        %p288 = pneg %p181
        %p289 = pneg %p212
        %p290 = pneg %p209
        %s291 = sand.u32 %s199, 1
        %s292 = scalar_lea.sflag [#allocation4], %s291
        %s293 = sand.u32 %s199, 1
        %s294 = smul.addr %s293, 32
        %s295 = scalar_lea.vmem [#allocation3], %s294
        %s296 = smul.u32 %s25, 2
        %s297 = sadd.s32 %s296, %s26
        %p298 = scmp.lt.s32.totalorder %s297, 3
        %s299 = scalar_select %p298, %s297, 3
        %s300 = smul.addr %s299, 48
        %s301 = smul.addr %s300, 8
        %s302 = scalar_lea.vmem %s0, %s301
        %s303 = smul.u32 %s25, 2
        %s304 = sadd.s32 %s303, %s26
        %s305 = smul.u32 4, %s26
        %v306 = vld [vmem:[%s302] sm:$0xff]
        %v307 = vld [vmem:[%s302 + $0x8] sm:$0xff]
        %v308 = vld [vmem:[%s302 + $0x10] sm:$0xff]
        %v309 = vld [vmem:[%s302 + $0x18] sm:$0x3]
        %v310 = vld [vmem:[%s302 + $0x20] sm:$0xff]
        %v311 = vld [vmem:[%s302 + $0x28] sm:$0xff]
        %v312 = vld [vmem:[%s302 + $0x30] sm:$0xff]
        %v313 = vld [vmem:[%s302 + $0x38] sm:$0x3]
        %v314 = vld [vmem:[%s302 + $0x40] sm:$0xff]
        %v315 = vld [vmem:[%s302 + $0x48] sm:$0xff]
        %v316 = vld [vmem:[%s302 + $0x50] sm:$0xff]
        %v317 = vld [vmem:[%s302 + $0x58] sm:$0x3]
        %v318 = vld [vmem:[%s302 + $0x60] sm:$0xff]
        %v319 = vld [vmem:[%s302 + $0x68] sm:$0xff]
        %v320 = vld [vmem:[%s302 + $0x70] sm:$0xff]
        %v321 = vld [vmem:[%s302 + $0x78] sm:$0x3]
        %v322 = vld [vmem:[%s302 + $0x80] sm:$0xff]
        %v323 = vld [vmem:[%s302 + $0x88] sm:$0xff]
        %v324 = vld [vmem:[%s302 + $0x90] sm:$0xff]
        %v325 = vld [vmem:[%s302 + $0x98] sm:$0x3]
        %v326 = vld [vmem:[%s302 + $0xa0] sm:$0xff]
        %v327 = vld [vmem:[%s302 + $0xa8] sm:$0xff]
        %v328 = vld [vmem:[%s302 + $0xb0] sm:$0xff]
        %v329 = vld [vmem:[%s302 + $0xb8] sm:$0x3]
        %v330 = vld [vmem:[%s302 + $0xc0] sm:$0xff]
        %v331 = vld [vmem:[%s302 + $0xc8] sm:$0xff]
        %v332 = vld [vmem:[%s302 + $0xd0] sm:$0xff]
        %v333 = vld [vmem:[%s302 + $0xd8] sm:$0x3]
        %v334 = vld [vmem:[%s302 + $0xe0] sm:$0xff]
        %v335 = vld [vmem:[%s302 + $0xe8] sm:$0xff]
        %v336 = vld [vmem:[%s302 + $0xf0] sm:$0xff]
        %v337 = vld [vmem:[%s302 + $0xf8] sm:$0x3]
        %v338 = vld [vmem:[%s302 + $0x100] sm:$0xff]
        %v339 = vld [vmem:[%s302 + $0x108] sm:$0xff]
        %v340 = vld [vmem:[%s302 + $0x110] sm:$0xff]
        %v341 = vld [vmem:[%s302 + $0x118] sm:$0x3]
        %v342 = vld [vmem:[%s302 + $0x120] sm:$0xff]
        %v343 = vld [vmem:[%s302 + $0x128] sm:$0xff]
        %v344 = vld [vmem:[%s302 + $0x130] sm:$0xff]
        %v345 = vld [vmem:[%s302 + $0x138] sm:$0x3]
        %v346 = vld [vmem:[%s302 + $0x140] sm:$0xff]
        %v347 = vld [vmem:[%s302 + $0x148] sm:$0xff]
        %v348 = vld [vmem:[%s302 + $0x150] sm:$0xff]
        %v349 = vld [vmem:[%s302 + $0x158] sm:$0x3]
        %v350 = vld [vmem:[%s302 + $0x160] sm:$0xff]
        %v351 = vld [vmem:[%s302 + $0x168] sm:$0xff]
        %v352 = vld [vmem:[%s302 + $0x170] sm:$0xff]
        %v353 = vld [vmem:[%s302 + $0x178] sm:$0x3]
        %v354 = vmax.f32 %v306, 0.0
        %v355 = vmax.f32 %v307, 0.0
        %v356 = vmax.f32 %v308, 0.0
        %v357 = vmax.f32 %v310, 0.0
        %v358 = vmax.f32 %v311, 0.0
        %v359 = vmax.f32 %v312, 0.0
        %v360 = vmax.f32 %v314, 0.0
        %v361 = vmax.f32 %v315, 0.0
        %v362 = vmax.f32 %v316, 0.0
        %v363 = vmax.f32 %v318, 0.0
        %v364 = vmax.f32 %v319, 0.0
        %v365 = vmax.f32 %v320, 0.0
        %v366 = vmax.f32 %v322, 0.0
        %v367 = vmax.f32 %v323, 0.0
        %v368 = vmax.f32 %v324, 0.0
        %v369 = vmax.f32 %v326, 0.0
        %v370 = vmax.f32 %v327, 0.0
        %v371 = vmax.f32 %v328, 0.0
        %v372 = vmax.f32 %v330, 0.0
        %v373 = vmax.f32 %v331, 0.0
        %v374 = vmax.f32 %v332, 0.0
        %v375 = vmax.f32 %v334, 0.0
        %v376 = vmax.f32 %v335, 0.0
        %v377 = vmax.f32 %v336, 0.0
        %v378 = vmax.f32 %v338, 0.0
        %v379 = vmax.f32 %v339, 0.0
        %v380 = vmax.f32 %v340, 0.0
        %v381 = vmax.f32 %v342, 0.0
        %v382 = vmax.f32 %v343, 0.0
        %v383 = vmax.f32 %v344, 0.0
        %v384 = vmax.f32 %v346, 0.0
        %v385 = vmax.f32 %v347, 0.0
        %v386 = vmax.f32 %v348, 0.0
        %v387 = vmax.f32 %v350, 0.0
        %v388 = vmax.f32 %v351, 0.0
        %v389 = vmax.f32 %v352, 0.0
        %v390 = vld [vmem:[%s3] sm:$0xff]
        %v391 = vld [vmem:[%s3 + $0x8] sm:$0xff]
        %v392 = vld [vmem:[%s3 + $0x10] sm:$0xff]
        %v393 = vld [vmem:[%s3 + $0x18] sm:$0xff]
        %v394 = vld [vmem:[%s3 + $0x20] sm:$0xff]
        %v395 = vld [vmem:[%s3 + $0x28] sm:$0xff]
        %v396 = vld [vmem:[%s3 + $0x30] sm:$0xff]
        %v397 = vld [vmem:[%s3 + $0x38] sm:$0xff]
        %v398 = vld [vmem:[%s3 + $0x40] sm:$0xff]
        %v399 = vld [vmem:[%s3 + $0x48] sm:$0xff]
        %v400 = vld [vmem:[%s3 + $0x50] sm:$0xff]
        %v401 = vld [vmem:[%s3 + $0x58] sm:$0xff]
        %v402 = vld [vmem:[%s3 + $0x60] sm:$0xff]
        %v403 = vld [vmem:[%s3 + $0x68] sm:$0xff]
        %v404 = vld [vmem:[%s3 + $0x70] sm:$0xff]
        %v405 = vld [vmem:[%s3 + $0x78] sm:$0xff]
        %v406 = vld [vmem:[%s3 + $0x80] sm:$0xff]
        %v407 = vld [vmem:[%s3 + $0x88] sm:$0xff]
        %v408 = vld [vmem:[%s3 + $0x90] sm:$0xff]
        %v409 = vld [vmem:[%s3 + $0x98] sm:$0xff]
        %v410 = vld [vmem:[%s3 + $0xa0] sm:$0xff]
        %v411 = vld [vmem:[%s3 + $0xa8] sm:$0xff]
        %v412 = vld [vmem:[%s3 + $0xb0] sm:$0xff]
        %v413 = vld [vmem:[%s3 + $0xb8] sm:$0xff]
        %v414 = vld [vmem:[%s3 + $0xc0] sm:$0xff]
        %v415 = vld [vmem:[%s3 + $0xc8] sm:$0xff]
        %v416 = vld [vmem:[%s3 + $0xd0] sm:$0xff]
        %v417 = vld [vmem:[%s3 + $0xd8] sm:$0xff]
        %v418 = vld [vmem:[%s3 + $0xe0] sm:$0xff]
        %v419 = vld [vmem:[%s3 + $0xe8] sm:$0xff]
        %v420 = vld [vmem:[%s3 + $0xf0] sm:$0xff]
        %v421 = vld [vmem:[%s3 + $0xf8] sm:$0xff]
        %v422 = vld [vmem:[%s3 + $0x100] sm:$0xff]
        %v423 = vld [vmem:[%s3 + $0x108] sm:$0xff]
        %v424 = vld [vmem:[%s3 + $0x110] sm:$0xff]
        %v425 = vld [vmem:[%s3 + $0x118] sm:$0xff]
        %v426 = vld [vmem:[%s3 + $0x120] sm:$0xff]
        %v427 = vld [vmem:[%s3 + $0x128] sm:$0xff]
        %v428 = vld [vmem:[%s3 + $0x130] sm:$0xff]
        %v429 = vld [vmem:[%s3 + $0x138] sm:$0xff]
        %v430 = vld [vmem:[%s3 + $0x140] sm:$0xff]
        %v431 = vld [vmem:[%s3 + $0x148] sm:$0xff]
        %v432 = vld [vmem:[%s3 + $0x150] sm:$0xff]
        %v433 = vld [vmem:[%s3 + $0x158] sm:$0xff]
        %v434 = vld [vmem:[%s3 + $0x160] sm:$0xff]
        %v435 = vld [vmem:[%s3 + $0x168] sm:$0xff]
        %v436 = vld [vmem:[%s3 + $0x170] sm:$0xff]
        %v437 = vld [vmem:[%s3 + $0x178] sm:$0xff]
        %v438 = vmax.f32 %v309, 0.0
        %v439 = vmax.f32 %v313, 0.0
        %v440 = vmax.f32 %v317, 0.0
        %v441 = vmax.f32 %v321, 0.0
        %v442 = vmax.f32 %v325, 0.0
        %v443 = vmax.f32 %v329, 0.0
        %v444 = vmax.f32 %v333, 0.0
        %v445 = vmax.f32 %v337, 0.0
        %v446 = vmax.f32 %v341, 0.0
        %v447 = vmax.f32 %v345, 0.0
        %v448 = vmax.f32 %v349, 0.0
        %v449 = vmax.f32 %v353, 0.0
        %vm498 = vcmask 1046528
        %v499 = vrot.slane %v354, 1
        %v500 = vrot.slane %v355, 1
        %v501 = vsel %vm498, %v499, %v500
        %v502 = vrot.slane %v357, 1
        %v503 = vrot.slane %v358, 1
        %v504 = vsel %vm498, %v502, %v503
        %v505 = vrot.slane %v360, 1
        %v506 = vrot.slane %v361, 1
        %v507 = vsel %vm498, %v505, %v506
        %v508 = vrot.slane %v356, 1
        %v509 = vsel %vm498, %v500, %v508
        %v510 = vrot.slane %v359, 1
        %v511 = vsel %vm498, %v503, %v510
        %v512 = vrot.slane %v362, 1
        %v513 = vsel %vm498, %v506, %v512
        %v514 = vrot.slane %v438, 1
        %v515 = vsel %vm498, %v508, %v514
        %v516 = vrot.slane %v439, 1
        %v517 = vsel %vm498, %v510, %v516
        %v518 = vrot.slane %v440, 1
        %v519 = vsel %vm498, %v512, %v518
        %v520 = vrot.slane %v363, 1
        %v521 = vrot.slane %v364, 1
        %v522 = vsel %vm498, %v520, %v521
        %v523 = vrot.slane %v365, 1
        %v524 = vsel %vm498, %v521, %v523
        %v525 = vrot.slane %v441, 1
        %v526 = vsel %vm498, %v523, %v525
        %v527 = vrot.slane %v366, 1
        %v528 = vrot.slane %v367, 1
        %v529 = vsel %vm498, %v527, %v528
        %v530 = vrot.slane %v368, 1
        %v531 = vsel %vm498, %v528, %v530
        %v532 = vrot.slane %v442, 1
        %v533 = vsel %vm498, %v530, %v532
        %v534 = vrot.slane %v369, 1
        %v535 = vrot.slane %v370, 1
        %v536 = vsel %vm498, %v534, %v535
        %v537 = vrot.slane %v371, 1
        %v538 = vsel %vm498, %v535, %v537
        %v539 = vrot.slane %v443, 1
        %v540 = vsel %vm498, %v537, %v539
        %v541 = vrot.slane %v372, 1
        %v542 = vrot.slane %v373, 1
        %v543 = vsel %vm498, %v541, %v542
        %v544 = vrot.slane %v374, 1
        %v545 = vsel %vm498, %v542, %v544
        %v546 = vrot.slane %v444, 1
        %v547 = vsel %vm498, %v544, %v546
        %v548 = vrot.slane %v375, 1
        %v549 = vrot.slane %v376, 1
        %v550 = vsel %vm498, %v548, %v549
        %v551 = vrot.slane %v377, 1
        %v552 = vsel %vm498, %v549, %v551
        %v553 = vrot.slane %v445, 1
        %v554 = vsel %vm498, %v551, %v553
        %v555 = vrot.slane %v378, 1
        %v556 = vrot.slane %v379, 1
        %v557 = vsel %vm498, %v555, %v556
        %v558 = vrot.slane %v380, 1
        %v559 = vsel %vm498, %v556, %v558
        %v560 = vrot.slane %v446, 1
        %v561 = vsel %vm498, %v558, %v560
        %v562 = vrot.slane %v381, 1
        %v563 = vrot.slane %v382, 1
        %v564 = vsel %vm498, %v562, %v563
        %v565 = vrot.slane %v383, 1
        %v566 = vsel %vm498, %v563, %v565
        %v567 = vrot.slane %v447, 1
        %v568 = vsel %vm498, %v565, %v567
        %v569 = vrot.slane %v384, 1
        %v570 = vrot.slane %v385, 1
        %v571 = vsel %vm498, %v569, %v570
        %v572 = vrot.slane %v386, 1
        %v573 = vsel %vm498, %v570, %v572
        %v574 = vrot.slane %v448, 1
        %v575 = vsel %vm498, %v572, %v574
        %v576 = vrot.slane %v387, 1
        %v577 = vrot.slane %v388, 1
        %v578 = vsel %vm498, %v576, %v577
        %v579 = vrot.slane %v389, 1
        %v580 = vsel %vm498, %v577, %v579
        %v581 = vrot.slane %v449, 1
        %v582 = vsel %vm498, %v579, %v581
        %s619 = scalar_lea.vmem %s3, 384
        %v620 = vld [vmem:[%s619] sm:$0xff]
        %v621 = vld [vmem:[%s619 + $0x8] sm:$0xff]
        %v622 = vld [vmem:[%s619 + $0x10] sm:$0xff]
        %v623 = vld [vmem:[%s619 + $0x18] sm:$0xff]
        %v624 = vld [vmem:[%s619 + $0x20] sm:$0xff]
        %v625 = vld [vmem:[%s619 + $0x28] sm:$0xff]
        %v626 = vld [vmem:[%s619 + $0x30] sm:$0xff]
        %v627 = vld [vmem:[%s619 + $0x38] sm:$0xff]
        %v628 = vld [vmem:[%s619 + $0x40] sm:$0xff]
        %v629 = vld [vmem:[%s619 + $0x48] sm:$0xff]
        %v630 = vld [vmem:[%s619 + $0x50] sm:$0xff]
        %v631 = vld [vmem:[%s619 + $0x58] sm:$0xff]
        %v632 = vld [vmem:[%s619 + $0x60] sm:$0xff]
        %v633 = vld [vmem:[%s619 + $0x68] sm:$0xff]
        %v634 = vld [vmem:[%s619 + $0x70] sm:$0xff]
        %v635 = vld [vmem:[%s619 + $0x78] sm:$0xff]
        %v636 = vld [vmem:[%s619 + $0x80] sm:$0xff]
        %v637 = vld [vmem:[%s619 + $0x88] sm:$0xff]
        %v638 = vld [vmem:[%s619 + $0x90] sm:$0xff]
        %v639 = vld [vmem:[%s619 + $0x98] sm:$0xff]
        %v640 = vld [vmem:[%s619 + $0xa0] sm:$0xff]
        %v641 = vld [vmem:[%s619 + $0xa8] sm:$0xff]
        %v642 = vld [vmem:[%s619 + $0xb0] sm:$0xff]
        %v643 = vld [vmem:[%s619 + $0xb8] sm:$0xff]
        %v644 = vld [vmem:[%s619 + $0xc0] sm:$0xff]
        %v645 = vld [vmem:[%s619 + $0xc8] sm:$0xff]
        %v646 = vld [vmem:[%s619 + $0xd0] sm:$0xff]
        %v647 = vld [vmem:[%s619 + $0xd8] sm:$0xff]
        %v648 = vld [vmem:[%s619 + $0xe0] sm:$0xff]
        %v649 = vld [vmem:[%s619 + $0xe8] sm:$0xff]
        %v650 = vld [vmem:[%s619 + $0xf0] sm:$0xff]
        %v651 = vld [vmem:[%s619 + $0xf8] sm:$0xff]
        %v652 = vld [vmem:[%s619 + $0x100] sm:$0xff]
        %v653 = vld [vmem:[%s619 + $0x108] sm:$0xff]
        %v654 = vld [vmem:[%s619 + $0x110] sm:$0xff]
        %v655 = vld [vmem:[%s619 + $0x118] sm:$0xff]
        %v656 = vld [vmem:[%s619 + $0x120] sm:$0xff]
        %v657 = vld [vmem:[%s619 + $0x128] sm:$0xff]
        %v658 = vld [vmem:[%s619 + $0x130] sm:$0xff]
        %v659 = vld [vmem:[%s619 + $0x138] sm:$0xff]
        %v660 = vld [vmem:[%s619 + $0x140] sm:$0xff]
        %v661 = vld [vmem:[%s619 + $0x148] sm:$0xff]
        %v662 = vld [vmem:[%s619 + $0x150] sm:$0xff]
        %v663 = vld [vmem:[%s619 + $0x158] sm:$0xff]
        %v664 = vld [vmem:[%s619 + $0x160] sm:$0xff]
        %v665 = vld [vmem:[%s619 + $0x168] sm:$0xff]
        %v666 = vld [vmem:[%s619 + $0x170] sm:$0xff]
        %v667 = vld [vmem:[%s619 + $0x178] sm:$0xff]
        %668 = vmatprep.subr.mxu0 0.0
        %669 = vmatpush1.msra.mxu0 %v635
        %670 = vmatprep.subr.mxu0 0.0
        %671 = vmatpush1.msra.mxu0 %v634
        %672 = vmatprep.subr.mxu0 0.0
        %673 = vmatpush1.msra.mxu0 %v633
        %674 = vmatprep.subr.mxu0 0.0
        %675 = vmatpush1.msra.mxu0 %v632
        %676 = vmatprep.subr.mxu0 0.0
        %677 = vmatpush1.msra.mxu0 %v631
        %678 = vmatprep.subr.mxu0 0.0
        %679 = vmatpush1.msra.mxu0 %v630
        %680 = vmatprep.subr.mxu0 0.0
        %681 = vmatpush1.msra.mxu0 %v629
        %682 = vmatprep.subr.mxu0 0.0
        %683 = vmatpush1.msra.mxu0 %v628
        %684 = vmatprep.subr.mxu0 0.0
        %685 = vmatpush1.msra.mxu0 %v627
        %686 = vmatprep.subr.mxu0 0.0
        %687 = vmatpush1.msra.mxu0 %v626
        %688 = vmatprep.subr.mxu0 0.0
        %689 = vmatpush1.msra.mxu0 %v625
        %690 = vmatprep.subr.mxu0 0.0
        %691 = vmatpush1.msra.mxu0 %v624
        %692 = vmatprep.subr.mxu0 0.0
        %693 = vmatpush1.msra.mxu0 %v623
        %694 = vmatprep.subr.mxu0 0.0
        %695 = vmatpush1.msra.mxu0 %v622
        %696 = vmatprep.subr.mxu0 0.0
        %697 = vmatpush1.msra.mxu0 %v621
        %698 = vmatprep.subr.mxu0 0.0
        %699 = vmatpush1.msra.mxu0 %v620
        %700 = vmatprep.subr.mxu0 0.0
        %701 = vmatpush2.msra.mxu0 %v651
        %702 = vmatprep.subr.mxu0 0.0
        %703 = vmatpush2.msra.mxu0 %v650
        %704 = vmatprep.subr.mxu0 0.0
        %705 = vmatpush2.msra.mxu0 %v649
        %706 = vmatprep.subr.mxu0 0.0
        %707 = vmatpush2.msra.mxu0 %v648
        %708 = vmatprep.subr.mxu0 0.0
        %709 = vmatpush2.msra.mxu0 %v647
        %710 = vmatprep.subr.mxu0 0.0
        %711 = vmatpush2.msra.mxu0 %v646
        %712 = vmatprep.subr.mxu0 0.0
        %713 = vmatpush2.msra.mxu0 %v645
        %714 = vmatprep.subr.mxu0 0.0
        %715 = vmatpush2.msra.mxu0 %v644
        %716 = vmatprep.subr.mxu0 0.0
        %717 = vmatpush2.msra.mxu0 %v643
        %718 = vmatprep.subr.mxu0 0.0
        %719 = vmatpush2.msra.mxu0 %v642
        %720 = vmatprep.subr.mxu0 0.0
        %721 = vmatpush2.msra.mxu0 %v641
        %722 = vmatprep.subr.mxu0 0.0
        %723 = vmatpush2.msra.mxu0 %v640
        %724 = vmatprep.subr.mxu0 0.0
        %725 = vmatpush2.msra.mxu0 %v639
        %726 = vmatprep.subr.mxu0 0.0
        %727 = vmatpush2.msra.mxu0 %v638
        %728 = vmatprep.subr.mxu0 0.0
        %729 = vmatpush2.msra.mxu0 %v637
        %730 = vmatprep.subr.mxu0 0.0
        %731 = vmatpush2.msra.mxu0 %v636
        %732 = vmatprep.mubr.f32.mxu0 %v504
        %733 = vmatmul.mubr.f32.gmra.mxu0 %v501
        %v734 = vpop.f32.mrf.mxu0
        %v735 = vadd.f32 0.0, %v734
        %v736 = vpop.f32.mrf.mxu0
        %737 = vmatprep.mubr.f32.mxu0 %v511
        %738 = vmatmul.mubr.f32.gmra.mxu0 %v509
        %v739 = vpop.f32.mrf.mxu0
        %v740 = vadd.f32 0.0, %v739
        %v741 = vpop.f32.mrf.mxu0
        %742 = vmatprep.mubr.f32.mxu0 %v517
        %743 = vmatmul.mubr.f32.gmra.mxu0 %v515
        %v744 = vpop.f32.mrf.mxu0
        %v745 = vadd.f32 0.0, %v744
        %v746 = vpop.f32.mrf.mxu0
        %747 = vmatprep.mubr.f32.mxu0 %v507
        %748 = vmatmul.mubr.f32.gmra.mxu0 %v504
        %v749 = vpop.f32.mrf.mxu0
        %v750 = vadd.f32 0.0, %v749
        %v751 = vpop.f32.mrf.mxu0
        %752 = vmatprep.mubr.f32.mxu0 %v513
        %753 = vmatmul.mubr.f32.gmra.mxu0 %v511
        %v754 = vpop.f32.mrf.mxu0
        %v755 = vadd.f32 0.0, %v754
        %v756 = vpop.f32.mrf.mxu0
        %757 = vmatprep.mubr.f32.mxu0 %v519
        %758 = vmatmul.mubr.f32.gmra.mxu0 %v517
        %v759 = vpop.f32.mrf.mxu0
        %v760 = vadd.f32 0.0, %v759
        %v761 = vpop.f32.mrf.mxu0
        %762 = vmatprep.mubr.f32.mxu0 %v522
        %763 = vmatmul.mubr.f32.gmra.mxu0 %v507
        %v764 = vpop.f32.mrf.mxu0
        %v765 = vadd.f32 0.0, %v764
        %v766 = vpop.f32.mrf.mxu0
        %767 = vmatprep.mubr.f32.mxu0 %v524
        %768 = vmatmul.mubr.f32.gmra.mxu0 %v513
        %v769 = vpop.f32.mrf.mxu0
        %v770 = vadd.f32 0.0, %v769
        %v771 = vpop.f32.mrf.mxu0
        %772 = vmatprep.mubr.f32.mxu0 %v526
        %773 = vmatmul.mubr.f32.gmra.mxu0 %v519
        %v774 = vpop.f32.mrf.mxu0
        %v775 = vadd.f32 0.0, %v774
        %v776 = vpop.f32.mrf.mxu0
        %777 = vmatprep.mubr.f32.mxu0 %v529
        %778 = vmatmul.mubr.f32.gmra.mxu0 %v522
        %v779 = vpop.f32.mrf.mxu0
        %v780 = vadd.f32 0.0, %v779
        %v781 = vpop.f32.mrf.mxu0
        %782 = vmatprep.mubr.f32.mxu0 %v531
        %783 = vmatmul.mubr.f32.gmra.mxu0 %v524
        %v784 = vpop.f32.mrf.mxu0
        %v785 = vadd.f32 0.0, %v784
        %v786 = vpop.f32.mrf.mxu0
        %787 = vmatprep.mubr.f32.mxu0 %v533
        %788 = vmatmul.mubr.f32.gmra.mxu0 %v526
        %v789 = vpop.f32.mrf.mxu0
        %v790 = vadd.f32 0.0, %v789
        %v791 = vpop.f32.mrf.mxu0
        %792 = vmatprep.mubr.f32.mxu0 %v536
        %793 = vmatmul.mubr.f32.gmra.mxu0 %v529
        %v794 = vpop.f32.mrf.mxu0
        %v795 = vadd.f32 0.0, %v794
        %v796 = vpop.f32.mrf.mxu0
        %797 = vmatprep.mubr.f32.mxu0 %v538
        %798 = vmatmul.mubr.f32.gmra.mxu0 %v531
        %v799 = vpop.f32.mrf.mxu0
        %v800 = vadd.f32 0.0, %v799
        %v801 = vpop.f32.mrf.mxu0
        %802 = vmatprep.mubr.f32.mxu0 %v540
        %803 = vmatmul.mubr.f32.gmra.mxu0 %v533
        %v804 = vpop.f32.mrf.mxu0
        %v805 = vadd.f32 0.0, %v804
        %v806 = vpop.f32.mrf.mxu0
        %807 = vmatprep.mubr.f32.mxu0 %v543
        %808 = vmatmul.mubr.f32.gmra.mxu0 %v536
        %v809 = vpop.f32.mrf.mxu0
        %v810 = vadd.f32 0.0, %v809
        %v811 = vpop.f32.mrf.mxu0
        %812 = vmatprep.mubr.f32.mxu0 %v545
        %813 = vmatmul.mubr.f32.gmra.mxu0 %v538
        %v814 = vpop.f32.mrf.mxu0
        %v815 = vadd.f32 0.0, %v814
        %v816 = vpop.f32.mrf.mxu0
        %817 = vmatprep.mubr.f32.mxu0 %v547
        %818 = vmatmul.mubr.f32.gmra.mxu0 %v540
        %v819 = vpop.f32.mrf.mxu0
        %v820 = vadd.f32 0.0, %v819
        %v821 = vpop.f32.mrf.mxu0
        %822 = vmatprep.mubr.f32.mxu0 %v550
        %823 = vmatmul.mubr.f32.gmra.mxu0 %v543
        %v824 = vpop.f32.mrf.mxu0
        %v825 = vadd.f32 0.0, %v824
        %v826 = vpop.f32.mrf.mxu0
        %827 = vmatprep.mubr.f32.mxu0 %v552
        %828 = vmatmul.mubr.f32.gmra.mxu0 %v545
        %v829 = vpop.f32.mrf.mxu0
        %v830 = vadd.f32 0.0, %v829
        %v831 = vpop.f32.mrf.mxu0
        %832 = vmatprep.mubr.f32.mxu0 %v554
        %833 = vmatmul.mubr.f32.gmra.mxu0 %v547
        %v834 = vpop.f32.mrf.mxu0
        %v835 = vadd.f32 0.0, %v834
        %v836 = vpop.f32.mrf.mxu0
        %837 = vmatprep.mubr.f32.mxu0 %v557
        %838 = vmatmul.mubr.f32.gmra.mxu0 %v550
        %v839 = vpop.f32.mrf.mxu0
        %v840 = vadd.f32 0.0, %v839
        %v841 = vpop.f32.mrf.mxu0
        %842 = vmatprep.mubr.f32.mxu0 %v559
        %843 = vmatmul.mubr.f32.gmra.mxu0 %v552
        %v844 = vpop.f32.mrf.mxu0
        %v845 = vadd.f32 0.0, %v844
        %v846 = vpop.f32.mrf.mxu0
        %847 = vmatprep.mubr.f32.mxu0 %v561
        %848 = vmatmul.mubr.f32.gmra.mxu0 %v554
        %v849 = vpop.f32.mrf.mxu0
        %v850 = vadd.f32 0.0, %v849
        %v851 = vpop.f32.mrf.mxu0
        %852 = vmatprep.mubr.f32.mxu0 %v564
        %853 = vmatmul.mubr.f32.gmra.mxu0 %v557
        %v854 = vpop.f32.mrf.mxu0
        %v855 = vadd.f32 0.0, %v854
        %v856 = vpop.f32.mrf.mxu0
        %857 = vmatprep.mubr.f32.mxu0 %v566
        %858 = vmatmul.mubr.f32.gmra.mxu0 %v559
        %v859 = vpop.f32.mrf.mxu0
        %v860 = vadd.f32 0.0, %v859
        %v861 = vpop.f32.mrf.mxu0
        %862 = vmatprep.mubr.f32.mxu0 %v568
        %863 = vmatmul.mubr.f32.gmra.mxu0 %v561
        %v864 = vpop.f32.mrf.mxu0
        %v865 = vadd.f32 0.0, %v864
        %v866 = vpop.f32.mrf.mxu0
        %867 = vmatprep.mubr.f32.mxu0 %v571
        %868 = vmatmul.mubr.f32.gmra.mxu0 %v564
        %v869 = vpop.f32.mrf.mxu0
        %v870 = vadd.f32 0.0, %v869
        %v871 = vpop.f32.mrf.mxu0
        %872 = vmatprep.mubr.f32.mxu0 %v573
        %873 = vmatmul.mubr.f32.gmra.mxu0 %v566
        %v874 = vpop.f32.mrf.mxu0
        %v875 = vadd.f32 0.0, %v874
        %v876 = vpop.f32.mrf.mxu0
        %877 = vmatprep.mubr.f32.mxu0 %v575
        %878 = vmatmul.mubr.f32.gmra.mxu0 %v568
        %v879 = vpop.f32.mrf.mxu0
        %v880 = vadd.f32 0.0, %v879
        %v881 = vpop.f32.mrf.mxu0
        %882 = vdwg.mxu0
        %883 = vmatprep.subr.mxu0 0.0
        %884 = vmatpush1.msra.mxu0 %v667
        %885 = vmatprep.subr.mxu0 0.0
        %886 = vmatpush1.msra.mxu0 %v666
        %887 = vmatprep.subr.mxu0 0.0
        %888 = vmatpush1.msra.mxu0 %v665
        %889 = vmatprep.subr.mxu0 0.0
        %890 = vmatpush1.msra.mxu0 %v664
        %891 = vmatprep.subr.mxu0 0.0
        %892 = vmatpush1.msra.mxu0 %v663
        %893 = vmatprep.subr.mxu0 0.0
        %894 = vmatpush1.msra.mxu0 %v662
        %895 = vmatprep.subr.mxu0 0.0
        %896 = vmatpush1.msra.mxu0 %v661
        %897 = vmatprep.subr.mxu0 0.0
        %898 = vmatpush1.msra.mxu0 %v660
        %899 = vmatprep.subr.mxu0 0.0
        %900 = vmatpush1.msra.mxu0 %v659
        %901 = vmatprep.subr.mxu0 0.0
        %902 = vmatpush1.msra.mxu0 %v658
        %903 = vmatprep.subr.mxu0 0.0
        %904 = vmatpush1.msra.mxu0 %v657
        %905 = vmatprep.subr.mxu0 0.0
        %906 = vmatpush1.msra.mxu0 %v656
        %907 = vmatprep.subr.mxu0 0.0
        %908 = vmatpush1.msra.mxu0 %v655
        %909 = vmatprep.subr.mxu0 0.0
        %910 = vmatpush1.msra.mxu0 %v654
        %911 = vmatprep.subr.mxu0 0.0
        %912 = vmatpush1.msra.mxu0 %v653
        %913 = vmatprep.subr.mxu0 0.0
        %914 = vmatpush1.msra.mxu0 %v652
        %915 = vmatprep.subr.mxu0 0.0
        %916 = vmatpush2.msra.mxu0 0.0
        %917 = vmatprep.subr.mxu0 0.0
        %918 = vmatpush2.msra.mxu0 0.0
        %919 = vmatprep.subr.mxu0 0.0
        %920 = vmatpush2.msra.mxu0 0.0
        %921 = vmatprep.subr.mxu0 0.0
        %922 = vmatpush2.msra.mxu0 0.0
        %923 = vmatprep.subr.mxu0 0.0
        %924 = vmatpush2.msra.mxu0 0.0
        %925 = vmatprep.subr.mxu0 0.0
        %926 = vmatpush2.msra.mxu0 0.0
        %927 = vmatprep.subr.mxu0 0.0
        %928 = vmatpush2.msra.mxu0 0.0
        %929 = vmatprep.subr.mxu0 0.0
        %930 = vmatpush2.msra.mxu0 0.0
        %931 = vmatprep.subr.mxu0 0.0
        %932 = vmatpush2.msra.mxu0 0.0
        %933 = vmatprep.subr.mxu0 0.0
        %934 = vmatpush2.msra.mxu0 0.0
        %935 = vmatprep.subr.mxu0 0.0
        %936 = vmatpush2.msra.mxu0 0.0
        %937 = vmatprep.subr.mxu0 0.0
        %938 = vmatpush2.msra.mxu0 0.0
        %939 = vmatprep.subr.mxu0 0.0
        %940 = vmatpush2.msra.mxu0 0.0
        %941 = vmatprep.subr.mxu0 0.0
        %942 = vmatpush2.msra.mxu0 0.0
        %943 = vmatprep.subr.mxu0 0.0
        %944 = vmatpush2.msra.mxu0 0.0
        %945 = vmatprep.subr.mxu0 0.0
        %946 = vmatpush2.msra.mxu0 0.0
        %947 = vmatprep.mubr.f32.mxu0 0.0
        %948 = vmatmul.mubr.f32.gmra.mxu0 %v507
        %v949 = vpop.f32.mrf.mxu0
        %v950 = vadd.f32 %v735, %v949
        %v951 = vpop.f32.mrf.mxu0
        %952 = vmatprep.mubr.f32.mxu0 0.0
        %953 = vmatmul.mubr.f32.gmra.mxu0 %v513
        %v954 = vpop.f32.mrf.mxu0
        %v955 = vadd.f32 %v740, %v954
        %v956 = vpop.f32.mrf.mxu0
        %957 = vmatprep.mubr.f32.mxu0 0.0
        %958 = vmatmul.mubr.f32.gmra.mxu0 %v519
        %v959 = vpop.f32.mrf.mxu0
        %v960 = vadd.f32 %v745, %v959
        %v961 = vpop.f32.mrf.mxu0
        %962 = vmatprep.mubr.f32.mxu0 0.0
        %963 = vmatmul.mubr.f32.gmra.mxu0 %v522
        %v964 = vpop.f32.mrf.mxu0
        %v965 = vadd.f32 %v750, %v964
        %v966 = vpop.f32.mrf.mxu0
        %967 = vmatprep.mubr.f32.mxu0 0.0
        %968 = vmatmul.mubr.f32.gmra.mxu0 %v524
        %v969 = vpop.f32.mrf.mxu0
        %v970 = vadd.f32 %v755, %v969
        %v971 = vpop.f32.mrf.mxu0
        %972 = vmatprep.mubr.f32.mxu0 0.0
        %973 = vmatmul.mubr.f32.gmra.mxu0 %v526
        %v974 = vpop.f32.mrf.mxu0
        %v975 = vadd.f32 %v760, %v974
        %v976 = vpop.f32.mrf.mxu0
        %977 = vmatprep.mubr.f32.mxu0 0.0
        %978 = vmatmul.mubr.f32.gmra.mxu0 %v529
        %v979 = vpop.f32.mrf.mxu0
        %v980 = vadd.f32 %v765, %v979
        %v981 = vpop.f32.mrf.mxu0
        %982 = vmatprep.mubr.f32.mxu0 0.0
        %983 = vmatmul.mubr.f32.gmra.mxu0 %v531
        %v984 = vpop.f32.mrf.mxu0
        %v985 = vadd.f32 %v770, %v984
        %v986 = vpop.f32.mrf.mxu0
        %987 = vmatprep.mubr.f32.mxu0 0.0
        %988 = vmatmul.mubr.f32.gmra.mxu0 %v533
        %v989 = vpop.f32.mrf.mxu0
        %v990 = vadd.f32 %v775, %v989
        %v991 = vpop.f32.mrf.mxu0
        %992 = vmatprep.mubr.f32.mxu0 0.0
        %993 = vmatmul.mubr.f32.gmra.mxu0 %v536
        %v994 = vpop.f32.mrf.mxu0
        %v995 = vadd.f32 %v780, %v994
        %v996 = vpop.f32.mrf.mxu0
        %997 = vmatprep.mubr.f32.mxu0 0.0
        %998 = vmatmul.mubr.f32.gmra.mxu0 %v538
        %v999 = vpop.f32.mrf.mxu0
        %v1000 = vadd.f32 %v785, %v999
        %v1001 = vpop.f32.mrf.mxu0
        %1002 = vmatprep.mubr.f32.mxu0 0.0
        %1003 = vmatmul.mubr.f32.gmra.mxu0 %v540
        %v1004 = vpop.f32.mrf.mxu0
        %v1005 = vadd.f32 %v790, %v1004
        %v1006 = vpop.f32.mrf.mxu0
        %1007 = vmatprep.mubr.f32.mxu0 0.0
        %1008 = vmatmul.mubr.f32.gmra.mxu0 %v543
        %v1009 = vpop.f32.mrf.mxu0
        %v1010 = vadd.f32 %v795, %v1009
        %v1011 = vpop.f32.mrf.mxu0
        %1012 = vmatprep.mubr.f32.mxu0 0.0
        %1013 = vmatmul.mubr.f32.gmra.mxu0 %v545
        %v1014 = vpop.f32.mrf.mxu0
        %v1015 = vadd.f32 %v800, %v1014
        %v1016 = vpop.f32.mrf.mxu0
        %1017 = vmatprep.mubr.f32.mxu0 0.0
        %1018 = vmatmul.mubr.f32.gmra.mxu0 %v547
        %v1019 = vpop.f32.mrf.mxu0
        %v1020 = vadd.f32 %v805, %v1019
        %v1021 = vpop.f32.mrf.mxu0
        %1022 = vmatprep.mubr.f32.mxu0 0.0
        %1023 = vmatmul.mubr.f32.gmra.mxu0 %v550
        %v1024 = vpop.f32.mrf.mxu0
        %v1025 = vadd.f32 %v810, %v1024
        %v1026 = vpop.f32.mrf.mxu0
        %1027 = vmatprep.mubr.f32.mxu0 0.0
        %1028 = vmatmul.mubr.f32.gmra.mxu0 %v552
        %v1029 = vpop.f32.mrf.mxu0
        %v1030 = vadd.f32 %v815, %v1029
        %v1031 = vpop.f32.mrf.mxu0
        %1032 = vmatprep.mubr.f32.mxu0 0.0
        %1033 = vmatmul.mubr.f32.gmra.mxu0 %v554
        %v1034 = vpop.f32.mrf.mxu0
        %v1035 = vadd.f32 %v820, %v1034
        %v1036 = vpop.f32.mrf.mxu0
        %1037 = vmatprep.mubr.f32.mxu0 0.0
        %1038 = vmatmul.mubr.f32.gmra.mxu0 %v557
        %v1039 = vpop.f32.mrf.mxu0
        %v1040 = vadd.f32 %v825, %v1039
        %v1041 = vpop.f32.mrf.mxu0
        %1042 = vmatprep.mubr.f32.mxu0 0.0
        %1043 = vmatmul.mubr.f32.gmra.mxu0 %v559
        %v1044 = vpop.f32.mrf.mxu0
        %v1045 = vadd.f32 %v830, %v1044
        %v1046 = vpop.f32.mrf.mxu0
        %1047 = vmatprep.mubr.f32.mxu0 0.0
        %1048 = vmatmul.mubr.f32.gmra.mxu0 %v561
        %v1049 = vpop.f32.mrf.mxu0
        %v1050 = vadd.f32 %v835, %v1049
        %v1051 = vpop.f32.mrf.mxu0
        %1052 = vmatprep.mubr.f32.mxu0 0.0
        %1053 = vmatmul.mubr.f32.gmra.mxu0 %v564
        %v1054 = vpop.f32.mrf.mxu0
        %v1055 = vadd.f32 %v840, %v1054
        %v1056 = vpop.f32.mrf.mxu0
        %1057 = vmatprep.mubr.f32.mxu0 0.0
        %1058 = vmatmul.mubr.f32.gmra.mxu0 %v566
        %v1059 = vpop.f32.mrf.mxu0
        %v1060 = vadd.f32 %v845, %v1059
        %v1061 = vpop.f32.mrf.mxu0
        %1062 = vmatprep.mubr.f32.mxu0 0.0
        %1063 = vmatmul.mubr.f32.gmra.mxu0 %v568
        %v1064 = vpop.f32.mrf.mxu0
        %v1065 = vadd.f32 %v850, %v1064
        %v1066 = vpop.f32.mrf.mxu0
        %1067 = vmatprep.mubr.f32.mxu0 0.0
        %1068 = vmatmul.mubr.f32.gmra.mxu0 %v571
        %v1069 = vpop.f32.mrf.mxu0
        %v1070 = vadd.f32 %v855, %v1069
        %v1071 = vpop.f32.mrf.mxu0
        %1072 = vmatprep.mubr.f32.mxu0 0.0
        %1073 = vmatmul.mubr.f32.gmra.mxu0 %v573
        %v1074 = vpop.f32.mrf.mxu0
        %v1075 = vadd.f32 %v860, %v1074
        %v1076 = vpop.f32.mrf.mxu0
        %1077 = vmatprep.mubr.f32.mxu0 0.0
        %1078 = vmatmul.mubr.f32.gmra.mxu0 %v575
        %v1079 = vpop.f32.mrf.mxu0
        %v1080 = vadd.f32 %v865, %v1079
        %v1081 = vpop.f32.mrf.mxu0
        %1082 = vmatprep.mubr.f32.mxu0 0.0
        %1083 = vmatmul.mubr.f32.gmra.mxu0 %v578
        %v1084 = vpop.f32.mrf.mxu0
        %v1085 = vadd.f32 %v870, %v1084
        %v1086 = vpop.f32.mrf.mxu0
        %1087 = vmatprep.mubr.f32.mxu0 0.0
        %1088 = vmatmul.mubr.f32.gmra.mxu0 %v580
        %v1089 = vpop.f32.mrf.mxu0
        %v1090 = vadd.f32 %v875, %v1089
        %v1091 = vpop.f32.mrf.mxu0
        %1092 = vmatprep.mubr.f32.mxu0 0.0
        %1093 = vmatmul.mubr.f32.gmra.mxu0 %v582
        %v1094 = vpop.f32.mrf.mxu0
        %v1095 = vadd.f32 %v880, %v1094
        %v1096 = vpop.f32.mrf.mxu0
        %1097 = vdwg.mxu0
        %1098 = vmatprep.subr.mxu0 0.0
        %1099 = vmatpush1.msra.mxu0 %v405
        %1100 = vmatprep.subr.mxu0 0.0
        %1101 = vmatpush1.msra.mxu0 %v404
        %1102 = vmatprep.subr.mxu0 0.0
        %1103 = vmatpush1.msra.mxu0 %v403
        %1104 = vmatprep.subr.mxu0 0.0
        %1105 = vmatpush1.msra.mxu0 %v402
        %1106 = vmatprep.subr.mxu0 0.0
        %1107 = vmatpush1.msra.mxu0 %v401
        %1108 = vmatprep.subr.mxu0 0.0
        %1109 = vmatpush1.msra.mxu0 %v400
        %1110 = vmatprep.subr.mxu0 0.0
        %1111 = vmatpush1.msra.mxu0 %v399
        %1112 = vmatprep.subr.mxu0 0.0
        %1113 = vmatpush1.msra.mxu0 %v398
        %1114 = vmatprep.subr.mxu0 0.0
        %1115 = vmatpush1.msra.mxu0 %v397
        %1116 = vmatprep.subr.mxu0 0.0
        %1117 = vmatpush1.msra.mxu0 %v396
        %1118 = vmatprep.subr.mxu0 0.0
        %1119 = vmatpush1.msra.mxu0 %v395
        %1120 = vmatprep.subr.mxu0 0.0
        %1121 = vmatpush1.msra.mxu0 %v394
        %1122 = vmatprep.subr.mxu0 0.0
        %1123 = vmatpush1.msra.mxu0 %v393
        %1124 = vmatprep.subr.mxu0 0.0
        %1125 = vmatpush1.msra.mxu0 %v392
        %1126 = vmatprep.subr.mxu0 0.0
        %1127 = vmatpush1.msra.mxu0 %v391
        %1128 = vmatprep.subr.mxu0 0.0
        %1129 = vmatpush1.msra.mxu0 %v390
        %1130 = vmatprep.subr.mxu0 0.0
        %1131 = vmatpush2.msra.mxu0 %v421
        %1132 = vmatprep.subr.mxu0 0.0
        %1133 = vmatpush2.msra.mxu0 %v420
        %1134 = vmatprep.subr.mxu0 0.0
        %1135 = vmatpush2.msra.mxu0 %v419
        %1136 = vmatprep.subr.mxu0 0.0
        %1137 = vmatpush2.msra.mxu0 %v418
        %1138 = vmatprep.subr.mxu0 0.0
        %1139 = vmatpush2.msra.mxu0 %v417
        %1140 = vmatprep.subr.mxu0 0.0
        %1141 = vmatpush2.msra.mxu0 %v416
        %1142 = vmatprep.subr.mxu0 0.0
        %1143 = vmatpush2.msra.mxu0 %v415
        %1144 = vmatprep.subr.mxu0 0.0
        %1145 = vmatpush2.msra.mxu0 %v414
        %1146 = vmatprep.subr.mxu0 0.0
        %1147 = vmatpush2.msra.mxu0 %v413
        %1148 = vmatprep.subr.mxu0 0.0
        %1149 = vmatpush2.msra.mxu0 %v412
        %1150 = vmatprep.subr.mxu0 0.0
        %1151 = vmatpush2.msra.mxu0 %v411
        %1152 = vmatprep.subr.mxu0 0.0
        %1153 = vmatpush2.msra.mxu0 %v410
        %1154 = vmatprep.subr.mxu0 0.0
        %1155 = vmatpush2.msra.mxu0 %v409
        %1156 = vmatprep.subr.mxu0 0.0
        %1157 = vmatpush2.msra.mxu0 %v408
        %1158 = vmatprep.subr.mxu0 0.0
        %1159 = vmatpush2.msra.mxu0 %v407
        %1160 = vmatprep.subr.mxu0 0.0
        %1161 = vmatpush2.msra.mxu0 %v406
        %1162 = vmatprep.mubr.f32.mxu0 %v357
        %1163 = vmatmul.mubr.f32.gmra.mxu0 %v354
        %v1164 = vpop.f32.mrf.mxu0
        %v1165 = vadd.f32 %v950, %v1164
        %v1166 = vpop.f32.mrf.mxu0
        %1167 = vmatprep.mubr.f32.mxu0 %v358
        %1168 = vmatmul.mubr.f32.gmra.mxu0 %v355
        %v1169 = vpop.f32.mrf.mxu0
        %v1170 = vadd.f32 %v955, %v1169
        %v1171 = vpop.f32.mrf.mxu0
        %1172 = vmatprep.mubr.f32.mxu0 %v359
        %1173 = vmatmul.mubr.f32.gmra.mxu0 %v356
        %v1174 = vpop.f32.mrf.mxu0
        %v1175 = vadd.f32 %v960, %v1174
        %v1176 = vpop.f32.mrf.mxu0
        %1177 = vmatprep.mubr.f32.mxu0 %v360
        %1178 = vmatmul.mubr.f32.gmra.mxu0 %v357
        %v1179 = vpop.f32.mrf.mxu0
        %v1180 = vadd.f32 %v965, %v1179
        %v1181 = vpop.f32.mrf.mxu0
        %1182 = vmatprep.mubr.f32.mxu0 %v361
        %1183 = vmatmul.mubr.f32.gmra.mxu0 %v358
        %v1184 = vpop.f32.mrf.mxu0
        %v1185 = vadd.f32 %v970, %v1184
        %v1186 = vpop.f32.mrf.mxu0
        %1187 = vmatprep.mubr.f32.mxu0 %v362
        %1188 = vmatmul.mubr.f32.gmra.mxu0 %v359
        %v1189 = vpop.f32.mrf.mxu0
        %v1190 = vadd.f32 %v975, %v1189
        %v1191 = vpop.f32.mrf.mxu0
        %1192 = vmatprep.mubr.f32.mxu0 %v363
        %1193 = vmatmul.mubr.f32.gmra.mxu0 %v360
        %v1194 = vpop.f32.mrf.mxu0
        %v1195 = vadd.f32 %v980, %v1194
        %v1196 = vpop.f32.mrf.mxu0
        %1197 = vmatprep.mubr.f32.mxu0 %v364
        %1198 = vmatmul.mubr.f32.gmra.mxu0 %v361
        %v1199 = vpop.f32.mrf.mxu0
        %v1200 = vadd.f32 %v985, %v1199
        %v1201 = vpop.f32.mrf.mxu0
        %1202 = vmatprep.mubr.f32.mxu0 %v365
        %1203 = vmatmul.mubr.f32.gmra.mxu0 %v362
        %v1204 = vpop.f32.mrf.mxu0
        %v1205 = vadd.f32 %v990, %v1204
        %v1206 = vpop.f32.mrf.mxu0
        %1207 = vmatprep.mubr.f32.mxu0 %v366
        %1208 = vmatmul.mubr.f32.gmra.mxu0 %v363
        %v1209 = vpop.f32.mrf.mxu0
        %v1210 = vadd.f32 %v995, %v1209
        %v1211 = vpop.f32.mrf.mxu0
        %1212 = vmatprep.mubr.f32.mxu0 %v367
        %1213 = vmatmul.mubr.f32.gmra.mxu0 %v364
        %v1214 = vpop.f32.mrf.mxu0
        %v1215 = vadd.f32 %v1000, %v1214
        %v1216 = vpop.f32.mrf.mxu0
        %1217 = vmatprep.mubr.f32.mxu0 %v368
        %1218 = vmatmul.mubr.f32.gmra.mxu0 %v365
        %v1219 = vpop.f32.mrf.mxu0
        %v1220 = vadd.f32 %v1005, %v1219
        %v1221 = vpop.f32.mrf.mxu0
        %1222 = vmatprep.mubr.f32.mxu0 %v369
        %1223 = vmatmul.mubr.f32.gmra.mxu0 %v366
        %v1224 = vpop.f32.mrf.mxu0
        %v1225 = vadd.f32 %v1010, %v1224
        %v1226 = vpop.f32.mrf.mxu0
        %1227 = vmatprep.mubr.f32.mxu0 %v370
        %1228 = vmatmul.mubr.f32.gmra.mxu0 %v367
        %v1229 = vpop.f32.mrf.mxu0
        %v1230 = vadd.f32 %v1015, %v1229
        %v1231 = vpop.f32.mrf.mxu0
        %1232 = vmatprep.mubr.f32.mxu0 %v371
        %1233 = vmatmul.mubr.f32.gmra.mxu0 %v368
        %v1234 = vpop.f32.mrf.mxu0
        %v1235 = vadd.f32 %v1020, %v1234
        %v1236 = vpop.f32.mrf.mxu0
        %1237 = vmatprep.mubr.f32.mxu0 %v372
        %1238 = vmatmul.mubr.f32.gmra.mxu0 %v369
        %v1239 = vpop.f32.mrf.mxu0
        %v1240 = vadd.f32 %v1025, %v1239
        %v1241 = vpop.f32.mrf.mxu0
        %1242 = vmatprep.mubr.f32.mxu0 %v373
        %1243 = vmatmul.mubr.f32.gmra.mxu0 %v370
        %v1244 = vpop.f32.mrf.mxu0
        %v1245 = vadd.f32 %v1030, %v1244
        %v1246 = vpop.f32.mrf.mxu0
        %1247 = vmatprep.mubr.f32.mxu0 %v374
        %1248 = vmatmul.mubr.f32.gmra.mxu0 %v371
        %v1249 = vpop.f32.mrf.mxu0
        %v1250 = vadd.f32 %v1035, %v1249
        %v1251 = vpop.f32.mrf.mxu0
        %1252 = vmatprep.mubr.f32.mxu0 %v375
        %1253 = vmatmul.mubr.f32.gmra.mxu0 %v372
        %v1254 = vpop.f32.mrf.mxu0
        %v1255 = vadd.f32 %v1040, %v1254
        %v1256 = vpop.f32.mrf.mxu0
        %1257 = vmatprep.mubr.f32.mxu0 %v376
        %1258 = vmatmul.mubr.f32.gmra.mxu0 %v373
        %v1259 = vpop.f32.mrf.mxu0
        %v1260 = vadd.f32 %v1045, %v1259
        %v1261 = vpop.f32.mrf.mxu0
        %1262 = vmatprep.mubr.f32.mxu0 %v377
        %1263 = vmatmul.mubr.f32.gmra.mxu0 %v374
        %v1264 = vpop.f32.mrf.mxu0
        %v1265 = vadd.f32 %v1050, %v1264
        %v1266 = vpop.f32.mrf.mxu0
        %1267 = vmatprep.mubr.f32.mxu0 %v378
        %1268 = vmatmul.mubr.f32.gmra.mxu0 %v375
        %v1269 = vpop.f32.mrf.mxu0
        %v1270 = vadd.f32 %v1055, %v1269
        %v1271 = vpop.f32.mrf.mxu0
        %1272 = vmatprep.mubr.f32.mxu0 %v379
        %1273 = vmatmul.mubr.f32.gmra.mxu0 %v376
        %v1274 = vpop.f32.mrf.mxu0
        %v1275 = vadd.f32 %v1060, %v1274
        %v1276 = vpop.f32.mrf.mxu0
        %1277 = vmatprep.mubr.f32.mxu0 %v380
        %1278 = vmatmul.mubr.f32.gmra.mxu0 %v377
        %v1279 = vpop.f32.mrf.mxu0
        %v1280 = vadd.f32 %v1065, %v1279
        %v1281 = vpop.f32.mrf.mxu0
        %1282 = vmatprep.mubr.f32.mxu0 %v381
        %1283 = vmatmul.mubr.f32.gmra.mxu0 %v378
        %v1284 = vpop.f32.mrf.mxu0
        %v1285 = vadd.f32 %v1070, %v1284
        %v1286 = vpop.f32.mrf.mxu0
        %1287 = vmatprep.mubr.f32.mxu0 %v382
        %1288 = vmatmul.mubr.f32.gmra.mxu0 %v379
        %v1289 = vpop.f32.mrf.mxu0
        %v1290 = vadd.f32 %v1075, %v1289
        %v1291 = vpop.f32.mrf.mxu0
        %1292 = vmatprep.mubr.f32.mxu0 %v383
        %1293 = vmatmul.mubr.f32.gmra.mxu0 %v380
        %v1294 = vpop.f32.mrf.mxu0
        %v1295 = vadd.f32 %v1080, %v1294
        %v1296 = vpop.f32.mrf.mxu0
        %1297 = vmatprep.mubr.f32.mxu0 %v384
        %1298 = vmatmul.mubr.f32.gmra.mxu0 %v381
        %v1299 = vpop.f32.mrf.mxu0
        %v1300 = vadd.f32 %v1085, %v1299
        %v1301 = vpop.f32.mrf.mxu0
        %1302 = vmatprep.mubr.f32.mxu0 %v385
        %1303 = vmatmul.mubr.f32.gmra.mxu0 %v382
        %v1304 = vpop.f32.mrf.mxu0
        %v1305 = vadd.f32 %v1090, %v1304
        %v1306 = vpop.f32.mrf.mxu0
        %1307 = vmatprep.mubr.f32.mxu0 %v386
        %1308 = vmatmul.mubr.f32.gmra.mxu0 %v383
        %v1309 = vpop.f32.mrf.mxu0
        %v1310 = vadd.f32 %v1095, %v1309
        %v1311 = vpop.f32.mrf.mxu0
        %1312 = vdwg.mxu0
        %1313 = vmatprep.subr.mxu0 0.0
        %1314 = vmatpush1.msra.mxu0 %v437
        %1315 = vmatprep.subr.mxu0 0.0
        %1316 = vmatpush1.msra.mxu0 %v436
        %1317 = vmatprep.subr.mxu0 0.0
        %1318 = vmatpush1.msra.mxu0 %v435
        %1319 = vmatprep.subr.mxu0 0.0
        %1320 = vmatpush1.msra.mxu0 %v434
        %1321 = vmatprep.subr.mxu0 0.0
        %1322 = vmatpush1.msra.mxu0 %v433
        %1323 = vmatprep.subr.mxu0 0.0
        %1324 = vmatpush1.msra.mxu0 %v432
        %1325 = vmatprep.subr.mxu0 0.0
        %1326 = vmatpush1.msra.mxu0 %v431
        %1327 = vmatprep.subr.mxu0 0.0
        %1328 = vmatpush1.msra.mxu0 %v430
        %1329 = vmatprep.subr.mxu0 0.0
        %1330 = vmatpush1.msra.mxu0 %v429
        %1331 = vmatprep.subr.mxu0 0.0
        %1332 = vmatpush1.msra.mxu0 %v428
        %1333 = vmatprep.subr.mxu0 0.0
        %1334 = vmatpush1.msra.mxu0 %v427
        %1335 = vmatprep.subr.mxu0 0.0
        %1336 = vmatpush1.msra.mxu0 %v426
        %1337 = vmatprep.subr.mxu0 0.0
        %1338 = vmatpush1.msra.mxu0 %v425
        %1339 = vmatprep.subr.mxu0 0.0
        %1340 = vmatpush1.msra.mxu0 %v424
        %1341 = vmatprep.subr.mxu0 0.0
        %1342 = vmatpush1.msra.mxu0 %v423
        %1343 = vmatprep.subr.mxu0 0.0
        %1344 = vmatpush1.msra.mxu0 %v422
        %1345 = vmatprep.subr.mxu0 0.0
        %1346 = vmatpush2.msra.mxu0 0.0
        %1347 = vmatprep.subr.mxu0 0.0
        %1348 = vmatpush2.msra.mxu0 0.0
        %1349 = vmatprep.subr.mxu0 0.0
        %1350 = vmatpush2.msra.mxu0 0.0
        %1351 = vmatprep.subr.mxu0 0.0
        %1352 = vmatpush2.msra.mxu0 0.0
        %1353 = vmatprep.subr.mxu0 0.0
        %1354 = vmatpush2.msra.mxu0 0.0
        %1355 = vmatprep.subr.mxu0 0.0
        %1356 = vmatpush2.msra.mxu0 0.0
        %1357 = vmatprep.subr.mxu0 0.0
        %1358 = vmatpush2.msra.mxu0 0.0
        %1359 = vmatprep.subr.mxu0 0.0
        %1360 = vmatpush2.msra.mxu0 0.0
        %1361 = vmatprep.subr.mxu0 0.0
        %1362 = vmatpush2.msra.mxu0 0.0
        %1363 = vmatprep.subr.mxu0 0.0
        %1364 = vmatpush2.msra.mxu0 0.0
        %1365 = vmatprep.subr.mxu0 0.0
        %1366 = vmatpush2.msra.mxu0 0.0
        %1367 = vmatprep.subr.mxu0 0.0
        %1368 = vmatpush2.msra.mxu0 0.0
        %1369 = vmatprep.subr.mxu0 0.0
        %1370 = vmatpush2.msra.mxu0 0.0
        %1371 = vmatprep.subr.mxu0 0.0
        %1372 = vmatpush2.msra.mxu0 0.0
        %1373 = vmatprep.subr.mxu0 0.0
        %1374 = vmatpush2.msra.mxu0 0.0
        %1375 = vmatprep.subr.mxu0 0.0
        %1376 = vmatpush2.msra.mxu0 0.0
        %1377 = vmatprep.mubr.f32.mxu0 0.0
        %1378 = vmatmul.mubr.f32.gmra.mxu0 %v360
        %v1379 = vpop.f32.mrf.mxu0
        %v1380 = vadd.f32 %v1165, %v1379
        %v1381 = vpop.f32.mrf.mxu0
        %1382 = vmatprep.mubr.f32.mxu0 0.0
        %1383 = vmatmul.mubr.f32.gmra.mxu0 %v361
        %v1384 = vpop.f32.mrf.mxu0
        %v1385 = vadd.f32 %v1170, %v1384
        %v1386 = vpop.f32.mrf.mxu0
        %1387 = vmatprep.mubr.f32.mxu0 0.0
        %1388 = vmatmul.mubr.f32.gmra.mxu0 %v362
        %v1389 = vpop.f32.mrf.mxu0
        %v1390 = vadd.f32 %v1175, %v1389
        %v1391 = vpop.f32.mrf.mxu0
        %1392 = vmatprep.mubr.f32.mxu0 0.0
        %1393 = vmatmul.mubr.f32.gmra.mxu0 %v363
        %v1394 = vpop.f32.mrf.mxu0
        %v1395 = vadd.f32 %v1180, %v1394
        %v1396 = vpop.f32.mrf.mxu0
        %1397 = vmatprep.mubr.f32.mxu0 0.0
        %1398 = vmatmul.mubr.f32.gmra.mxu0 %v364
        %v1399 = vpop.f32.mrf.mxu0
        %v1400 = vadd.f32 %v1185, %v1399
        %v1401 = vpop.f32.mrf.mxu0
        %1402 = vmatprep.mubr.f32.mxu0 0.0
        %1403 = vmatmul.mubr.f32.gmra.mxu0 %v365
        %v1404 = vpop.f32.mrf.mxu0
        %v1405 = vadd.f32 %v1190, %v1404
        %v1406 = vpop.f32.mrf.mxu0
        %1407 = vmatprep.mubr.f32.mxu0 0.0
        %1408 = vmatmul.mubr.f32.gmra.mxu0 %v366
        %v1409 = vpop.f32.mrf.mxu0
        %v1410 = vadd.f32 %v1195, %v1409
        %v1411 = vpop.f32.mrf.mxu0
        %1412 = vmatprep.mubr.f32.mxu0 0.0
        %1413 = vmatmul.mubr.f32.gmra.mxu0 %v367
        %v1414 = vpop.f32.mrf.mxu0
        %v1415 = vadd.f32 %v1200, %v1414
        %v1416 = vpop.f32.mrf.mxu0
        %1417 = vmatprep.mubr.f32.mxu0 0.0
        %1418 = vmatmul.mubr.f32.gmra.mxu0 %v368
        %v1419 = vpop.f32.mrf.mxu0
        %v1420 = vadd.f32 %v1205, %v1419
        %v1421 = vpop.f32.mrf.mxu0
        %1422 = vmatprep.mubr.f32.mxu0 0.0
        %1423 = vmatmul.mubr.f32.gmra.mxu0 %v369
        %v1424 = vpop.f32.mrf.mxu0
        %v1425 = vadd.f32 %v1210, %v1424
        %v1426 = vpop.f32.mrf.mxu0
        %1427 = vmatprep.mubr.f32.mxu0 0.0
        %1428 = vmatmul.mubr.f32.gmra.mxu0 %v370
        %v1429 = vpop.f32.mrf.mxu0
        %v1430 = vadd.f32 %v1215, %v1429
        %v1431 = vpop.f32.mrf.mxu0
        %1432 = vmatprep.mubr.f32.mxu0 0.0
        %1433 = vmatmul.mubr.f32.gmra.mxu0 %v371
        %v1434 = vpop.f32.mrf.mxu0
        %v1435 = vadd.f32 %v1220, %v1434
        %v1436 = vpop.f32.mrf.mxu0
        %1437 = vmatprep.mubr.f32.mxu0 0.0
        %1438 = vmatmul.mubr.f32.gmra.mxu0 %v372
        %v1439 = vpop.f32.mrf.mxu0
        %v1440 = vadd.f32 %v1225, %v1439
        %v1441 = vpop.f32.mrf.mxu0
        %1442 = vmatprep.mubr.f32.mxu0 0.0
        %1443 = vmatmul.mubr.f32.gmra.mxu0 %v373
        %v1444 = vpop.f32.mrf.mxu0
        %v1445 = vadd.f32 %v1230, %v1444
        %v1446 = vpop.f32.mrf.mxu0
        %1447 = vmatprep.mubr.f32.mxu0 0.0
        %1448 = vmatmul.mubr.f32.gmra.mxu0 %v374
        %v1449 = vpop.f32.mrf.mxu0
        %v1450 = vadd.f32 %v1235, %v1449
        %v1451 = vpop.f32.mrf.mxu0
        %1452 = vmatprep.mubr.f32.mxu0 0.0
        %1453 = vmatmul.mubr.f32.gmra.mxu0 %v375
        %v1454 = vpop.f32.mrf.mxu0
        %v1455 = vadd.f32 %v1240, %v1454
        %v1456 = vpop.f32.mrf.mxu0
        %1457 = vmatprep.mubr.f32.mxu0 0.0
        %1458 = vmatmul.mubr.f32.gmra.mxu0 %v376
        %v1459 = vpop.f32.mrf.mxu0
        %v1460 = vadd.f32 %v1245, %v1459
        %v1461 = vpop.f32.mrf.mxu0
        %1462 = vmatprep.mubr.f32.mxu0 0.0
        %1463 = vmatmul.mubr.f32.gmra.mxu0 %v377
        %v1464 = vpop.f32.mrf.mxu0
        %v1465 = vadd.f32 %v1250, %v1464
        %v1466 = vpop.f32.mrf.mxu0
        %1467 = vmatprep.mubr.f32.mxu0 0.0
        %1468 = vmatmul.mubr.f32.gmra.mxu0 %v378
        %v1469 = vpop.f32.mrf.mxu0
        %v1470 = vadd.f32 %v1255, %v1469
        %v1471 = vpop.f32.mrf.mxu0
        %1472 = vmatprep.mubr.f32.mxu0 0.0
        %1473 = vmatmul.mubr.f32.gmra.mxu0 %v379
        %v1474 = vpop.f32.mrf.mxu0
        %v1475 = vadd.f32 %v1260, %v1474
        %v1476 = vpop.f32.mrf.mxu0
        %1477 = vmatprep.mubr.f32.mxu0 0.0
        %1478 = vmatmul.mubr.f32.gmra.mxu0 %v380
        %v1479 = vpop.f32.mrf.mxu0
        %v1480 = vadd.f32 %v1265, %v1479
        %v1481 = vpop.f32.mrf.mxu0
        %1482 = vmatprep.mubr.f32.mxu0 0.0
        %1483 = vmatmul.mubr.f32.gmra.mxu0 %v381
        %v1484 = vpop.f32.mrf.mxu0
        %v1485 = vadd.f32 %v1270, %v1484
        %v1486 = vpop.f32.mrf.mxu0
        %1487 = vmatprep.mubr.f32.mxu0 0.0
        %1488 = vmatmul.mubr.f32.gmra.mxu0 %v382
        %v1489 = vpop.f32.mrf.mxu0
        %v1490 = vadd.f32 %v1275, %v1489
        %v1491 = vpop.f32.mrf.mxu0
        %1492 = vmatprep.mubr.f32.mxu0 0.0
        %1493 = vmatmul.mubr.f32.gmra.mxu0 %v383
        %v1494 = vpop.f32.mrf.mxu0
        %v1495 = vadd.f32 %v1280, %v1494
        %v1496 = vpop.f32.mrf.mxu0
        %1497 = vmatprep.mubr.f32.mxu0 0.0
        %1498 = vmatmul.mubr.f32.gmra.mxu0 %v384
        %v1499 = vpop.f32.mrf.mxu0
        %v1500 = vadd.f32 %v1285, %v1499
        %v1501 = vpop.f32.mrf.mxu0
        %1502 = vmatprep.mubr.f32.mxu0 0.0
        %1503 = vmatmul.mubr.f32.gmra.mxu0 %v385
        %v1504 = vpop.f32.mrf.mxu0
        %v1505 = vadd.f32 %v1290, %v1504
        %v1506 = vpop.f32.mrf.mxu0
        %1507 = vmatprep.mubr.f32.mxu0 0.0
        %1508 = vmatmul.mubr.f32.gmra.mxu0 %v386
        %v1509 = vpop.f32.mrf.mxu0
        %v1510 = vadd.f32 %v1295, %v1509
        %v1511 = vpop.f32.mrf.mxu0
        %1512 = vmatprep.mubr.f32.mxu0 0.0
        %1513 = vmatmul.mubr.f32.gmra.mxu0 %v387
        %v1514 = vpop.f32.mrf.mxu0
        %v1515 = vadd.f32 %v1300, %v1514
        %v1516 = vpop.f32.mrf.mxu0
        %1517 = vmatprep.mubr.f32.mxu0 0.0
        %1518 = vmatmul.mubr.f32.gmra.mxu0 %v388
        %v1519 = vpop.f32.mrf.mxu0
        %v1520 = vadd.f32 %v1305, %v1519
        %v1521 = vpop.f32.mrf.mxu0
        %1522 = vmatprep.mubr.f32.mxu0 0.0
        %1523 = vmatmul.mubr.f32.gmra.mxu0 %v389
        %v1524 = vpop.f32.mrf.mxu0
        %v1525 = vadd.f32 %v1310, %v1524
        %v1526 = vpop.f32.mrf.mxu0
        %1527 = vdwg.mxu0
        %vm1528 = vcmask 1045504
        %v1529 = vrot.slane %v354, 2
        %v1530 = vrot.slane %v355, 2
        %v1531 = vsel %vm1528, %v1529, %v1530
        %v1532 = vrot.slane %v357, 2
        %v1533 = vrot.slane %v358, 2
        %v1534 = vsel %vm1528, %v1532, %v1533
        %v1535 = vrot.slane %v360, 2
        %v1536 = vrot.slane %v361, 2
        %v1537 = vsel %vm1528, %v1535, %v1536
        %v1538 = vrot.slane %v356, 2
        %v1539 = vsel %vm1528, %v1530, %v1538
        %v1540 = vrot.slane %v359, 2
        %v1541 = vsel %vm1528, %v1533, %v1540
        %v1542 = vrot.slane %v362, 2
        %v1543 = vsel %vm1528, %v1536, %v1542
        %v1544 = vrot.slane %v438, 2
        %v1545 = vsel %vm1528, %v1538, %v1544
        %v1546 = vrot.slane %v439, 2
        %v1547 = vsel %vm1528, %v1540, %v1546
        %v1548 = vrot.slane %v440, 2
        %v1549 = vsel %vm1528, %v1542, %v1548
        %v1550 = vrot.slane %v363, 2
        %v1551 = vrot.slane %v364, 2
        %v1552 = vsel %vm1528, %v1550, %v1551
        %v1553 = vrot.slane %v365, 2
        %v1554 = vsel %vm1528, %v1551, %v1553
        %v1555 = vrot.slane %v441, 2
        %v1556 = vsel %vm1528, %v1553, %v1555
        %v1557 = vrot.slane %v366, 2
        %v1558 = vrot.slane %v367, 2
        %v1559 = vsel %vm1528, %v1557, %v1558
        %v1560 = vrot.slane %v368, 2
        %v1561 = vsel %vm1528, %v1558, %v1560
        %v1562 = vrot.slane %v442, 2
        %v1563 = vsel %vm1528, %v1560, %v1562
        %v1564 = vrot.slane %v369, 2
        %v1565 = vrot.slane %v370, 2
        %v1566 = vsel %vm1528, %v1564, %v1565
        %v1567 = vrot.slane %v371, 2
        %v1568 = vsel %vm1528, %v1565, %v1567
        %v1569 = vrot.slane %v443, 2
        %v1570 = vsel %vm1528, %v1567, %v1569
        %v1571 = vrot.slane %v372, 2
        %v1572 = vrot.slane %v373, 2
        %v1573 = vsel %vm1528, %v1571, %v1572
        %v1574 = vrot.slane %v374, 2
        %v1575 = vsel %vm1528, %v1572, %v1574
        %v1576 = vrot.slane %v444, 2
        %v1577 = vsel %vm1528, %v1574, %v1576
        %v1578 = vrot.slane %v375, 2
        %v1579 = vrot.slane %v376, 2
        %v1580 = vsel %vm1528, %v1578, %v1579
        %v1581 = vrot.slane %v377, 2
        %v1582 = vsel %vm1528, %v1579, %v1581
        %v1583 = vrot.slane %v445, 2
        %v1584 = vsel %vm1528, %v1581, %v1583
        %v1585 = vrot.slane %v378, 2
        %v1586 = vrot.slane %v379, 2
        %v1587 = vsel %vm1528, %v1585, %v1586
        %v1588 = vrot.slane %v380, 2
        %v1589 = vsel %vm1528, %v1586, %v1588
        %v1590 = vrot.slane %v446, 2
        %v1591 = vsel %vm1528, %v1588, %v1590
        %v1592 = vrot.slane %v381, 2
        %v1593 = vrot.slane %v382, 2
        %v1594 = vsel %vm1528, %v1592, %v1593
        %v1595 = vrot.slane %v383, 2
        %v1596 = vsel %vm1528, %v1593, %v1595
        %v1597 = vrot.slane %v447, 2
        %v1598 = vsel %vm1528, %v1595, %v1597
        %v1599 = vrot.slane %v384, 2
        %v1600 = vrot.slane %v385, 2
        %v1601 = vsel %vm1528, %v1599, %v1600
        %v1602 = vrot.slane %v386, 2
        %v1603 = vsel %vm1528, %v1600, %v1602
        %v1604 = vrot.slane %v448, 2
        %v1605 = vsel %vm1528, %v1602, %v1604
        %v1606 = vrot.slane %v387, 2
        %v1607 = vrot.slane %v388, 2
        %v1608 = vsel %vm1528, %v1606, %v1607
        %v1609 = vrot.slane %v389, 2
        %v1610 = vsel %vm1528, %v1607, %v1609
        %v1611 = vrot.slane %v449, 2
        %v1612 = vsel %vm1528, %v1609, %v1611
        %s1649 = scalar_lea.vmem %s3, 768
        %v1650 = vld [vmem:[%s1649] sm:$0xff]
        %v1651 = vld [vmem:[%s1649 + $0x8] sm:$0xff]
        %v1652 = vld [vmem:[%s1649 + $0x10] sm:$0xff]
        %v1653 = vld [vmem:[%s1649 + $0x18] sm:$0xff]
        %v1654 = vld [vmem:[%s1649 + $0x20] sm:$0xff]
        %v1655 = vld [vmem:[%s1649 + $0x28] sm:$0xff]
        %v1656 = vld [vmem:[%s1649 + $0x30] sm:$0xff]
        %v1657 = vld [vmem:[%s1649 + $0x38] sm:$0xff]
        %v1658 = vld [vmem:[%s1649 + $0x40] sm:$0xff]
        %v1659 = vld [vmem:[%s1649 + $0x48] sm:$0xff]
        %v1660 = vld [vmem:[%s1649 + $0x50] sm:$0xff]
        %v1661 = vld [vmem:[%s1649 + $0x58] sm:$0xff]
        %v1662 = vld [vmem:[%s1649 + $0x60] sm:$0xff]
        %v1663 = vld [vmem:[%s1649 + $0x68] sm:$0xff]
        %v1664 = vld [vmem:[%s1649 + $0x70] sm:$0xff]
        %v1665 = vld [vmem:[%s1649 + $0x78] sm:$0xff]
        %v1666 = vld [vmem:[%s1649 + $0x80] sm:$0xff]
        %v1667 = vld [vmem:[%s1649 + $0x88] sm:$0xff]
        %v1668 = vld [vmem:[%s1649 + $0x90] sm:$0xff]
        %v1669 = vld [vmem:[%s1649 + $0x98] sm:$0xff]
        %v1670 = vld [vmem:[%s1649 + $0xa0] sm:$0xff]
        %v1671 = vld [vmem:[%s1649 + $0xa8] sm:$0xff]
        %v1672 = vld [vmem:[%s1649 + $0xb0] sm:$0xff]
        %v1673 = vld [vmem:[%s1649 + $0xb8] sm:$0xff]
        %v1674 = vld [vmem:[%s1649 + $0xc0] sm:$0xff]
        %v1675 = vld [vmem:[%s1649 + $0xc8] sm:$0xff]
        %v1676 = vld [vmem:[%s1649 + $0xd0] sm:$0xff]
        %v1677 = vld [vmem:[%s1649 + $0xd8] sm:$0xff]
        %v1678 = vld [vmem:[%s1649 + $0xe0] sm:$0xff]
        %v1679 = vld [vmem:[%s1649 + $0xe8] sm:$0xff]
        %v1680 = vld [vmem:[%s1649 + $0xf0] sm:$0xff]
        %v1681 = vld [vmem:[%s1649 + $0xf8] sm:$0xff]
        %v1682 = vld [vmem:[%s1649 + $0x100] sm:$0xff]
        %v1683 = vld [vmem:[%s1649 + $0x108] sm:$0xff]
        %v1684 = vld [vmem:[%s1649 + $0x110] sm:$0xff]
        %v1685 = vld [vmem:[%s1649 + $0x118] sm:$0xff]
        %v1686 = vld [vmem:[%s1649 + $0x120] sm:$0xff]
        %v1687 = vld [vmem:[%s1649 + $0x128] sm:$0xff]
        %v1688 = vld [vmem:[%s1649 + $0x130] sm:$0xff]
        %v1689 = vld [vmem:[%s1649 + $0x138] sm:$0xff]
        %v1690 = vld [vmem:[%s1649 + $0x140] sm:$0xff]
        %v1691 = vld [vmem:[%s1649 + $0x148] sm:$0xff]
        %v1692 = vld [vmem:[%s1649 + $0x150] sm:$0xff]
        %v1693 = vld [vmem:[%s1649 + $0x158] sm:$0xff]
        %v1694 = vld [vmem:[%s1649 + $0x160] sm:$0xff]
        %v1695 = vld [vmem:[%s1649 + $0x168] sm:$0xff]
        %v1696 = vld [vmem:[%s1649 + $0x170] sm:$0xff]
        %v1697 = vld [vmem:[%s1649 + $0x178] sm:$0xff]
        %1698 = vmatprep.subr.mxu0 0.0
        %1699 = vmatpush1.msra.mxu0 %v1665
        %1700 = vmatprep.subr.mxu0 0.0
        %1701 = vmatpush1.msra.mxu0 %v1664
        %1702 = vmatprep.subr.mxu0 0.0
        %1703 = vmatpush1.msra.mxu0 %v1663
        %1704 = vmatprep.subr.mxu0 0.0
        %1705 = vmatpush1.msra.mxu0 %v1662
        %1706 = vmatprep.subr.mxu0 0.0
        %1707 = vmatpush1.msra.mxu0 %v1661
        %1708 = vmatprep.subr.mxu0 0.0
        %1709 = vmatpush1.msra.mxu0 %v1660
        %1710 = vmatprep.subr.mxu0 0.0
        %1711 = vmatpush1.msra.mxu0 %v1659
        %1712 = vmatprep.subr.mxu0 0.0
        %1713 = vmatpush1.msra.mxu0 %v1658
        %1714 = vmatprep.subr.mxu0 0.0
        %1715 = vmatpush1.msra.mxu0 %v1657
        %1716 = vmatprep.subr.mxu0 0.0
        %1717 = vmatpush1.msra.mxu0 %v1656
        %1718 = vmatprep.subr.mxu0 0.0
        %1719 = vmatpush1.msra.mxu0 %v1655
        %1720 = vmatprep.subr.mxu0 0.0
        %1721 = vmatpush1.msra.mxu0 %v1654
        %1722 = vmatprep.subr.mxu0 0.0
        %1723 = vmatpush1.msra.mxu0 %v1653
        %1724 = vmatprep.subr.mxu0 0.0
        %1725 = vmatpush1.msra.mxu0 %v1652
        %1726 = vmatprep.subr.mxu0 0.0
        %1727 = vmatpush1.msra.mxu0 %v1651
        %1728 = vmatprep.subr.mxu0 0.0
        %1729 = vmatpush1.msra.mxu0 %v1650
        %1730 = vmatprep.subr.mxu0 0.0
        %1731 = vmatpush2.msra.mxu0 %v1681
        %1732 = vmatprep.subr.mxu0 0.0
        %1733 = vmatpush2.msra.mxu0 %v1680
        %1734 = vmatprep.subr.mxu0 0.0
        %1735 = vmatpush2.msra.mxu0 %v1679
        %1736 = vmatprep.subr.mxu0 0.0
        %1737 = vmatpush2.msra.mxu0 %v1678
        %1738 = vmatprep.subr.mxu0 0.0
        %1739 = vmatpush2.msra.mxu0 %v1677
        %1740 = vmatprep.subr.mxu0 0.0
        %1741 = vmatpush2.msra.mxu0 %v1676
        %1742 = vmatprep.subr.mxu0 0.0
        %1743 = vmatpush2.msra.mxu0 %v1675
        %1744 = vmatprep.subr.mxu0 0.0
        %1745 = vmatpush2.msra.mxu0 %v1674
        %1746 = vmatprep.subr.mxu0 0.0
        %1747 = vmatpush2.msra.mxu0 %v1673
        %1748 = vmatprep.subr.mxu0 0.0
        %1749 = vmatpush2.msra.mxu0 %v1672
        %1750 = vmatprep.subr.mxu0 0.0
        %1751 = vmatpush2.msra.mxu0 %v1671
        %1752 = vmatprep.subr.mxu0 0.0
        %1753 = vmatpush2.msra.mxu0 %v1670
        %1754 = vmatprep.subr.mxu0 0.0
        %1755 = vmatpush2.msra.mxu0 %v1669
        %1756 = vmatprep.subr.mxu0 0.0
        %1757 = vmatpush2.msra.mxu0 %v1668
        %1758 = vmatprep.subr.mxu0 0.0
        %1759 = vmatpush2.msra.mxu0 %v1667
        %1760 = vmatprep.subr.mxu0 0.0
        %1761 = vmatpush2.msra.mxu0 %v1666
        %1762 = vmatprep.mubr.f32.mxu0 %v1534
        %1763 = vmatmul.mubr.f32.gmra.mxu0 %v1531
        %v1764 = vpop.f32.mrf.mxu0
        %v1765 = vadd.f32 0.0, %v1764
        %v1766 = vpop.f32.mrf.mxu0
        %1767 = vmatprep.mubr.f32.mxu0 %v1541
        %1768 = vmatmul.mubr.f32.gmra.mxu0 %v1539
        %v1769 = vpop.f32.mrf.mxu0
        %v1770 = vadd.f32 0.0, %v1769
        %v1771 = vpop.f32.mrf.mxu0
        %1772 = vmatprep.mubr.f32.mxu0 %v1547
        %1773 = vmatmul.mubr.f32.gmra.mxu0 %v1545
        %v1774 = vpop.f32.mrf.mxu0
        %v1775 = vadd.f32 0.0, %v1774
        %v1776 = vpop.f32.mrf.mxu0
        %1777 = vmatprep.mubr.f32.mxu0 %v1537
        %1778 = vmatmul.mubr.f32.gmra.mxu0 %v1534
        %v1779 = vpop.f32.mrf.mxu0
        %v1780 = vadd.f32 0.0, %v1779
        %v1781 = vpop.f32.mrf.mxu0
        %1782 = vmatprep.mubr.f32.mxu0 %v1543
        %1783 = vmatmul.mubr.f32.gmra.mxu0 %v1541
        %v1784 = vpop.f32.mrf.mxu0
        %v1785 = vadd.f32 0.0, %v1784
        %v1786 = vpop.f32.mrf.mxu0
        %1787 = vmatprep.mubr.f32.mxu0 %v1549
        %1788 = vmatmul.mubr.f32.gmra.mxu0 %v1547
        %v1789 = vpop.f32.mrf.mxu0
        %v1790 = vadd.f32 0.0, %v1789
        %v1791 = vpop.f32.mrf.mxu0
        %1792 = vmatprep.mubr.f32.mxu0 %v1552
        %1793 = vmatmul.mubr.f32.gmra.mxu0 %v1537
        %v1794 = vpop.f32.mrf.mxu0
        %v1795 = vadd.f32 0.0, %v1794
        %v1796 = vpop.f32.mrf.mxu0
        %1797 = vmatprep.mubr.f32.mxu0 %v1554
        %1798 = vmatmul.mubr.f32.gmra.mxu0 %v1543
        %v1799 = vpop.f32.mrf.mxu0
        %v1800 = vadd.f32 0.0, %v1799
        %v1801 = vpop.f32.mrf.mxu0
        %1802 = vmatprep.mubr.f32.mxu0 %v1556
        %1803 = vmatmul.mubr.f32.gmra.mxu0 %v1549
        %v1804 = vpop.f32.mrf.mxu0
        %v1805 = vadd.f32 0.0, %v1804
        %v1806 = vpop.f32.mrf.mxu0
        %1807 = vmatprep.mubr.f32.mxu0 %v1559
        %1808 = vmatmul.mubr.f32.gmra.mxu0 %v1552
        %v1809 = vpop.f32.mrf.mxu0
        %v1810 = vadd.f32 0.0, %v1809
        %v1811 = vpop.f32.mrf.mxu0
        %1812 = vmatprep.mubr.f32.mxu0 %v1561
        %1813 = vmatmul.mubr.f32.gmra.mxu0 %v1554
        %v1814 = vpop.f32.mrf.mxu0
        %v1815 = vadd.f32 0.0, %v1814
        %v1816 = vpop.f32.mrf.mxu0
        %1817 = vmatprep.mubr.f32.mxu0 %v1563
        %1818 = vmatmul.mubr.f32.gmra.mxu0 %v1556
        %v1819 = vpop.f32.mrf.mxu0
        %v1820 = vadd.f32 0.0, %v1819
        %v1821 = vpop.f32.mrf.mxu0
        %1822 = vmatprep.mubr.f32.mxu0 %v1566
        %1823 = vmatmul.mubr.f32.gmra.mxu0 %v1559
        %v1824 = vpop.f32.mrf.mxu0
        %v1825 = vadd.f32 0.0, %v1824
        %v1826 = vpop.f32.mrf.mxu0
        %1827 = vmatprep.mubr.f32.mxu0 %v1568
        %1828 = vmatmul.mubr.f32.gmra.mxu0 %v1561
        %v1829 = vpop.f32.mrf.mxu0
        %v1830 = vadd.f32 0.0, %v1829
        %v1831 = vpop.f32.mrf.mxu0
        %1832 = vmatprep.mubr.f32.mxu0 %v1570
        %1833 = vmatmul.mubr.f32.gmra.mxu0 %v1563
        %v1834 = vpop.f32.mrf.mxu0
        %v1835 = vadd.f32 0.0, %v1834
        %v1836 = vpop.f32.mrf.mxu0
        %1837 = vmatprep.mubr.f32.mxu0 %v1573
        %1838 = vmatmul.mubr.f32.gmra.mxu0 %v1566
        %v1839 = vpop.f32.mrf.mxu0
        %v1840 = vadd.f32 0.0, %v1839
        %v1841 = vpop.f32.mrf.mxu0
        %1842 = vmatprep.mubr.f32.mxu0 %v1575
        %1843 = vmatmul.mubr.f32.gmra.mxu0 %v1568
        %v1844 = vpop.f32.mrf.mxu0
        %v1845 = vadd.f32 0.0, %v1844
        %v1846 = vpop.f32.mrf.mxu0
        %1847 = vmatprep.mubr.f32.mxu0 %v1577
        %1848 = vmatmul.mubr.f32.gmra.mxu0 %v1570
        %v1849 = vpop.f32.mrf.mxu0
        %v1850 = vadd.f32 0.0, %v1849
        %v1851 = vpop.f32.mrf.mxu0
        %1852 = vmatprep.mubr.f32.mxu0 %v1580
        %1853 = vmatmul.mubr.f32.gmra.mxu0 %v1573
        %v1854 = vpop.f32.mrf.mxu0
        %v1855 = vadd.f32 0.0, %v1854
        %v1856 = vpop.f32.mrf.mxu0
        %1857 = vmatprep.mubr.f32.mxu0 %v1582
        %1858 = vmatmul.mubr.f32.gmra.mxu0 %v1575
        %v1859 = vpop.f32.mrf.mxu0
        %v1860 = vadd.f32 0.0, %v1859
        %v1861 = vpop.f32.mrf.mxu0
        %1862 = vmatprep.mubr.f32.mxu0 %v1584
        %1863 = vmatmul.mubr.f32.gmra.mxu0 %v1577
        %v1864 = vpop.f32.mrf.mxu0
        %v1865 = vadd.f32 0.0, %v1864
        %v1866 = vpop.f32.mrf.mxu0
        %1867 = vmatprep.mubr.f32.mxu0 %v1587
        %1868 = vmatmul.mubr.f32.gmra.mxu0 %v1580
        %v1869 = vpop.f32.mrf.mxu0
        %v1870 = vadd.f32 0.0, %v1869
        %v1871 = vpop.f32.mrf.mxu0
        %1872 = vmatprep.mubr.f32.mxu0 %v1589
        %1873 = vmatmul.mubr.f32.gmra.mxu0 %v1582
        %v1874 = vpop.f32.mrf.mxu0
        %v1875 = vadd.f32 0.0, %v1874
        %v1876 = vpop.f32.mrf.mxu0
        %1877 = vmatprep.mubr.f32.mxu0 %v1591
        %1878 = vmatmul.mubr.f32.gmra.mxu0 %v1584
        %v1879 = vpop.f32.mrf.mxu0
        %v1880 = vadd.f32 0.0, %v1879
        %v1881 = vpop.f32.mrf.mxu0
        %1882 = vmatprep.mubr.f32.mxu0 %v1594
        %1883 = vmatmul.mubr.f32.gmra.mxu0 %v1587
        %v1884 = vpop.f32.mrf.mxu0
        %v1885 = vadd.f32 0.0, %v1884
        %v1886 = vpop.f32.mrf.mxu0
        %1887 = vmatprep.mubr.f32.mxu0 %v1596
        %1888 = vmatmul.mubr.f32.gmra.mxu0 %v1589
        %v1889 = vpop.f32.mrf.mxu0
        %v1890 = vadd.f32 0.0, %v1889
        %v1891 = vpop.f32.mrf.mxu0
        %1892 = vmatprep.mubr.f32.mxu0 %v1598
        %1893 = vmatmul.mubr.f32.gmra.mxu0 %v1591
        %v1894 = vpop.f32.mrf.mxu0
        %v1895 = vadd.f32 0.0, %v1894
        %v1896 = vpop.f32.mrf.mxu0
        %1897 = vmatprep.mubr.f32.mxu0 %v1601
        %1898 = vmatmul.mubr.f32.gmra.mxu0 %v1594
        %v1899 = vpop.f32.mrf.mxu0
        %v1900 = vadd.f32 0.0, %v1899
        %v1901 = vpop.f32.mrf.mxu0
        %1902 = vmatprep.mubr.f32.mxu0 %v1603
        %1903 = vmatmul.mubr.f32.gmra.mxu0 %v1596
        %v1904 = vpop.f32.mrf.mxu0
        %v1905 = vadd.f32 0.0, %v1904
        %v1906 = vpop.f32.mrf.mxu0
        %1907 = vmatprep.mubr.f32.mxu0 %v1605
        %1908 = vmatmul.mubr.f32.gmra.mxu0 %v1598
        %v1909 = vpop.f32.mrf.mxu0
        %v1910 = vadd.f32 0.0, %v1909
        %v1911 = vpop.f32.mrf.mxu0
        %1912 = vdwg.mxu0
        %1913 = vmatprep.subr.mxu0 0.0
        %1914 = vmatpush1.msra.mxu0 %v1697
        %1915 = vmatprep.subr.mxu0 0.0
        %1916 = vmatpush1.msra.mxu0 %v1696
        %1917 = vmatprep.subr.mxu0 0.0
        %1918 = vmatpush1.msra.mxu0 %v1695
        %1919 = vmatprep.subr.mxu0 0.0
        %1920 = vmatpush1.msra.mxu0 %v1694
        %1921 = vmatprep.subr.mxu0 0.0
        %1922 = vmatpush1.msra.mxu0 %v1693
        %1923 = vmatprep.subr.mxu0 0.0
        %1924 = vmatpush1.msra.mxu0 %v1692
        %1925 = vmatprep.subr.mxu0 0.0
        %1926 = vmatpush1.msra.mxu0 %v1691
        %1927 = vmatprep.subr.mxu0 0.0
        %1928 = vmatpush1.msra.mxu0 %v1690
        %1929 = vmatprep.subr.mxu0 0.0
        %1930 = vmatpush1.msra.mxu0 %v1689
        %1931 = vmatprep.subr.mxu0 0.0
        %1932 = vmatpush1.msra.mxu0 %v1688
        %1933 = vmatprep.subr.mxu0 0.0
        %1934 = vmatpush1.msra.mxu0 %v1687
        %1935 = vmatprep.subr.mxu0 0.0
        %1936 = vmatpush1.msra.mxu0 %v1686
        %1937 = vmatprep.subr.mxu0 0.0
        %1938 = vmatpush1.msra.mxu0 %v1685
        %1939 = vmatprep.subr.mxu0 0.0
        %1940 = vmatpush1.msra.mxu0 %v1684
        %1941 = vmatprep.subr.mxu0 0.0
        %1942 = vmatpush1.msra.mxu0 %v1683
        %1943 = vmatprep.subr.mxu0 0.0
        %1944 = vmatpush1.msra.mxu0 %v1682
        %1945 = vmatprep.subr.mxu0 0.0
        %1946 = vmatpush2.msra.mxu0 0.0
        %1947 = vmatprep.subr.mxu0 0.0
        %1948 = vmatpush2.msra.mxu0 0.0
        %1949 = vmatprep.subr.mxu0 0.0
        %1950 = vmatpush2.msra.mxu0 0.0
        %1951 = vmatprep.subr.mxu0 0.0
        %1952 = vmatpush2.msra.mxu0 0.0
        %1953 = vmatprep.subr.mxu0 0.0
        %1954 = vmatpush2.msra.mxu0 0.0
        %1955 = vmatprep.subr.mxu0 0.0
        %1956 = vmatpush2.msra.mxu0 0.0
        %1957 = vmatprep.subr.mxu0 0.0
        %1958 = vmatpush2.msra.mxu0 0.0
        %1959 = vmatprep.subr.mxu0 0.0
        %1960 = vmatpush2.msra.mxu0 0.0
        %1961 = vmatprep.subr.mxu0 0.0
        %1962 = vmatpush2.msra.mxu0 0.0
        %1963 = vmatprep.subr.mxu0 0.0
        %1964 = vmatpush2.msra.mxu0 0.0
        %1965 = vmatprep.subr.mxu0 0.0
        %1966 = vmatpush2.msra.mxu0 0.0
        %1967 = vmatprep.subr.mxu0 0.0
        %1968 = vmatpush2.msra.mxu0 0.0
        %1969 = vmatprep.subr.mxu0 0.0
        %1970 = vmatpush2.msra.mxu0 0.0
        %1971 = vmatprep.subr.mxu0 0.0
        %1972 = vmatpush2.msra.mxu0 0.0
        %1973 = vmatprep.subr.mxu0 0.0
        %1974 = vmatpush2.msra.mxu0 0.0
        %1975 = vmatprep.subr.mxu0 0.0
        %1976 = vmatpush2.msra.mxu0 0.0
        %1977 = vmatprep.mubr.f32.mxu0 0.0
        %1978 = vmatmul.mubr.f32.gmra.mxu0 %v1537
        %v1979 = vpop.f32.mrf.mxu0
        %v1980 = vadd.f32 %v1765, %v1979
        %v1981 = vpop.f32.mrf.mxu0
        %1982 = vmatprep.mubr.f32.mxu0 0.0
        %1983 = vmatmul.mubr.f32.gmra.mxu0 %v1543
        %v1984 = vpop.f32.mrf.mxu0
        %v1985 = vadd.f32 %v1770, %v1984
        %v1986 = vpop.f32.mrf.mxu0
        %1987 = vmatprep.mubr.f32.mxu0 0.0
        %1988 = vmatmul.mubr.f32.gmra.mxu0 %v1549
        %v1989 = vpop.f32.mrf.mxu0
        %v1990 = vadd.f32 %v1775, %v1989
        %v1991 = vpop.f32.mrf.mxu0
        %1992 = vmatprep.mubr.f32.mxu0 0.0
        %1993 = vmatmul.mubr.f32.gmra.mxu0 %v1552
        %v1994 = vpop.f32.mrf.mxu0
        %v1995 = vadd.f32 %v1780, %v1994
        %v1996 = vpop.f32.mrf.mxu0
        %1997 = vmatprep.mubr.f32.mxu0 0.0
        %1998 = vmatmul.mubr.f32.gmra.mxu0 %v1554
        %v1999 = vpop.f32.mrf.mxu0
        %v2000 = vadd.f32 %v1785, %v1999
        %v2001 = vpop.f32.mrf.mxu0
        %2002 = vmatprep.mubr.f32.mxu0 0.0
        %2003 = vmatmul.mubr.f32.gmra.mxu0 %v1556
        %v2004 = vpop.f32.mrf.mxu0
        %v2005 = vadd.f32 %v1790, %v2004
        %v2006 = vpop.f32.mrf.mxu0
        %2007 = vmatprep.mubr.f32.mxu0 0.0
        %2008 = vmatmul.mubr.f32.gmra.mxu0 %v1559
        %v2009 = vpop.f32.mrf.mxu0
        %v2010 = vadd.f32 %v1795, %v2009
        %v2011 = vpop.f32.mrf.mxu0
        %2012 = vmatprep.mubr.f32.mxu0 0.0
        %2013 = vmatmul.mubr.f32.gmra.mxu0 %v1561
        %v2014 = vpop.f32.mrf.mxu0
        %v2015 = vadd.f32 %v1800, %v2014
        %v2016 = vpop.f32.mrf.mxu0
        %2017 = vmatprep.mubr.f32.mxu0 0.0
        %2018 = vmatmul.mubr.f32.gmra.mxu0 %v1563
        %v2019 = vpop.f32.mrf.mxu0
        %v2020 = vadd.f32 %v1805, %v2019
        %v2021 = vpop.f32.mrf.mxu0
        %2022 = vmatprep.mubr.f32.mxu0 0.0
        %2023 = vmatmul.mubr.f32.gmra.mxu0 %v1566
        %v2024 = vpop.f32.mrf.mxu0
        %v2025 = vadd.f32 %v1810, %v2024
        %v2026 = vpop.f32.mrf.mxu0
        %2027 = vmatprep.mubr.f32.mxu0 0.0
        %2028 = vmatmul.mubr.f32.gmra.mxu0 %v1568
        %v2029 = vpop.f32.mrf.mxu0
        %v2030 = vadd.f32 %v1815, %v2029
        %v2031 = vpop.f32.mrf.mxu0
        %2032 = vmatprep.mubr.f32.mxu0 0.0
        %2033 = vmatmul.mubr.f32.gmra.mxu0 %v1570
        %v2034 = vpop.f32.mrf.mxu0
        %v2035 = vadd.f32 %v1820, %v2034
        %v2036 = vpop.f32.mrf.mxu0
        %2037 = vmatprep.mubr.f32.mxu0 0.0
        %2038 = vmatmul.mubr.f32.gmra.mxu0 %v1573
        %v2039 = vpop.f32.mrf.mxu0
        %v2040 = vadd.f32 %v1825, %v2039
        %v2041 = vpop.f32.mrf.mxu0
        %2042 = vmatprep.mubr.f32.mxu0 0.0
        %2043 = vmatmul.mubr.f32.gmra.mxu0 %v1575
        %v2044 = vpop.f32.mrf.mxu0
        %v2045 = vadd.f32 %v1830, %v2044
        %v2046 = vpop.f32.mrf.mxu0
        %2047 = vmatprep.mubr.f32.mxu0 0.0
        %2048 = vmatmul.mubr.f32.gmra.mxu0 %v1577
        %v2049 = vpop.f32.mrf.mxu0
        %v2050 = vadd.f32 %v1835, %v2049
        %v2051 = vpop.f32.mrf.mxu0
        %2052 = vmatprep.mubr.f32.mxu0 0.0
        %2053 = vmatmul.mubr.f32.gmra.mxu0 %v1580
        %v2054 = vpop.f32.mrf.mxu0
        %v2055 = vadd.f32 %v1840, %v2054
        %v2056 = vpop.f32.mrf.mxu0
        %2057 = vmatprep.mubr.f32.mxu0 0.0
        %2058 = vmatmul.mubr.f32.gmra.mxu0 %v1582
        %v2059 = vpop.f32.mrf.mxu0
        %v2060 = vadd.f32 %v1845, %v2059
        %v2061 = vpop.f32.mrf.mxu0
        %2062 = vmatprep.mubr.f32.mxu0 0.0
        %2063 = vmatmul.mubr.f32.gmra.mxu0 %v1584
        %v2064 = vpop.f32.mrf.mxu0
        %v2065 = vadd.f32 %v1850, %v2064
        %v2066 = vpop.f32.mrf.mxu0
        %2067 = vmatprep.mubr.f32.mxu0 0.0
        %2068 = vmatmul.mubr.f32.gmra.mxu0 %v1587
        %v2069 = vpop.f32.mrf.mxu0
        %v2070 = vadd.f32 %v1855, %v2069
        %v2071 = vpop.f32.mrf.mxu0
        %2072 = vmatprep.mubr.f32.mxu0 0.0
        %2073 = vmatmul.mubr.f32.gmra.mxu0 %v1589
        %v2074 = vpop.f32.mrf.mxu0
        %v2075 = vadd.f32 %v1860, %v2074
        %v2076 = vpop.f32.mrf.mxu0
        %2077 = vmatprep.mubr.f32.mxu0 0.0
        %2078 = vmatmul.mubr.f32.gmra.mxu0 %v1591
        %v2079 = vpop.f32.mrf.mxu0
        %v2080 = vadd.f32 %v1865, %v2079
        %v2081 = vpop.f32.mrf.mxu0
        %2082 = vmatprep.mubr.f32.mxu0 0.0
        %2083 = vmatmul.mubr.f32.gmra.mxu0 %v1594
        %v2084 = vpop.f32.mrf.mxu0
        %v2085 = vadd.f32 %v1870, %v2084
        %v2086 = vpop.f32.mrf.mxu0
        %2087 = vmatprep.mubr.f32.mxu0 0.0
        %2088 = vmatmul.mubr.f32.gmra.mxu0 %v1596
        %v2089 = vpop.f32.mrf.mxu0
        %v2090 = vadd.f32 %v1875, %v2089
        %v2091 = vpop.f32.mrf.mxu0
        %2092 = vmatprep.mubr.f32.mxu0 0.0
        %2093 = vmatmul.mubr.f32.gmra.mxu0 %v1598
        %v2094 = vpop.f32.mrf.mxu0
        %v2095 = vadd.f32 %v1880, %v2094
        %v2096 = vpop.f32.mrf.mxu0
        %2097 = vmatprep.mubr.f32.mxu0 0.0
        %2098 = vmatmul.mubr.f32.gmra.mxu0 %v1601
        %v2099 = vpop.f32.mrf.mxu0
        %v2100 = vadd.f32 %v1885, %v2099
        %v2101 = vpop.f32.mrf.mxu0
        %2102 = vmatprep.mubr.f32.mxu0 0.0
        %2103 = vmatmul.mubr.f32.gmra.mxu0 %v1603
        %v2104 = vpop.f32.mrf.mxu0
        %v2105 = vadd.f32 %v1890, %v2104
        %v2106 = vpop.f32.mrf.mxu0
        %2107 = vmatprep.mubr.f32.mxu0 0.0
        %2108 = vmatmul.mubr.f32.gmra.mxu0 %v1605
        %v2109 = vpop.f32.mrf.mxu0
        %v2110 = vadd.f32 %v1895, %v2109
        %v2111 = vpop.f32.mrf.mxu0
        %2112 = vmatprep.mubr.f32.mxu0 0.0
        %2113 = vmatmul.mubr.f32.gmra.mxu0 %v1608
        %v2114 = vpop.f32.mrf.mxu0
        %v2115 = vadd.f32 %v1900, %v2114
        %v2116 = vpop.f32.mrf.mxu0
        %2117 = vmatprep.mubr.f32.mxu0 0.0
        %2118 = vmatmul.mubr.f32.gmra.mxu0 %v1610
        %v2119 = vpop.f32.mrf.mxu0
        %v2120 = vadd.f32 %v1905, %v2119
        %v2121 = vpop.f32.mrf.mxu0
        %2122 = vmatprep.mubr.f32.mxu0 0.0
        %2123 = vmatmul.mubr.f32.gmra.mxu0 %v1612
        %v2124 = vpop.f32.mrf.mxu0
        %v2125 = vadd.f32 %v1910, %v2124
        %v2126 = vpop.f32.mrf.mxu0
        %2127 = vdwg.mxu0
        %v2128 = vadd.f32 %v1380, %v1980
        %v2129 = vadd.f32 %v1385, %v1985
        %v2130 = vadd.f32 %v1390, %v1990
        %v2131 = vadd.f32 %v1395, %v1995
        %v2132 = vadd.f32 %v1400, %v2000
        %v2133 = vadd.f32 %v1405, %v2005
        %v2134 = vadd.f32 %v1410, %v2010
        %v2135 = vadd.f32 %v1415, %v2015
        %v2136 = vadd.f32 %v1420, %v2020
        %v2137 = vadd.f32 %v1425, %v2025
        %v2138 = vadd.f32 %v1430, %v2030
        %v2139 = vadd.f32 %v1435, %v2035
        %v2140 = vadd.f32 %v1440, %v2040
        %v2141 = vadd.f32 %v1445, %v2045
        %v2142 = vadd.f32 %v1450, %v2050
        %v2143 = vadd.f32 %v1455, %v2055
        %v2144 = vadd.f32 %v1460, %v2060
        %v2145 = vadd.f32 %v1465, %v2065
        %v2146 = vadd.f32 %v1470, %v2070
        %v2147 = vadd.f32 %v1475, %v2075
        %v2148 = vadd.f32 %v1480, %v2080
        %v2149 = vadd.f32 %v1485, %v2085
        %v2150 = vadd.f32 %v1490, %v2090
        %v2151 = vadd.f32 %v1495, %v2095
        %v2152 = vadd.f32 %v1500, %v2100
        %v2153 = vadd.f32 %v1505, %v2105
        %v2154 = vadd.f32 %v1510, %v2110
        %v2155 = vadd.f32 %v1515, %v2115
        %v2156 = vadd.f32 %v1520, %v2120
        %v2157 = vadd.f32 %v1525, %v2125
        %v2158 = vld [vmem:[%s4] sm:$0x1]
        %v2160 = vlaneseq
        %v2161 = vshrl.u32 %v2160, 7
        %v2162 = vsub.s32 0, %v2161
        %v2163 = vrot.slane %v2158, %v2162
        %v2165 = vadd.f32 %v2128, %v2163
        %v2166 = vadd.f32 %v2129, %v2163
        %v2167 = vadd.f32 %v2130, %v2163
        %v2168 = vadd.f32 %v2131, %v2163
        %v2169 = vadd.f32 %v2132, %v2163
        %v2170 = vadd.f32 %v2133, %v2163
        %v2171 = vadd.f32 %v2134, %v2163
        %v2172 = vadd.f32 %v2135, %v2163
        %v2173 = vadd.f32 %v2136, %v2163
        %v2174 = vadd.f32 %v2137, %v2163
        %v2175 = vadd.f32 %v2138, %v2163
        %v2176 = vadd.f32 %v2139, %v2163
        %v2177 = vadd.f32 %v2140, %v2163
        %v2178 = vadd.f32 %v2141, %v2163
        %v2179 = vadd.f32 %v2142, %v2163
        %v2180 = vadd.f32 %v2143, %v2163
        %v2181 = vadd.f32 %v2144, %v2163
        %v2182 = vadd.f32 %v2145, %v2163
        %v2183 = vadd.f32 %v2146, %v2163
        %v2184 = vadd.f32 %v2147, %v2163
        %v2185 = vadd.f32 %v2148, %v2163
        %v2186 = vadd.f32 %v2149, %v2163
        %v2187 = vadd.f32 %v2150, %v2163
        %v2188 = vadd.f32 %v2151, %v2163
        %v2189 = vadd.f32 %v2152, %v2163
        %v2190 = vadd.f32 %v2153, %v2163
        %v2191 = vadd.f32 %v2154, %v2163
        %v2192 = vadd.f32 %v2155, %v2163
        %v2193 = vadd.f32 %v2156, %v2163
        %v2194 = vadd.f32 %v2157, %v2163
        %v2195 = vmax.f32 %v2165, 0.0
        %v2196 = vmax.f32 %v2166, 0.0
        %v2197 = vmax.f32 %v2167, 0.0
        %v2198 = vmax.f32 %v2168, 0.0
        %v2199 = vmax.f32 %v2169, 0.0
        %v2200 = vmax.f32 %v2170, 0.0
        %v2201 = vmax.f32 %v2171, 0.0
        %v2202 = vmax.f32 %v2172, 0.0
        %v2203 = vmax.f32 %v2173, 0.0
        %v2204 = vmax.f32 %v2174, 0.0
        %v2205 = vmax.f32 %v2175, 0.0
        %v2206 = vmax.f32 %v2176, 0.0
        %v2207 = vmax.f32 %v2177, 0.0
        %v2208 = vmax.f32 %v2178, 0.0
        %v2209 = vmax.f32 %v2179, 0.0
        %v2210 = vmax.f32 %v2180, 0.0
        %v2211 = vmax.f32 %v2181, 0.0
        %v2212 = vmax.f32 %v2182, 0.0
        %v2213 = vmax.f32 %v2183, 0.0
        %v2214 = vmax.f32 %v2184, 0.0
        %v2215 = vmax.f32 %v2185, 0.0
        %v2216 = vmax.f32 %v2186, 0.0
        %v2217 = vmax.f32 %v2187, 0.0
        %v2218 = vmax.f32 %v2188, 0.0
        %v2219 = vmax.f32 %v2189, 0.0
        %v2220 = vmax.f32 %v2190, 0.0
        %v2221 = vmax.f32 %v2191, 0.0
        %v2222 = vmax.f32 %v2192, 0.0
        %v2223 = vmax.f32 %v2193, 0.0
        %v2224 = vmax.f32 %v2194, 0.0
        %s2225 = smul.u32 %s26, 8
        %v2226 = vstv %s2225
        %v2227 = vadd.s32 %v2226, 1
        %v2228 = vadd.s32 %v2226, 2
        %v2229 = vadd.s32 %v2226, 3
        %v2230 = vadd.s32 %v2226, 4
        %v2231 = vadd.s32 %v2226, 5
        %v2232 = vadd.s32 %v2226, 6
        %v2233 = vadd.s32 %v2226, 7
        %v2234 = vadd.s32 %v2226, 8
        %v2235 = vadd.s32 %v2226, 9
        %v2236 = vlaneseq
        %v2237 = vshrl.u32 %v2236, 7
        %v2238 = vadd.s32 %v2237, 8
        %v2239 = vadd.s32 %v2237, 16
        %vm2240 = vcmp.ge.s32.totalorder %v2226, 1
        %vm2241 = vcmp.ge.s32.totalorder %v2227, 1
        %vm2242 = vcmp.ge.s32.totalorder %v2228, 1
        %vm2243 = vcmp.ge.s32.totalorder %v2229, 1
        %vm2244 = vcmp.ge.s32.totalorder %v2230, 1
        %vm2245 = vcmp.ge.s32.totalorder %v2231, 1
        %vm2246 = vcmp.ge.s32.totalorder %v2232, 1
        %vm2247 = vcmp.ge.s32.totalorder %v2233, 1
        %vm2248 = vcmp.ge.s32.totalorder %v2234, 1
        %vm2249 = vcmp.ge.s32.totalorder %v2235, 1
        %vm2250 = vcmp.le.s32.totalorder %v2226, 16
        %vm2251 = vcmp.le.s32.totalorder %v2227, 16
        %vm2252 = vcmp.le.s32.totalorder %v2228, 16
        %vm2253 = vcmp.le.s32.totalorder %v2229, 16
        %vm2254 = vcmp.le.s32.totalorder %v2230, 16
        %vm2255 = vcmp.le.s32.totalorder %v2231, 16
        %vm2256 = vcmp.le.s32.totalorder %v2232, 16
        %vm2257 = vcmp.le.s32.totalorder %v2233, 16
        %vm2258 = vcmp.le.s32.totalorder %v2234, 16
        %vm2259 = vcmp.le.s32.totalorder %v2235, 16
        %vm2260 = vmand %vm2240, %vm2250
        %vm2261 = vmand %vm2241, %vm2251
        %vm2262 = vmand %vm2242, %vm2252
        %vm2263 = vmand %vm2243, %vm2253
        %vm2264 = vmand %vm2244, %vm2254
        %vm2265 = vmand %vm2245, %vm2255
        %vm2266 = vmand %vm2246, %vm2256
        %vm2267 = vmand %vm2247, %vm2257
        %vm2268 = vmand %vm2248, %vm2258
        %vm2269 = vmand %vm2249, %vm2259
        %vm2270 = vcmp.ge.s32.totalorder %v2237, 1
        %vm2271 = vcmp.ge.s32.totalorder %v2238, 1
        %vm2272 = vcmp.ge.s32.totalorder %v2239, 1
        %vm2273 = vmand %vm2260, %vm2270
        %vm2274 = vmand %vm2260, %vm2271
        %vm2275 = vmand %vm2260, %vm2272
        %vm2276 = vmand %vm2261, %vm2270
        %vm2277 = vmand %vm2261, %vm2271
        %vm2278 = vmand %vm2261, %vm2272
        %vm2279 = vmand %vm2262, %vm2270
        %vm2280 = vmand %vm2262, %vm2271
        %vm2281 = vmand %vm2262, %vm2272
        %vm2282 = vmand %vm2263, %vm2270
        %vm2283 = vmand %vm2263, %vm2271
        %vm2284 = vmand %vm2263, %vm2272
        %vm2285 = vmand %vm2264, %vm2270
        %vm2286 = vmand %vm2264, %vm2271
        %vm2287 = vmand %vm2264, %vm2272
        %vm2288 = vmand %vm2265, %vm2270
        %vm2289 = vmand %vm2265, %vm2271
        %vm2290 = vmand %vm2265, %vm2272
        %vm2291 = vmand %vm2266, %vm2270
        %vm2292 = vmand %vm2266, %vm2271
        %vm2293 = vmand %vm2266, %vm2272
        %vm2294 = vmand %vm2267, %vm2270
        %vm2295 = vmand %vm2267, %vm2271
        %vm2296 = vmand %vm2267, %vm2272
        %vm2297 = vmand %vm2268, %vm2270
        %vm2298 = vmand %vm2268, %vm2271
        %vm2299 = vmand %vm2268, %vm2272
        %vm2300 = vmand %vm2269, %vm2270
        %vm2301 = vmand %vm2269, %vm2271
        %vm2302 = vmand %vm2269, %vm2272
        %vm2303 = vcmp.le.s32.totalorder %v2237, 16
        %vm2304 = vcmp.le.s32.totalorder %v2238, 16
        %vm2305 = vcmp.le.s32.totalorder %v2239, 16
        %vm2306 = vmand %vm2273, %vm2303
        %vm2307 = vmand %vm2274, %vm2304
        %vm2308 = vmand %vm2275, %vm2305
        %vm2309 = vmand %vm2276, %vm2303
        %vm2310 = vmand %vm2277, %vm2304
        %vm2311 = vmand %vm2278, %vm2305
        %vm2312 = vmand %vm2279, %vm2303
        %vm2313 = vmand %vm2280, %vm2304
        %vm2314 = vmand %vm2281, %vm2305
        %vm2315 = vmand %vm2282, %vm2303
        %vm2316 = vmand %vm2283, %vm2304
        %vm2317 = vmand %vm2284, %vm2305
        %vm2318 = vmand %vm2285, %vm2303
        %vm2319 = vmand %vm2286, %vm2304
        %vm2320 = vmand %vm2287, %vm2305
        %vm2321 = vmand %vm2288, %vm2303
        %vm2322 = vmand %vm2289, %vm2304
        %vm2323 = vmand %vm2290, %vm2305
        %vm2324 = vmand %vm2291, %vm2303
        %vm2325 = vmand %vm2292, %vm2304
        %vm2326 = vmand %vm2293, %vm2305
        %vm2327 = vmand %vm2294, %vm2303
        %vm2328 = vmand %vm2295, %vm2304
        %vm2329 = vmand %vm2296, %vm2305
        %vm2330 = vmand %vm2297, %vm2303
        %vm2331 = vmand %vm2298, %vm2304
        %vm2332 = vmand %vm2299, %vm2305
        %vm2333 = vmand %vm2300, %vm2303
        %vm2334 = vmand %vm2301, %vm2304
        %vm2335 = vmand %vm2302, %vm2305
        %v2336 = vsel %vm2306, 1, 0
        %v2337 = vsel %vm2307, 1, 0
        %v2338 = vsel %vm2308, 1, 0
        %v2339 = vsel %vm2309, 1, 0
        %v2340 = vsel %vm2310, 1, 0
        %v2341 = vsel %vm2311, 1, 0
        %v2342 = vsel %vm2312, 1, 0
        %v2343 = vsel %vm2313, 1, 0
        %v2344 = vsel %vm2314, 1, 0
        %v2345 = vsel %vm2315, 1, 0
        %v2346 = vsel %vm2316, 1, 0
        %v2347 = vsel %vm2317, 1, 0
        %v2348 = vsel %vm2318, 1, 0
        %v2349 = vsel %vm2319, 1, 0
        %v2350 = vsel %vm2320, 1, 0
        %v2351 = vsel %vm2321, 1, 0
        %v2352 = vsel %vm2322, 1, 0
        %v2353 = vsel %vm2323, 1, 0
        %v2354 = vsel %vm2324, 1, 0
        %v2355 = vsel %vm2325, 1, 0
        %v2356 = vsel %vm2326, 1, 0
        %v2357 = vsel %vm2327, 1, 0
        %v2358 = vsel %vm2328, 1, 0
        %v2359 = vsel %vm2329, 1, 0
        %v2360 = vsel %vm2330, 1, 0
        %v2361 = vsel %vm2331, 1, 0
        %v2362 = vsel %vm2332, 1, 0
        %v2363 = vsel %vm2333, 1, 0
        %v2364 = vsel %vm2334, 1, 0
        %v2365 = vsel %vm2335, 1, 0
        %v2366 = vcvt.s32.f32 %v2336
        %v2367 = vcvt.s32.f32 %v2337
        %v2368 = vcvt.s32.f32 %v2338
        %v2369 = vcvt.s32.f32 %v2339
        %v2370 = vcvt.s32.f32 %v2340
        %v2371 = vcvt.s32.f32 %v2341
        %v2372 = vcvt.s32.f32 %v2342
        %v2373 = vcvt.s32.f32 %v2343
        %v2374 = vcvt.s32.f32 %v2344
        %v2375 = vcvt.s32.f32 %v2345
        %v2376 = vcvt.s32.f32 %v2346
        %v2377 = vcvt.s32.f32 %v2347
        %v2378 = vcvt.s32.f32 %v2348
        %v2379 = vcvt.s32.f32 %v2349
        %v2380 = vcvt.s32.f32 %v2350
        %v2381 = vcvt.s32.f32 %v2351
        %v2382 = vcvt.s32.f32 %v2352
        %v2383 = vcvt.s32.f32 %v2353
        %v2384 = vcvt.s32.f32 %v2354
        %v2385 = vcvt.s32.f32 %v2355
        %v2386 = vcvt.s32.f32 %v2356
        %v2387 = vcvt.s32.f32 %v2357
        %v2388 = vcvt.s32.f32 %v2358
        %v2389 = vcvt.s32.f32 %v2359
        %v2390 = vcvt.s32.f32 %v2360
        %v2391 = vcvt.s32.f32 %v2361
        %v2392 = vcvt.s32.f32 %v2362
        %v2393 = vcvt.s32.f32 %v2363
        %v2394 = vcvt.s32.f32 %v2364
        %v2395 = vcvt.s32.f32 %v2365
        %v2396 = vmul.f32 %v2195, %v2366
        %v2397 = vmul.f32 %v2196, %v2367
        %v2398 = vmul.f32 %v2197, %v2368
        %v2399 = vmul.f32 %v2198, %v2369
        %v2400 = vmul.f32 %v2199, %v2370
        %v2401 = vmul.f32 %v2200, %v2371
        %v2402 = vmul.f32 %v2201, %v2372
        %v2403 = vmul.f32 %v2202, %v2373
        %v2404 = vmul.f32 %v2203, %v2374
        %v2405 = vmul.f32 %v2204, %v2375
        %v2406 = vmul.f32 %v2205, %v2376
        %v2407 = vmul.f32 %v2206, %v2377
        %v2408 = vmul.f32 %v2207, %v2378
        %v2409 = vmul.f32 %v2208, %v2379
        %v2410 = vmul.f32 %v2209, %v2380
        %v2411 = vmul.f32 %v2210, %v2381
        %v2412 = vmul.f32 %v2211, %v2382
        %v2413 = vmul.f32 %v2212, %v2383
        %v2414 = vmul.f32 %v2213, %v2384
        %v2415 = vmul.f32 %v2214, %v2385
        %v2416 = vmul.f32 %v2215, %v2386
        %v2417 = vmul.f32 %v2216, %v2387
        %v2418 = vmul.f32 %v2217, %v2388
        %v2419 = vmul.f32 %v2218, %v2389
        %v2420 = vmul.f32 %v2219, %v2390
        %v2421 = vmul.f32 %v2220, %v2391
        %v2422 = vmul.f32 %v2221, %v2392
        %v2423 = vmul.f32 %v2222, %v2393
        %v2424 = vmul.f32 %v2223, %v2394
        %v2425 = vmul.f32 %v2224, %v2395
        %v2426 = vld [vmem:[%s5] sm:$0xff]
        %v2427 = vld [vmem:[%s5 + $0x8] sm:$0xff]
        %v2428 = vld [vmem:[%s5 + $0x10] sm:$0xff]
        %v2429 = vld [vmem:[%s5 + $0x18] sm:$0xff]
        %v2430 = vld [vmem:[%s5 + $0x20] sm:$0xff]
        %v2431 = vld [vmem:[%s5 + $0x28] sm:$0xff]
        %v2432 = vld [vmem:[%s5 + $0x30] sm:$0xff]
        %v2433 = vld [vmem:[%s5 + $0x38] sm:$0xff]
        %v2434 = vld [vmem:[%s5 + $0x40] sm:$0xff]
        %v2435 = vld [vmem:[%s5 + $0x48] sm:$0xff]
        %v2436 = vld [vmem:[%s5 + $0x50] sm:$0xff]
        %v2437 = vld [vmem:[%s5 + $0x58] sm:$0xff]
        %v2438 = vld [vmem:[%s5 + $0x60] sm:$0xff]
        %v2439 = vld [vmem:[%s5 + $0x68] sm:$0xff]
        %v2440 = vld [vmem:[%s5 + $0x70] sm:$0xff]
        %v2441 = vld [vmem:[%s5 + $0x78] sm:$0xff]
        %v2442 = vld [vmem:[%s5 + $0x80] sm:$0xff]
        %v2443 = vld [vmem:[%s5 + $0x88] sm:$0xff]
        %v2444 = vld [vmem:[%s5 + $0x90] sm:$0xff]
        %v2445 = vld [vmem:[%s5 + $0x98] sm:$0xff]
        %v2446 = vld [vmem:[%s5 + $0xa0] sm:$0xff]
        %v2447 = vld [vmem:[%s5 + $0xa8] sm:$0xff]
        %v2448 = vld [vmem:[%s5 + $0xb0] sm:$0xff]
        %v2449 = vld [vmem:[%s5 + $0xb8] sm:$0xff]
        %v2450 = vld [vmem:[%s5 + $0xc0] sm:$0xff]
        %v2451 = vld [vmem:[%s5 + $0xc8] sm:$0xff]
        %v2452 = vld [vmem:[%s5 + $0xd0] sm:$0xff]
        %v2453 = vld [vmem:[%s5 + $0xd8] sm:$0xff]
        %v2454 = vld [vmem:[%s5 + $0xe0] sm:$0xff]
        %v2455 = vld [vmem:[%s5 + $0xe8] sm:$0xff]
        %v2456 = vld [vmem:[%s5 + $0xf0] sm:$0xff]
        %v2457 = vld [vmem:[%s5 + $0xf8] sm:$0xff]
        %v2458 = vld [vmem:[%s5 + $0x100] sm:$0xff]
        %v2459 = vld [vmem:[%s5 + $0x108] sm:$0xff]
        %v2460 = vld [vmem:[%s5 + $0x110] sm:$0xff]
        %v2461 = vld [vmem:[%s5 + $0x118] sm:$0xff]
        %v2462 = vld [vmem:[%s5 + $0x120] sm:$0xff]
        %v2463 = vld [vmem:[%s5 + $0x128] sm:$0xff]
        %v2464 = vld [vmem:[%s5 + $0x130] sm:$0xff]
        %v2465 = vld [vmem:[%s5 + $0x138] sm:$0xff]
        %v2466 = vld [vmem:[%s5 + $0x140] sm:$0xff]
        %v2467 = vld [vmem:[%s5 + $0x148] sm:$0xff]
        %v2468 = vld [vmem:[%s5 + $0x150] sm:$0xff]
        %v2469 = vld [vmem:[%s5 + $0x158] sm:$0xff]
        %v2470 = vld [vmem:[%s5 + $0x160] sm:$0xff]
        %v2471 = vld [vmem:[%s5 + $0x168] sm:$0xff]
        %v2472 = vld [vmem:[%s5 + $0x170] sm:$0xff]
        %v2473 = vld [vmem:[%s5 + $0x178] sm:$0xff]
        %v2504 = vrot.slane %v2396, 1
        %v2505 = vrot.slane %v2397, 1
        %v2506 = vsel %vm498, %v2504, %v2505
        %v2507 = vrot.slane %v2399, 1
        %v2508 = vrot.slane %v2400, 1
        %v2509 = vsel %vm498, %v2507, %v2508
        %v2510 = vrot.slane %v2402, 1
        %v2511 = vrot.slane %v2403, 1
        %v2512 = vsel %vm498, %v2510, %v2511
        %v2513 = vrot.slane %v2398, 1
        %v2514 = vsel %vm498, %v2505, %v2513
        %v2515 = vrot.slane %v2401, 1
        %v2516 = vsel %vm498, %v2508, %v2515
        %v2517 = vrot.slane %v2404, 1
        %v2518 = vsel %vm498, %v2511, %v2517
        %v2519 = vrot.slane %v2405, 1
        %v2520 = vrot.slane %v2406, 1
        %v2521 = vsel %vm498, %v2519, %v2520
        %v2522 = vrot.slane %v2407, 1
        %v2523 = vsel %vm498, %v2520, %v2522
        %v2524 = vrot.slane %v2408, 1
        %v2525 = vrot.slane %v2409, 1
        %v2526 = vsel %vm498, %v2524, %v2525
        %v2527 = vrot.slane %v2410, 1
        %v2528 = vsel %vm498, %v2525, %v2527
        %v2529 = vrot.slane %v2411, 1
        %v2530 = vrot.slane %v2412, 1
        %v2531 = vsel %vm498, %v2529, %v2530
        %v2532 = vrot.slane %v2413, 1
        %v2533 = vsel %vm498, %v2530, %v2532
        %v2534 = vrot.slane %v2414, 1
        %v2535 = vrot.slane %v2415, 1
        %v2536 = vsel %vm498, %v2534, %v2535
        %v2537 = vrot.slane %v2416, 1
        %v2538 = vsel %vm498, %v2535, %v2537
        %v2539 = vrot.slane %v2417, 1
        %v2540 = vrot.slane %v2418, 1
        %v2541 = vsel %vm498, %v2539, %v2540
        %v2542 = vrot.slane %v2419, 1
        %v2543 = vsel %vm498, %v2540, %v2542
        %v2544 = vrot.slane %v2420, 1
        %v2545 = vrot.slane %v2421, 1
        %v2546 = vsel %vm498, %v2544, %v2545
        %v2547 = vrot.slane %v2422, 1
        %v2548 = vsel %vm498, %v2545, %v2547
        %v2549 = vrot.slane %v2423, 1
        %v2550 = vrot.slane %v2424, 1
        %v2551 = vsel %vm498, %v2549, %v2550
        %v2552 = vrot.slane %v2425, 1
        %v2553 = vsel %vm498, %v2550, %v2552
        %s2574 = scalar_lea.vmem %s5, 384
        %v2575 = vld [vmem:[%s2574] sm:$0xff]
        %v2576 = vld [vmem:[%s2574 + $0x8] sm:$0xff]
        %v2577 = vld [vmem:[%s2574 + $0x10] sm:$0xff]
        %v2578 = vld [vmem:[%s2574 + $0x18] sm:$0xff]
        %v2579 = vld [vmem:[%s2574 + $0x20] sm:$0xff]
        %v2580 = vld [vmem:[%s2574 + $0x28] sm:$0xff]
        %v2581 = vld [vmem:[%s2574 + $0x30] sm:$0xff]
        %v2582 = vld [vmem:[%s2574 + $0x38] sm:$0xff]
        %v2583 = vld [vmem:[%s2574 + $0x40] sm:$0xff]
        %v2584 = vld [vmem:[%s2574 + $0x48] sm:$0xff]
        %v2585 = vld [vmem:[%s2574 + $0x50] sm:$0xff]
        %v2586 = vld [vmem:[%s2574 + $0x58] sm:$0xff]
        %v2587 = vld [vmem:[%s2574 + $0x60] sm:$0xff]
        %v2588 = vld [vmem:[%s2574 + $0x68] sm:$0xff]
        %v2589 = vld [vmem:[%s2574 + $0x70] sm:$0xff]
        %v2590 = vld [vmem:[%s2574 + $0x78] sm:$0xff]
        %v2591 = vld [vmem:[%s2574 + $0x80] sm:$0xff]
        %v2592 = vld [vmem:[%s2574 + $0x88] sm:$0xff]
        %v2593 = vld [vmem:[%s2574 + $0x90] sm:$0xff]
        %v2594 = vld [vmem:[%s2574 + $0x98] sm:$0xff]
        %v2595 = vld [vmem:[%s2574 + $0xa0] sm:$0xff]
        %v2596 = vld [vmem:[%s2574 + $0xa8] sm:$0xff]
        %v2597 = vld [vmem:[%s2574 + $0xb0] sm:$0xff]
        %v2598 = vld [vmem:[%s2574 + $0xb8] sm:$0xff]
        %v2599 = vld [vmem:[%s2574 + $0xc0] sm:$0xff]
        %v2600 = vld [vmem:[%s2574 + $0xc8] sm:$0xff]
        %v2601 = vld [vmem:[%s2574 + $0xd0] sm:$0xff]
        %v2602 = vld [vmem:[%s2574 + $0xd8] sm:$0xff]
        %v2603 = vld [vmem:[%s2574 + $0xe0] sm:$0xff]
        %v2604 = vld [vmem:[%s2574 + $0xe8] sm:$0xff]
        %v2605 = vld [vmem:[%s2574 + $0xf0] sm:$0xff]
        %v2606 = vld [vmem:[%s2574 + $0xf8] sm:$0xff]
        %v2607 = vld [vmem:[%s2574 + $0x100] sm:$0xff]
        %v2608 = vld [vmem:[%s2574 + $0x108] sm:$0xff]
        %v2609 = vld [vmem:[%s2574 + $0x110] sm:$0xff]
        %v2610 = vld [vmem:[%s2574 + $0x118] sm:$0xff]
        %v2611 = vld [vmem:[%s2574 + $0x120] sm:$0xff]
        %v2612 = vld [vmem:[%s2574 + $0x128] sm:$0xff]
        %v2613 = vld [vmem:[%s2574 + $0x130] sm:$0xff]
        %v2614 = vld [vmem:[%s2574 + $0x138] sm:$0xff]
        %v2615 = vld [vmem:[%s2574 + $0x140] sm:$0xff]
        %v2616 = vld [vmem:[%s2574 + $0x148] sm:$0xff]
        %v2617 = vld [vmem:[%s2574 + $0x150] sm:$0xff]
        %v2618 = vld [vmem:[%s2574 + $0x158] sm:$0xff]
        %v2619 = vld [vmem:[%s2574 + $0x160] sm:$0xff]
        %v2620 = vld [vmem:[%s2574 + $0x168] sm:$0xff]
        %v2621 = vld [vmem:[%s2574 + $0x170] sm:$0xff]
        %v2622 = vld [vmem:[%s2574 + $0x178] sm:$0xff]
        %2623 = vmatprep.subr.mxu0 0.0
        %2624 = vmatpush1.msra.mxu0 %v2590
        %2625 = vmatprep.subr.mxu0 0.0
        %2626 = vmatpush1.msra.mxu0 %v2589
        %2627 = vmatprep.subr.mxu0 0.0
        %2628 = vmatpush1.msra.mxu0 %v2588
        %2629 = vmatprep.subr.mxu0 0.0
        %2630 = vmatpush1.msra.mxu0 %v2587
        %2631 = vmatprep.subr.mxu0 0.0
        %2632 = vmatpush1.msra.mxu0 %v2586
        %2633 = vmatprep.subr.mxu0 0.0
        %2634 = vmatpush1.msra.mxu0 %v2585
        %2635 = vmatprep.subr.mxu0 0.0
        %2636 = vmatpush1.msra.mxu0 %v2584
        %2637 = vmatprep.subr.mxu0 0.0
        %2638 = vmatpush1.msra.mxu0 %v2583
        %2639 = vmatprep.subr.mxu0 0.0
        %2640 = vmatpush1.msra.mxu0 %v2582
        %2641 = vmatprep.subr.mxu0 0.0
        %2642 = vmatpush1.msra.mxu0 %v2581
        %2643 = vmatprep.subr.mxu0 0.0
        %2644 = vmatpush1.msra.mxu0 %v2580
        %2645 = vmatprep.subr.mxu0 0.0
        %2646 = vmatpush1.msra.mxu0 %v2579
        %2647 = vmatprep.subr.mxu0 0.0
        %2648 = vmatpush1.msra.mxu0 %v2578
        %2649 = vmatprep.subr.mxu0 0.0
        %2650 = vmatpush1.msra.mxu0 %v2577
        %2651 = vmatprep.subr.mxu0 0.0
        %2652 = vmatpush1.msra.mxu0 %v2576
        %2653 = vmatprep.subr.mxu0 0.0
        %2654 = vmatpush1.msra.mxu0 %v2575
        %2655 = vmatprep.subr.mxu0 0.0
        %2656 = vmatpush2.msra.mxu0 %v2606
        %2657 = vmatprep.subr.mxu0 0.0
        %2658 = vmatpush2.msra.mxu0 %v2605
        %2659 = vmatprep.subr.mxu0 0.0
        %2660 = vmatpush2.msra.mxu0 %v2604
        %2661 = vmatprep.subr.mxu0 0.0
        %2662 = vmatpush2.msra.mxu0 %v2603
        %2663 = vmatprep.subr.mxu0 0.0
        %2664 = vmatpush2.msra.mxu0 %v2602
        %2665 = vmatprep.subr.mxu0 0.0
        %2666 = vmatpush2.msra.mxu0 %v2601
        %2667 = vmatprep.subr.mxu0 0.0
        %2668 = vmatpush2.msra.mxu0 %v2600
        %2669 = vmatprep.subr.mxu0 0.0
        %2670 = vmatpush2.msra.mxu0 %v2599
        %2671 = vmatprep.subr.mxu0 0.0
        %2672 = vmatpush2.msra.mxu0 %v2598
        %2673 = vmatprep.subr.mxu0 0.0
        %2674 = vmatpush2.msra.mxu0 %v2597
        %2675 = vmatprep.subr.mxu0 0.0
        %2676 = vmatpush2.msra.mxu0 %v2596
        %2677 = vmatprep.subr.mxu0 0.0
        %2678 = vmatpush2.msra.mxu0 %v2595
        %2679 = vmatprep.subr.mxu0 0.0
        %2680 = vmatpush2.msra.mxu0 %v2594
        %2681 = vmatprep.subr.mxu0 0.0
        %2682 = vmatpush2.msra.mxu0 %v2593
        %2683 = vmatprep.subr.mxu0 0.0
        %2684 = vmatpush2.msra.mxu0 %v2592
        %2685 = vmatprep.subr.mxu0 0.0
        %2686 = vmatpush2.msra.mxu0 %v2591
        %2687 = vmatprep.mubr.f32.mxu0 %v2509
        %2688 = vmatmul.mubr.f32.gmra.mxu0 %v2506
        %v2689 = vpop.f32.mrf.mxu0
        %v2690 = vadd.f32 0.0, %v2689
        %v2691 = vpop.f32.mrf.mxu0
        %2692 = vmatprep.mubr.f32.mxu0 %v2516
        %2693 = vmatmul.mubr.f32.gmra.mxu0 %v2514
        %v2694 = vpop.f32.mrf.mxu0
        %v2695 = vadd.f32 0.0, %v2694
        %v2696 = vpop.f32.mrf.mxu0
        %2697 = vmatprep.mubr.f32.mxu0 %v2512
        %2698 = vmatmul.mubr.f32.gmra.mxu0 %v2509
        %v2699 = vpop.f32.mrf.mxu0
        %v2700 = vadd.f32 0.0, %v2699
        %v2701 = vpop.f32.mrf.mxu0
        %2702 = vmatprep.mubr.f32.mxu0 %v2518
        %2703 = vmatmul.mubr.f32.gmra.mxu0 %v2516
        %v2704 = vpop.f32.mrf.mxu0
        %v2705 = vadd.f32 0.0, %v2704
        %v2706 = vpop.f32.mrf.mxu0
        %2707 = vmatprep.mubr.f32.mxu0 %v2521
        %2708 = vmatmul.mubr.f32.gmra.mxu0 %v2512
        %v2709 = vpop.f32.mrf.mxu0
        %v2710 = vadd.f32 0.0, %v2709
        %v2711 = vpop.f32.mrf.mxu0
        %2712 = vmatprep.mubr.f32.mxu0 %v2523
        %2713 = vmatmul.mubr.f32.gmra.mxu0 %v2518
        %v2714 = vpop.f32.mrf.mxu0
        %v2715 = vadd.f32 0.0, %v2714
        %v2716 = vpop.f32.mrf.mxu0
        %2717 = vmatprep.mubr.f32.mxu0 %v2526
        %2718 = vmatmul.mubr.f32.gmra.mxu0 %v2521
        %v2719 = vpop.f32.mrf.mxu0
        %v2720 = vadd.f32 0.0, %v2719
        %v2721 = vpop.f32.mrf.mxu0
        %2722 = vmatprep.mubr.f32.mxu0 %v2528
        %2723 = vmatmul.mubr.f32.gmra.mxu0 %v2523
        %v2724 = vpop.f32.mrf.mxu0
        %v2725 = vadd.f32 0.0, %v2724
        %v2726 = vpop.f32.mrf.mxu0
        %2727 = vmatprep.mubr.f32.mxu0 %v2531
        %2728 = vmatmul.mubr.f32.gmra.mxu0 %v2526
        %v2729 = vpop.f32.mrf.mxu0
        %v2730 = vadd.f32 0.0, %v2729
        %v2731 = vpop.f32.mrf.mxu0
        %2732 = vmatprep.mubr.f32.mxu0 %v2533
        %2733 = vmatmul.mubr.f32.gmra.mxu0 %v2528
        %v2734 = vpop.f32.mrf.mxu0
        %v2735 = vadd.f32 0.0, %v2734
        %v2736 = vpop.f32.mrf.mxu0
        %2737 = vmatprep.mubr.f32.mxu0 %v2536
        %2738 = vmatmul.mubr.f32.gmra.mxu0 %v2531
        %v2739 = vpop.f32.mrf.mxu0
        %v2740 = vadd.f32 0.0, %v2739
        %v2741 = vpop.f32.mrf.mxu0
        %2742 = vmatprep.mubr.f32.mxu0 %v2538
        %2743 = vmatmul.mubr.f32.gmra.mxu0 %v2533
        %v2744 = vpop.f32.mrf.mxu0
        %v2745 = vadd.f32 0.0, %v2744
        %v2746 = vpop.f32.mrf.mxu0
        %2747 = vmatprep.mubr.f32.mxu0 %v2541
        %2748 = vmatmul.mubr.f32.gmra.mxu0 %v2536
        %v2749 = vpop.f32.mrf.mxu0
        %v2750 = vadd.f32 0.0, %v2749
        %v2751 = vpop.f32.mrf.mxu0
        %2752 = vmatprep.mubr.f32.mxu0 %v2543
        %2753 = vmatmul.mubr.f32.gmra.mxu0 %v2538
        %v2754 = vpop.f32.mrf.mxu0
        %v2755 = vadd.f32 0.0, %v2754
        %v2756 = vpop.f32.mrf.mxu0
        %2757 = vmatprep.mubr.f32.mxu0 %v2546
        %2758 = vmatmul.mubr.f32.gmra.mxu0 %v2541
        %v2759 = vpop.f32.mrf.mxu0
        %v2760 = vadd.f32 0.0, %v2759
        %v2761 = vpop.f32.mrf.mxu0
        %2762 = vmatprep.mubr.f32.mxu0 %v2548
        %2763 = vmatmul.mubr.f32.gmra.mxu0 %v2543
        %v2764 = vpop.f32.mrf.mxu0
        %v2765 = vadd.f32 0.0, %v2764
        %v2766 = vpop.f32.mrf.mxu0
        %2767 = vdwg.mxu0
        %2768 = vmatprep.subr.mxu0 0.0
        %2769 = vmatpush1.msra.mxu0 %v2622
        %2770 = vmatprep.subr.mxu0 0.0
        %2771 = vmatpush1.msra.mxu0 %v2621
        %2772 = vmatprep.subr.mxu0 0.0
        %2773 = vmatpush1.msra.mxu0 %v2620
        %2774 = vmatprep.subr.mxu0 0.0
        %2775 = vmatpush1.msra.mxu0 %v2619
        %2776 = vmatprep.subr.mxu0 0.0
        %2777 = vmatpush1.msra.mxu0 %v2618
        %2778 = vmatprep.subr.mxu0 0.0
        %2779 = vmatpush1.msra.mxu0 %v2617
        %2780 = vmatprep.subr.mxu0 0.0
        %2781 = vmatpush1.msra.mxu0 %v2616
        %2782 = vmatprep.subr.mxu0 0.0
        %2783 = vmatpush1.msra.mxu0 %v2615
        %2784 = vmatprep.subr.mxu0 0.0
        %2785 = vmatpush1.msra.mxu0 %v2614
        %2786 = vmatprep.subr.mxu0 0.0
        %2787 = vmatpush1.msra.mxu0 %v2613
        %2788 = vmatprep.subr.mxu0 0.0
        %2789 = vmatpush1.msra.mxu0 %v2612
        %2790 = vmatprep.subr.mxu0 0.0
        %2791 = vmatpush1.msra.mxu0 %v2611
        %2792 = vmatprep.subr.mxu0 0.0
        %2793 = vmatpush1.msra.mxu0 %v2610
        %2794 = vmatprep.subr.mxu0 0.0
        %2795 = vmatpush1.msra.mxu0 %v2609
        %2796 = vmatprep.subr.mxu0 0.0
        %2797 = vmatpush1.msra.mxu0 %v2608
        %2798 = vmatprep.subr.mxu0 0.0
        %2799 = vmatpush1.msra.mxu0 %v2607
        %2800 = vmatprep.subr.mxu0 0.0
        %2801 = vmatpush2.msra.mxu0 0.0
        %2802 = vmatprep.subr.mxu0 0.0
        %2803 = vmatpush2.msra.mxu0 0.0
        %2804 = vmatprep.subr.mxu0 0.0
        %2805 = vmatpush2.msra.mxu0 0.0
        %2806 = vmatprep.subr.mxu0 0.0
        %2807 = vmatpush2.msra.mxu0 0.0
        %2808 = vmatprep.subr.mxu0 0.0
        %2809 = vmatpush2.msra.mxu0 0.0
        %2810 = vmatprep.subr.mxu0 0.0
        %2811 = vmatpush2.msra.mxu0 0.0
        %2812 = vmatprep.subr.mxu0 0.0
        %2813 = vmatpush2.msra.mxu0 0.0
        %2814 = vmatprep.subr.mxu0 0.0
        %2815 = vmatpush2.msra.mxu0 0.0
        %2816 = vmatprep.subr.mxu0 0.0
        %2817 = vmatpush2.msra.mxu0 0.0
        %2818 = vmatprep.subr.mxu0 0.0
        %2819 = vmatpush2.msra.mxu0 0.0
        %2820 = vmatprep.subr.mxu0 0.0
        %2821 = vmatpush2.msra.mxu0 0.0
        %2822 = vmatprep.subr.mxu0 0.0
        %2823 = vmatpush2.msra.mxu0 0.0
        %2824 = vmatprep.subr.mxu0 0.0
        %2825 = vmatpush2.msra.mxu0 0.0
        %2826 = vmatprep.subr.mxu0 0.0
        %2827 = vmatpush2.msra.mxu0 0.0
        %2828 = vmatprep.subr.mxu0 0.0
        %2829 = vmatpush2.msra.mxu0 0.0
        %2830 = vmatprep.subr.mxu0 0.0
        %2831 = vmatpush2.msra.mxu0 0.0
        %2832 = vmatprep.mubr.f32.mxu0 0.0
        %2833 = vmatmul.mubr.f32.gmra.mxu0 %v2512
        %v2834 = vpop.f32.mrf.mxu0
        %v2835 = vadd.f32 %v2690, %v2834
        %v2836 = vpop.f32.mrf.mxu0
        %2837 = vmatprep.mubr.f32.mxu0 0.0
        %2838 = vmatmul.mubr.f32.gmra.mxu0 %v2518
        %v2839 = vpop.f32.mrf.mxu0
        %v2840 = vadd.f32 %v2695, %v2839
        %v2841 = vpop.f32.mrf.mxu0
        %2842 = vmatprep.mubr.f32.mxu0 0.0
        %2843 = vmatmul.mubr.f32.gmra.mxu0 %v2521
        %v2844 = vpop.f32.mrf.mxu0
        %v2845 = vadd.f32 %v2700, %v2844
        %v2846 = vpop.f32.mrf.mxu0
        %2847 = vmatprep.mubr.f32.mxu0 0.0
        %2848 = vmatmul.mubr.f32.gmra.mxu0 %v2523
        %v2849 = vpop.f32.mrf.mxu0
        %v2850 = vadd.f32 %v2705, %v2849
        %v2851 = vpop.f32.mrf.mxu0
        %2852 = vmatprep.mubr.f32.mxu0 0.0
        %2853 = vmatmul.mubr.f32.gmra.mxu0 %v2526
        %v2854 = vpop.f32.mrf.mxu0
        %v2855 = vadd.f32 %v2710, %v2854
        %v2856 = vpop.f32.mrf.mxu0
        %2857 = vmatprep.mubr.f32.mxu0 0.0
        %2858 = vmatmul.mubr.f32.gmra.mxu0 %v2528
        %v2859 = vpop.f32.mrf.mxu0
        %v2860 = vadd.f32 %v2715, %v2859
        %v2861 = vpop.f32.mrf.mxu0
        %2862 = vmatprep.mubr.f32.mxu0 0.0
        %2863 = vmatmul.mubr.f32.gmra.mxu0 %v2531
        %v2864 = vpop.f32.mrf.mxu0
        %v2865 = vadd.f32 %v2720, %v2864
        %v2866 = vpop.f32.mrf.mxu0
        %2867 = vmatprep.mubr.f32.mxu0 0.0
        %2868 = vmatmul.mubr.f32.gmra.mxu0 %v2533
        %v2869 = vpop.f32.mrf.mxu0
        %v2870 = vadd.f32 %v2725, %v2869
        %v2871 = vpop.f32.mrf.mxu0
        %2872 = vmatprep.mubr.f32.mxu0 0.0
        %2873 = vmatmul.mubr.f32.gmra.mxu0 %v2536
        %v2874 = vpop.f32.mrf.mxu0
        %v2875 = vadd.f32 %v2730, %v2874
        %v2876 = vpop.f32.mrf.mxu0
        %2877 = vmatprep.mubr.f32.mxu0 0.0
        %2878 = vmatmul.mubr.f32.gmra.mxu0 %v2538
        %v2879 = vpop.f32.mrf.mxu0
        %v2880 = vadd.f32 %v2735, %v2879
        %v2881 = vpop.f32.mrf.mxu0
        %2882 = vmatprep.mubr.f32.mxu0 0.0
        %2883 = vmatmul.mubr.f32.gmra.mxu0 %v2541
        %v2884 = vpop.f32.mrf.mxu0
        %v2885 = vadd.f32 %v2740, %v2884
        %v2886 = vpop.f32.mrf.mxu0
        %2887 = vmatprep.mubr.f32.mxu0 0.0
        %2888 = vmatmul.mubr.f32.gmra.mxu0 %v2543
        %v2889 = vpop.f32.mrf.mxu0
        %v2890 = vadd.f32 %v2745, %v2889
        %v2891 = vpop.f32.mrf.mxu0
        %2892 = vmatprep.mubr.f32.mxu0 0.0
        %2893 = vmatmul.mubr.f32.gmra.mxu0 %v2546
        %v2894 = vpop.f32.mrf.mxu0
        %v2895 = vadd.f32 %v2750, %v2894
        %v2896 = vpop.f32.mrf.mxu0
        %2897 = vmatprep.mubr.f32.mxu0 0.0
        %2898 = vmatmul.mubr.f32.gmra.mxu0 %v2548
        %v2899 = vpop.f32.mrf.mxu0
        %v2900 = vadd.f32 %v2755, %v2899
        %v2901 = vpop.f32.mrf.mxu0
        %2902 = vmatprep.mubr.f32.mxu0 0.0
        %2903 = vmatmul.mubr.f32.gmra.mxu0 %v2551
        %v2904 = vpop.f32.mrf.mxu0
        %v2905 = vadd.f32 %v2760, %v2904
        %v2906 = vpop.f32.mrf.mxu0
        %2907 = vmatprep.mubr.f32.mxu0 0.0
        %2908 = vmatmul.mubr.f32.gmra.mxu0 %v2553
        %v2909 = vpop.f32.mrf.mxu0
        %v2910 = vadd.f32 %v2765, %v2909
        %v2911 = vpop.f32.mrf.mxu0
        %2912 = vdwg.mxu0
        %2913 = vmatprep.subr.mxu0 0.0
        %2914 = vmatpush1.msra.mxu0 %v2441
        %2915 = vmatprep.subr.mxu0 0.0
        %2916 = vmatpush1.msra.mxu0 %v2440
        %2917 = vmatprep.subr.mxu0 0.0
        %2918 = vmatpush1.msra.mxu0 %v2439
        %2919 = vmatprep.subr.mxu0 0.0
        %2920 = vmatpush1.msra.mxu0 %v2438
        %2921 = vmatprep.subr.mxu0 0.0
        %2922 = vmatpush1.msra.mxu0 %v2437
        %2923 = vmatprep.subr.mxu0 0.0
        %2924 = vmatpush1.msra.mxu0 %v2436
        %2925 = vmatprep.subr.mxu0 0.0
        %2926 = vmatpush1.msra.mxu0 %v2435
        %2927 = vmatprep.subr.mxu0 0.0
        %2928 = vmatpush1.msra.mxu0 %v2434
        %2929 = vmatprep.subr.mxu0 0.0
        %2930 = vmatpush1.msra.mxu0 %v2433
        %2931 = vmatprep.subr.mxu0 0.0
        %2932 = vmatpush1.msra.mxu0 %v2432
        %2933 = vmatprep.subr.mxu0 0.0
        %2934 = vmatpush1.msra.mxu0 %v2431
        %2935 = vmatprep.subr.mxu0 0.0
        %2936 = vmatpush1.msra.mxu0 %v2430
        %2937 = vmatprep.subr.mxu0 0.0
        %2938 = vmatpush1.msra.mxu0 %v2429
        %2939 = vmatprep.subr.mxu0 0.0
        %2940 = vmatpush1.msra.mxu0 %v2428
        %2941 = vmatprep.subr.mxu0 0.0
        %2942 = vmatpush1.msra.mxu0 %v2427
        %2943 = vmatprep.subr.mxu0 0.0
        %2944 = vmatpush1.msra.mxu0 %v2426
        %2945 = vmatprep.subr.mxu0 0.0
        %2946 = vmatpush2.msra.mxu0 %v2457
        %2947 = vmatprep.subr.mxu0 0.0
        %2948 = vmatpush2.msra.mxu0 %v2456
        %2949 = vmatprep.subr.mxu0 0.0
        %2950 = vmatpush2.msra.mxu0 %v2455
        %2951 = vmatprep.subr.mxu0 0.0
        %2952 = vmatpush2.msra.mxu0 %v2454
        %2953 = vmatprep.subr.mxu0 0.0
        %2954 = vmatpush2.msra.mxu0 %v2453
        %2955 = vmatprep.subr.mxu0 0.0
        %2956 = vmatpush2.msra.mxu0 %v2452
        %2957 = vmatprep.subr.mxu0 0.0
        %2958 = vmatpush2.msra.mxu0 %v2451
        %2959 = vmatprep.subr.mxu0 0.0
        %2960 = vmatpush2.msra.mxu0 %v2450
        %2961 = vmatprep.subr.mxu0 0.0
        %2962 = vmatpush2.msra.mxu0 %v2449
        %2963 = vmatprep.subr.mxu0 0.0
        %2964 = vmatpush2.msra.mxu0 %v2448
        %2965 = vmatprep.subr.mxu0 0.0
        %2966 = vmatpush2.msra.mxu0 %v2447
        %2967 = vmatprep.subr.mxu0 0.0
        %2968 = vmatpush2.msra.mxu0 %v2446
        %2969 = vmatprep.subr.mxu0 0.0
        %2970 = vmatpush2.msra.mxu0 %v2445
        %2971 = vmatprep.subr.mxu0 0.0
        %2972 = vmatpush2.msra.mxu0 %v2444
        %2973 = vmatprep.subr.mxu0 0.0
        %2974 = vmatpush2.msra.mxu0 %v2443
        %2975 = vmatprep.subr.mxu0 0.0
        %2976 = vmatpush2.msra.mxu0 %v2442
        %2977 = vmatprep.mubr.f32.mxu0 %v2399
        %2978 = vmatmul.mubr.f32.gmra.mxu0 %v2396
        %v2979 = vpop.f32.mrf.mxu0
        %v2980 = vadd.f32 %v2835, %v2979
        %v2981 = vpop.f32.mrf.mxu0
        %2982 = vmatprep.mubr.f32.mxu0 %v2400
        %2983 = vmatmul.mubr.f32.gmra.mxu0 %v2397
        %v2984 = vpop.f32.mrf.mxu0
        %v2985 = vadd.f32 %v2840, %v2984
        %v2986 = vpop.f32.mrf.mxu0
        %2987 = vmatprep.mubr.f32.mxu0 %v2402
        %2988 = vmatmul.mubr.f32.gmra.mxu0 %v2399
        %v2989 = vpop.f32.mrf.mxu0
        %v2990 = vadd.f32 %v2845, %v2989
        %v2991 = vpop.f32.mrf.mxu0
        %2992 = vmatprep.mubr.f32.mxu0 %v2403
        %2993 = vmatmul.mubr.f32.gmra.mxu0 %v2400
        %v2994 = vpop.f32.mrf.mxu0
        %v2995 = vadd.f32 %v2850, %v2994
        %v2996 = vpop.f32.mrf.mxu0
        %2997 = vmatprep.mubr.f32.mxu0 %v2405
        %2998 = vmatmul.mubr.f32.gmra.mxu0 %v2402
        %v2999 = vpop.f32.mrf.mxu0
        %v3000 = vadd.f32 %v2855, %v2999
        %v3001 = vpop.f32.mrf.mxu0
        %3002 = vmatprep.mubr.f32.mxu0 %v2406
        %3003 = vmatmul.mubr.f32.gmra.mxu0 %v2403
        %v3004 = vpop.f32.mrf.mxu0
        %v3005 = vadd.f32 %v2860, %v3004
        %v3006 = vpop.f32.mrf.mxu0
        %3007 = vmatprep.mubr.f32.mxu0 %v2408
        %3008 = vmatmul.mubr.f32.gmra.mxu0 %v2405
        %v3009 = vpop.f32.mrf.mxu0
        %v3010 = vadd.f32 %v2865, %v3009
        %v3011 = vpop.f32.mrf.mxu0
        %3012 = vmatprep.mubr.f32.mxu0 %v2409
        %3013 = vmatmul.mubr.f32.gmra.mxu0 %v2406
        %v3014 = vpop.f32.mrf.mxu0
        %v3015 = vadd.f32 %v2870, %v3014
        %v3016 = vpop.f32.mrf.mxu0
        %3017 = vmatprep.mubr.f32.mxu0 %v2411
        %3018 = vmatmul.mubr.f32.gmra.mxu0 %v2408
        %v3019 = vpop.f32.mrf.mxu0
        %v3020 = vadd.f32 %v2875, %v3019
        %v3021 = vpop.f32.mrf.mxu0
        %3022 = vmatprep.mubr.f32.mxu0 %v2412
        %3023 = vmatmul.mubr.f32.gmra.mxu0 %v2409
        %v3024 = vpop.f32.mrf.mxu0
        %v3025 = vadd.f32 %v2880, %v3024
        %v3026 = vpop.f32.mrf.mxu0
        %3027 = vmatprep.mubr.f32.mxu0 %v2414
        %3028 = vmatmul.mubr.f32.gmra.mxu0 %v2411
        %v3029 = vpop.f32.mrf.mxu0
        %v3030 = vadd.f32 %v2885, %v3029
        %v3031 = vpop.f32.mrf.mxu0
        %3032 = vmatprep.mubr.f32.mxu0 %v2415
        %3033 = vmatmul.mubr.f32.gmra.mxu0 %v2412
        %v3034 = vpop.f32.mrf.mxu0
        %v3035 = vadd.f32 %v2890, %v3034
        %v3036 = vpop.f32.mrf.mxu0
        %3037 = vmatprep.mubr.f32.mxu0 %v2417
        %3038 = vmatmul.mubr.f32.gmra.mxu0 %v2414
        %v3039 = vpop.f32.mrf.mxu0
        %v3040 = vadd.f32 %v2895, %v3039
        %v3041 = vpop.f32.mrf.mxu0
        %3042 = vmatprep.mubr.f32.mxu0 %v2418
        %3043 = vmatmul.mubr.f32.gmra.mxu0 %v2415
        %v3044 = vpop.f32.mrf.mxu0
        %v3045 = vadd.f32 %v2900, %v3044
        %v3046 = vpop.f32.mrf.mxu0
        %3047 = vmatprep.mubr.f32.mxu0 %v2420
        %3048 = vmatmul.mubr.f32.gmra.mxu0 %v2417
        %v3049 = vpop.f32.mrf.mxu0
        %v3050 = vadd.f32 %v2905, %v3049
        %v3051 = vpop.f32.mrf.mxu0
        %3052 = vmatprep.mubr.f32.mxu0 %v2421
        %3053 = vmatmul.mubr.f32.gmra.mxu0 %v2418
        %v3054 = vpop.f32.mrf.mxu0
        %v3055 = vadd.f32 %v2910, %v3054
        %v3056 = vpop.f32.mrf.mxu0
        %3057 = vdwg.mxu0
        %3058 = vmatprep.subr.mxu0 0.0
        %3059 = vmatpush1.msra.mxu0 %v2473
        %3060 = vmatprep.subr.mxu0 0.0
        %3061 = vmatpush1.msra.mxu0 %v2472
        %3062 = vmatprep.subr.mxu0 0.0
        %3063 = vmatpush1.msra.mxu0 %v2471
        %3064 = vmatprep.subr.mxu0 0.0
        %3065 = vmatpush1.msra.mxu0 %v2470
        %3066 = vmatprep.subr.mxu0 0.0
        %3067 = vmatpush1.msra.mxu0 %v2469
        %3068 = vmatprep.subr.mxu0 0.0
        %3069 = vmatpush1.msra.mxu0 %v2468
        %3070 = vmatprep.subr.mxu0 0.0
        %3071 = vmatpush1.msra.mxu0 %v2467
        %3072 = vmatprep.subr.mxu0 0.0
        %3073 = vmatpush1.msra.mxu0 %v2466
        %3074 = vmatprep.subr.mxu0 0.0
        %3075 = vmatpush1.msra.mxu0 %v2465
        %3076 = vmatprep.subr.mxu0 0.0
        %3077 = vmatpush1.msra.mxu0 %v2464
        %3078 = vmatprep.subr.mxu0 0.0
        %3079 = vmatpush1.msra.mxu0 %v2463
        %3080 = vmatprep.subr.mxu0 0.0
        %3081 = vmatpush1.msra.mxu0 %v2462
        %3082 = vmatprep.subr.mxu0 0.0
        %3083 = vmatpush1.msra.mxu0 %v2461
        %3084 = vmatprep.subr.mxu0 0.0
        %3085 = vmatpush1.msra.mxu0 %v2460
        %3086 = vmatprep.subr.mxu0 0.0
        %3087 = vmatpush1.msra.mxu0 %v2459
        %3088 = vmatprep.subr.mxu0 0.0
        %3089 = vmatpush1.msra.mxu0 %v2458
        %3090 = vmatprep.subr.mxu0 0.0
        %3091 = vmatpush2.msra.mxu0 0.0
        %3092 = vmatprep.subr.mxu0 0.0
        %3093 = vmatpush2.msra.mxu0 0.0
        %3094 = vmatprep.subr.mxu0 0.0
        %3095 = vmatpush2.msra.mxu0 0.0
        %3096 = vmatprep.subr.mxu0 0.0
        %3097 = vmatpush2.msra.mxu0 0.0
        %3098 = vmatprep.subr.mxu0 0.0
        %3099 = vmatpush2.msra.mxu0 0.0
        %3100 = vmatprep.subr.mxu0 0.0
        %3101 = vmatpush2.msra.mxu0 0.0
        %3102 = vmatprep.subr.mxu0 0.0
        %3103 = vmatpush2.msra.mxu0 0.0
        %3104 = vmatprep.subr.mxu0 0.0
        %3105 = vmatpush2.msra.mxu0 0.0
        %3106 = vmatprep.subr.mxu0 0.0
        %3107 = vmatpush2.msra.mxu0 0.0
        %3108 = vmatprep.subr.mxu0 0.0
        %3109 = vmatpush2.msra.mxu0 0.0
        %3110 = vmatprep.subr.mxu0 0.0
        %3111 = vmatpush2.msra.mxu0 0.0
        %3112 = vmatprep.subr.mxu0 0.0
        %3113 = vmatpush2.msra.mxu0 0.0
        %3114 = vmatprep.subr.mxu0 0.0
        %3115 = vmatpush2.msra.mxu0 0.0
        %3116 = vmatprep.subr.mxu0 0.0
        %3117 = vmatpush2.msra.mxu0 0.0
        %3118 = vmatprep.subr.mxu0 0.0
        %3119 = vmatpush2.msra.mxu0 0.0
        %3120 = vmatprep.subr.mxu0 0.0
        %3121 = vmatpush2.msra.mxu0 0.0
        %3122 = vmatprep.mubr.f32.mxu0 0.0
        %3123 = vmatmul.mubr.f32.gmra.mxu0 %v2402
        %v3124 = vpop.f32.mrf.mxu0
        %v3125 = vadd.f32 %v2980, %v3124
        %v3126 = vpop.f32.mrf.mxu0
        %3127 = vmatprep.mubr.f32.mxu0 0.0
        %3128 = vmatmul.mubr.f32.gmra.mxu0 %v2403
        %v3129 = vpop.f32.mrf.mxu0
        %v3130 = vadd.f32 %v2985, %v3129
        %v3131 = vpop.f32.mrf.mxu0
        %3132 = vmatprep.mubr.f32.mxu0 0.0
        %3133 = vmatmul.mubr.f32.gmra.mxu0 %v2405
        %v3134 = vpop.f32.mrf.mxu0
        %v3135 = vadd.f32 %v2990, %v3134
        %v3136 = vpop.f32.mrf.mxu0
        %3137 = vmatprep.mubr.f32.mxu0 0.0
        %3138 = vmatmul.mubr.f32.gmra.mxu0 %v2406
        %v3139 = vpop.f32.mrf.mxu0
        %v3140 = vadd.f32 %v2995, %v3139
        %v3141 = vpop.f32.mrf.mxu0
        %3142 = vmatprep.mubr.f32.mxu0 0.0
        %3143 = vmatmul.mubr.f32.gmra.mxu0 %v2408
        %v3144 = vpop.f32.mrf.mxu0
        %v3145 = vadd.f32 %v3000, %v3144
        %v3146 = vpop.f32.mrf.mxu0
        %3147 = vmatprep.mubr.f32.mxu0 0.0
        %3148 = vmatmul.mubr.f32.gmra.mxu0 %v2409
        %v3149 = vpop.f32.mrf.mxu0
        %v3150 = vadd.f32 %v3005, %v3149
        %v3151 = vpop.f32.mrf.mxu0
        %3152 = vmatprep.mubr.f32.mxu0 0.0
        %3153 = vmatmul.mubr.f32.gmra.mxu0 %v2411
        %v3154 = vpop.f32.mrf.mxu0
        %v3155 = vadd.f32 %v3010, %v3154
        %v3156 = vpop.f32.mrf.mxu0
        %3157 = vmatprep.mubr.f32.mxu0 0.0
        %3158 = vmatmul.mubr.f32.gmra.mxu0 %v2412
        %v3159 = vpop.f32.mrf.mxu0
        %v3160 = vadd.f32 %v3015, %v3159
        %v3161 = vpop.f32.mrf.mxu0
        %3162 = vmatprep.mubr.f32.mxu0 0.0
        %3163 = vmatmul.mubr.f32.gmra.mxu0 %v2414
        %v3164 = vpop.f32.mrf.mxu0
        %v3165 = vadd.f32 %v3020, %v3164
        %v3166 = vpop.f32.mrf.mxu0
        %3167 = vmatprep.mubr.f32.mxu0 0.0
        %3168 = vmatmul.mubr.f32.gmra.mxu0 %v2415
        %v3169 = vpop.f32.mrf.mxu0
        %v3170 = vadd.f32 %v3025, %v3169
        %v3171 = vpop.f32.mrf.mxu0
        %3172 = vmatprep.mubr.f32.mxu0 0.0
        %3173 = vmatmul.mubr.f32.gmra.mxu0 %v2417
        %v3174 = vpop.f32.mrf.mxu0
        %v3175 = vadd.f32 %v3030, %v3174
        %v3176 = vpop.f32.mrf.mxu0
        %3177 = vmatprep.mubr.f32.mxu0 0.0
        %3178 = vmatmul.mubr.f32.gmra.mxu0 %v2418
        %v3179 = vpop.f32.mrf.mxu0
        %v3180 = vadd.f32 %v3035, %v3179
        %v3181 = vpop.f32.mrf.mxu0
        %3182 = vmatprep.mubr.f32.mxu0 0.0
        %3183 = vmatmul.mubr.f32.gmra.mxu0 %v2420
        %v3184 = vpop.f32.mrf.mxu0
        %v3185 = vadd.f32 %v3040, %v3184
        %v3186 = vpop.f32.mrf.mxu0
        %3187 = vmatprep.mubr.f32.mxu0 0.0
        %3188 = vmatmul.mubr.f32.gmra.mxu0 %v2421
        %v3189 = vpop.f32.mrf.mxu0
        %v3190 = vadd.f32 %v3045, %v3189
        %v3191 = vpop.f32.mrf.mxu0
        %3192 = vmatprep.mubr.f32.mxu0 0.0
        %3193 = vmatmul.mubr.f32.gmra.mxu0 %v2423
        %v3194 = vpop.f32.mrf.mxu0
        %v3195 = vadd.f32 %v3050, %v3194
        %v3196 = vpop.f32.mrf.mxu0
        %3197 = vmatprep.mubr.f32.mxu0 0.0
        %3198 = vmatmul.mubr.f32.gmra.mxu0 %v2424
        %v3199 = vpop.f32.mrf.mxu0
        %v3200 = vadd.f32 %v3055, %v3199
        %v3201 = vpop.f32.mrf.mxu0
        %3202 = vdwg.mxu0
        %v3203 = vrot.slane %v2396, 2
        %v3204 = vrot.slane %v2397, 2
        %v3205 = vsel %vm1528, %v3203, %v3204
        %v3206 = vrot.slane %v2399, 2
        %v3207 = vrot.slane %v2400, 2
        %v3208 = vsel %vm1528, %v3206, %v3207
        %v3209 = vrot.slane %v2402, 2
        %v3210 = vrot.slane %v2403, 2
        %v3211 = vsel %vm1528, %v3209, %v3210
        %v3212 = vrot.slane %v2398, 2
        %v3213 = vsel %vm1528, %v3204, %v3212
        %v3214 = vrot.slane %v2401, 2
        %v3215 = vsel %vm1528, %v3207, %v3214
        %v3216 = vrot.slane %v2404, 2
        %v3217 = vsel %vm1528, %v3210, %v3216
        %v3218 = vrot.slane %v2405, 2
        %v3219 = vrot.slane %v2406, 2
        %v3220 = vsel %vm1528, %v3218, %v3219
        %v3221 = vrot.slane %v2407, 2
        %v3222 = vsel %vm1528, %v3219, %v3221
        %v3223 = vrot.slane %v2408, 2
        %v3224 = vrot.slane %v2409, 2
        %v3225 = vsel %vm1528, %v3223, %v3224
        %v3226 = vrot.slane %v2410, 2
        %v3227 = vsel %vm1528, %v3224, %v3226
        %v3228 = vrot.slane %v2411, 2
        %v3229 = vrot.slane %v2412, 2
        %v3230 = vsel %vm1528, %v3228, %v3229
        %v3231 = vrot.slane %v2413, 2
        %v3232 = vsel %vm1528, %v3229, %v3231
        %v3233 = vrot.slane %v2414, 2
        %v3234 = vrot.slane %v2415, 2
        %v3235 = vsel %vm1528, %v3233, %v3234
        %v3236 = vrot.slane %v2416, 2
        %v3237 = vsel %vm1528, %v3234, %v3236
        %v3238 = vrot.slane %v2417, 2
        %v3239 = vrot.slane %v2418, 2
        %v3240 = vsel %vm1528, %v3238, %v3239
        %v3241 = vrot.slane %v2419, 2
        %v3242 = vsel %vm1528, %v3239, %v3241
        %v3243 = vrot.slane %v2420, 2
        %v3244 = vrot.slane %v2421, 2
        %v3245 = vsel %vm1528, %v3243, %v3244
        %v3246 = vrot.slane %v2422, 2
        %v3247 = vsel %vm1528, %v3244, %v3246
        %v3248 = vrot.slane %v2423, 2
        %v3249 = vrot.slane %v2424, 2
        %v3250 = vsel %vm1528, %v3248, %v3249
        %v3251 = vrot.slane %v2425, 2
        %v3252 = vsel %vm1528, %v3249, %v3251
        %s3273 = scalar_lea.vmem %s5, 768
        %v3274 = vld [vmem:[%s3273] sm:$0xff]
        %v3275 = vld [vmem:[%s3273 + $0x8] sm:$0xff]
        %v3276 = vld [vmem:[%s3273 + $0x10] sm:$0xff]
        %v3277 = vld [vmem:[%s3273 + $0x18] sm:$0xff]
        %v3278 = vld [vmem:[%s3273 + $0x20] sm:$0xff]
        %v3279 = vld [vmem:[%s3273 + $0x28] sm:$0xff]
        %v3280 = vld [vmem:[%s3273 + $0x30] sm:$0xff]
        %v3281 = vld [vmem:[%s3273 + $0x38] sm:$0xff]
        %v3282 = vld [vmem:[%s3273 + $0x40] sm:$0xff]
        %v3283 = vld [vmem:[%s3273 + $0x48] sm:$0xff]
        %v3284 = vld [vmem:[%s3273 + $0x50] sm:$0xff]
        %v3285 = vld [vmem:[%s3273 + $0x58] sm:$0xff]
        %v3286 = vld [vmem:[%s3273 + $0x60] sm:$0xff]
        %v3287 = vld [vmem:[%s3273 + $0x68] sm:$0xff]
        %v3288 = vld [vmem:[%s3273 + $0x70] sm:$0xff]
        %v3289 = vld [vmem:[%s3273 + $0x78] sm:$0xff]
        %v3290 = vld [vmem:[%s3273 + $0x80] sm:$0xff]
        %v3291 = vld [vmem:[%s3273 + $0x88] sm:$0xff]
        %v3292 = vld [vmem:[%s3273 + $0x90] sm:$0xff]
        %v3293 = vld [vmem:[%s3273 + $0x98] sm:$0xff]
        %v3294 = vld [vmem:[%s3273 + $0xa0] sm:$0xff]
        %v3295 = vld [vmem:[%s3273 + $0xa8] sm:$0xff]
        %v3296 = vld [vmem:[%s3273 + $0xb0] sm:$0xff]
        %v3297 = vld [vmem:[%s3273 + $0xb8] sm:$0xff]
        %v3298 = vld [vmem:[%s3273 + $0xc0] sm:$0xff]
        %v3299 = vld [vmem:[%s3273 + $0xc8] sm:$0xff]
        %v3300 = vld [vmem:[%s3273 + $0xd0] sm:$0xff]
        %v3301 = vld [vmem:[%s3273 + $0xd8] sm:$0xff]
        %v3302 = vld [vmem:[%s3273 + $0xe0] sm:$0xff]
        %v3303 = vld [vmem:[%s3273 + $0xe8] sm:$0xff]
        %v3304 = vld [vmem:[%s3273 + $0xf0] sm:$0xff]
        %v3305 = vld [vmem:[%s3273 + $0xf8] sm:$0xff]
        %v3306 = vld [vmem:[%s3273 + $0x100] sm:$0xff]
        %v3307 = vld [vmem:[%s3273 + $0x108] sm:$0xff]
        %v3308 = vld [vmem:[%s3273 + $0x110] sm:$0xff]
        %v3309 = vld [vmem:[%s3273 + $0x118] sm:$0xff]
        %v3310 = vld [vmem:[%s3273 + $0x120] sm:$0xff]
        %v3311 = vld [vmem:[%s3273 + $0x128] sm:$0xff]
        %v3312 = vld [vmem:[%s3273 + $0x130] sm:$0xff]
        %v3313 = vld [vmem:[%s3273 + $0x138] sm:$0xff]
        %v3314 = vld [vmem:[%s3273 + $0x140] sm:$0xff]
        %v3315 = vld [vmem:[%s3273 + $0x148] sm:$0xff]
        %v3316 = vld [vmem:[%s3273 + $0x150] sm:$0xff]
        %v3317 = vld [vmem:[%s3273 + $0x158] sm:$0xff]
        %v3318 = vld [vmem:[%s3273 + $0x160] sm:$0xff]
        %v3319 = vld [vmem:[%s3273 + $0x168] sm:$0xff]
        %v3320 = vld [vmem:[%s3273 + $0x170] sm:$0xff]
        %v3321 = vld [vmem:[%s3273 + $0x178] sm:$0xff]
        %3322 = vmatprep.subr.mxu0 0.0
        %3323 = vmatpush1.msra.mxu0 %v3289
        %3324 = vmatprep.subr.mxu0 0.0
        %3325 = vmatpush1.msra.mxu0 %v3288
        %3326 = vmatprep.subr.mxu0 0.0
        %3327 = vmatpush1.msra.mxu0 %v3287
        %3328 = vmatprep.subr.mxu0 0.0
        %3329 = vmatpush1.msra.mxu0 %v3286
        %3330 = vmatprep.subr.mxu0 0.0
        %3331 = vmatpush1.msra.mxu0 %v3285
        %3332 = vmatprep.subr.mxu0 0.0
        %3333 = vmatpush1.msra.mxu0 %v3284
        %3334 = vmatprep.subr.mxu0 0.0
        %3335 = vmatpush1.msra.mxu0 %v3283
        %3336 = vmatprep.subr.mxu0 0.0
        %3337 = vmatpush1.msra.mxu0 %v3282
        %3338 = vmatprep.subr.mxu0 0.0
        %3339 = vmatpush1.msra.mxu0 %v3281
        %3340 = vmatprep.subr.mxu0 0.0
        %3341 = vmatpush1.msra.mxu0 %v3280
        %3342 = vmatprep.subr.mxu0 0.0
        %3343 = vmatpush1.msra.mxu0 %v3279
        %3344 = vmatprep.subr.mxu0 0.0
        %3345 = vmatpush1.msra.mxu0 %v3278
        %3346 = vmatprep.subr.mxu0 0.0
        %3347 = vmatpush1.msra.mxu0 %v3277
        %3348 = vmatprep.subr.mxu0 0.0
        %3349 = vmatpush1.msra.mxu0 %v3276
        %3350 = vmatprep.subr.mxu0 0.0
        %3351 = vmatpush1.msra.mxu0 %v3275
        %3352 = vmatprep.subr.mxu0 0.0
        %3353 = vmatpush1.msra.mxu0 %v3274
        %3354 = vmatprep.subr.mxu0 0.0
        %3355 = vmatpush2.msra.mxu0 %v3305
        %3356 = vmatprep.subr.mxu0 0.0
        %3357 = vmatpush2.msra.mxu0 %v3304
        %3358 = vmatprep.subr.mxu0 0.0
        %3359 = vmatpush2.msra.mxu0 %v3303
        %3360 = vmatprep.subr.mxu0 0.0
        %3361 = vmatpush2.msra.mxu0 %v3302
        %3362 = vmatprep.subr.mxu0 0.0
        %3363 = vmatpush2.msra.mxu0 %v3301
        %3364 = vmatprep.subr.mxu0 0.0
        %3365 = vmatpush2.msra.mxu0 %v3300
        %3366 = vmatprep.subr.mxu0 0.0
        %3367 = vmatpush2.msra.mxu0 %v3299
        %3368 = vmatprep.subr.mxu0 0.0
        %3369 = vmatpush2.msra.mxu0 %v3298
        %3370 = vmatprep.subr.mxu0 0.0
        %3371 = vmatpush2.msra.mxu0 %v3297
        %3372 = vmatprep.subr.mxu0 0.0
        %3373 = vmatpush2.msra.mxu0 %v3296
        %3374 = vmatprep.subr.mxu0 0.0
        %3375 = vmatpush2.msra.mxu0 %v3295
        %3376 = vmatprep.subr.mxu0 0.0
        %3377 = vmatpush2.msra.mxu0 %v3294
        %3378 = vmatprep.subr.mxu0 0.0
        %3379 = vmatpush2.msra.mxu0 %v3293
        %3380 = vmatprep.subr.mxu0 0.0
        %3381 = vmatpush2.msra.mxu0 %v3292
        %3382 = vmatprep.subr.mxu0 0.0
        %3383 = vmatpush2.msra.mxu0 %v3291
        %3384 = vmatprep.subr.mxu0 0.0
        %3385 = vmatpush2.msra.mxu0 %v3290
        %3386 = vmatprep.mubr.f32.mxu0 %v3208
        %3387 = vmatmul.mubr.f32.gmra.mxu0 %v3205
        %v3388 = vpop.f32.mrf.mxu0
        %v3389 = vadd.f32 0.0, %v3388
        %v3390 = vpop.f32.mrf.mxu0
        %3391 = vmatprep.mubr.f32.mxu0 %v3215
        %3392 = vmatmul.mubr.f32.gmra.mxu0 %v3213
        %v3393 = vpop.f32.mrf.mxu0
        %v3394 = vadd.f32 0.0, %v3393
        %v3395 = vpop.f32.mrf.mxu0
        %3396 = vmatprep.mubr.f32.mxu0 %v3211
        %3397 = vmatmul.mubr.f32.gmra.mxu0 %v3208
        %v3398 = vpop.f32.mrf.mxu0
        %v3399 = vadd.f32 0.0, %v3398
        %v3400 = vpop.f32.mrf.mxu0
        %3401 = vmatprep.mubr.f32.mxu0 %v3217
        %3402 = vmatmul.mubr.f32.gmra.mxu0 %v3215
        %v3403 = vpop.f32.mrf.mxu0
        %v3404 = vadd.f32 0.0, %v3403
        %v3405 = vpop.f32.mrf.mxu0
        %3406 = vmatprep.mubr.f32.mxu0 %v3220
        %3407 = vmatmul.mubr.f32.gmra.mxu0 %v3211
        %v3408 = vpop.f32.mrf.mxu0
        %v3409 = vadd.f32 0.0, %v3408
        %v3410 = vpop.f32.mrf.mxu0
        %3411 = vmatprep.mubr.f32.mxu0 %v3222
        %3412 = vmatmul.mubr.f32.gmra.mxu0 %v3217
        %v3413 = vpop.f32.mrf.mxu0
        %v3414 = vadd.f32 0.0, %v3413
        %v3415 = vpop.f32.mrf.mxu0
        %3416 = vmatprep.mubr.f32.mxu0 %v3225
        %3417 = vmatmul.mubr.f32.gmra.mxu0 %v3220
        %v3418 = vpop.f32.mrf.mxu0
        %v3419 = vadd.f32 0.0, %v3418
        %v3420 = vpop.f32.mrf.mxu0
        %3421 = vmatprep.mubr.f32.mxu0 %v3227
        %3422 = vmatmul.mubr.f32.gmra.mxu0 %v3222
        %v3423 = vpop.f32.mrf.mxu0
        %v3424 = vadd.f32 0.0, %v3423
        %v3425 = vpop.f32.mrf.mxu0
        %3426 = vmatprep.mubr.f32.mxu0 %v3230
        %3427 = vmatmul.mubr.f32.gmra.mxu0 %v3225
        %v3428 = vpop.f32.mrf.mxu0
        %v3429 = vadd.f32 0.0, %v3428
        %v3430 = vpop.f32.mrf.mxu0
        %3431 = vmatprep.mubr.f32.mxu0 %v3232
        %3432 = vmatmul.mubr.f32.gmra.mxu0 %v3227
        %v3433 = vpop.f32.mrf.mxu0
        %v3434 = vadd.f32 0.0, %v3433
        %v3435 = vpop.f32.mrf.mxu0
        %3436 = vmatprep.mubr.f32.mxu0 %v3235
        %3437 = vmatmul.mubr.f32.gmra.mxu0 %v3230
        %v3438 = vpop.f32.mrf.mxu0
        %v3439 = vadd.f32 0.0, %v3438
        %v3440 = vpop.f32.mrf.mxu0
        %3441 = vmatprep.mubr.f32.mxu0 %v3237
        %3442 = vmatmul.mubr.f32.gmra.mxu0 %v3232
        %v3443 = vpop.f32.mrf.mxu0
        %v3444 = vadd.f32 0.0, %v3443
        %v3445 = vpop.f32.mrf.mxu0
        %3446 = vmatprep.mubr.f32.mxu0 %v3240
        %3447 = vmatmul.mubr.f32.gmra.mxu0 %v3235
        %v3448 = vpop.f32.mrf.mxu0
        %v3449 = vadd.f32 0.0, %v3448
        %v3450 = vpop.f32.mrf.mxu0
        %3451 = vmatprep.mubr.f32.mxu0 %v3242
        %3452 = vmatmul.mubr.f32.gmra.mxu0 %v3237
        %v3453 = vpop.f32.mrf.mxu0
        %v3454 = vadd.f32 0.0, %v3453
        %v3455 = vpop.f32.mrf.mxu0
        %3456 = vmatprep.mubr.f32.mxu0 %v3245
        %3457 = vmatmul.mubr.f32.gmra.mxu0 %v3240
        %v3458 = vpop.f32.mrf.mxu0
        %v3459 = vadd.f32 0.0, %v3458
        %v3460 = vpop.f32.mrf.mxu0
        %3461 = vmatprep.mubr.f32.mxu0 %v3247
        %3462 = vmatmul.mubr.f32.gmra.mxu0 %v3242
        %v3463 = vpop.f32.mrf.mxu0
        %v3464 = vadd.f32 0.0, %v3463
        %v3465 = vpop.f32.mrf.mxu0
        %3466 = vdwg.mxu0
        %3467 = vmatprep.subr.mxu0 0.0
        %3468 = vmatpush1.msra.mxu0 %v3321
        %3469 = vmatprep.subr.mxu0 0.0
        %3470 = vmatpush1.msra.mxu0 %v3320
        %3471 = vmatprep.subr.mxu0 0.0
        %3472 = vmatpush1.msra.mxu0 %v3319
        %3473 = vmatprep.subr.mxu0 0.0
        %3474 = vmatpush1.msra.mxu0 %v3318
        %3475 = vmatprep.subr.mxu0 0.0
        %3476 = vmatpush1.msra.mxu0 %v3317
        %3477 = vmatprep.subr.mxu0 0.0
        %3478 = vmatpush1.msra.mxu0 %v3316
        %3479 = vmatprep.subr.mxu0 0.0
        %3480 = vmatpush1.msra.mxu0 %v3315
        %3481 = vmatprep.subr.mxu0 0.0
        %3482 = vmatpush1.msra.mxu0 %v3314
        %3483 = vmatprep.subr.mxu0 0.0
        %3484 = vmatpush1.msra.mxu0 %v3313
        %3485 = vmatprep.subr.mxu0 0.0
        %3486 = vmatpush1.msra.mxu0 %v3312
        %3487 = vmatprep.subr.mxu0 0.0
        %3488 = vmatpush1.msra.mxu0 %v3311
        %3489 = vmatprep.subr.mxu0 0.0
        %3490 = vmatpush1.msra.mxu0 %v3310
        %3491 = vmatprep.subr.mxu0 0.0
        %3492 = vmatpush1.msra.mxu0 %v3309
        %3493 = vmatprep.subr.mxu0 0.0
        %3494 = vmatpush1.msra.mxu0 %v3308
        %3495 = vmatprep.subr.mxu0 0.0
        %3496 = vmatpush1.msra.mxu0 %v3307
        %3497 = vmatprep.subr.mxu0 0.0
        %3498 = vmatpush1.msra.mxu0 %v3306
        %3499 = vmatprep.subr.mxu0 0.0
        %3500 = vmatpush2.msra.mxu0 0.0
        %3501 = vmatprep.subr.mxu0 0.0
        %3502 = vmatpush2.msra.mxu0 0.0
        %3503 = vmatprep.subr.mxu0 0.0
        %3504 = vmatpush2.msra.mxu0 0.0
        %3505 = vmatprep.subr.mxu0 0.0
        %3506 = vmatpush2.msra.mxu0 0.0
        %3507 = vmatprep.subr.mxu0 0.0
        %3508 = vmatpush2.msra.mxu0 0.0
        %3509 = vmatprep.subr.mxu0 0.0
        %3510 = vmatpush2.msra.mxu0 0.0
        %3511 = vmatprep.subr.mxu0 0.0
        %3512 = vmatpush2.msra.mxu0 0.0
        %3513 = vmatprep.subr.mxu0 0.0
        %3514 = vmatpush2.msra.mxu0 0.0
        %3515 = vmatprep.subr.mxu0 0.0
        %3516 = vmatpush2.msra.mxu0 0.0
        %3517 = vmatprep.subr.mxu0 0.0
        %3518 = vmatpush2.msra.mxu0 0.0
        %3519 = vmatprep.subr.mxu0 0.0
        %3520 = vmatpush2.msra.mxu0 0.0
        %3521 = vmatprep.subr.mxu0 0.0
        %3522 = vmatpush2.msra.mxu0 0.0
        %3523 = vmatprep.subr.mxu0 0.0
        %3524 = vmatpush2.msra.mxu0 0.0
        %3525 = vmatprep.subr.mxu0 0.0
        %3526 = vmatpush2.msra.mxu0 0.0
        %3527 = vmatprep.subr.mxu0 0.0
        %3528 = vmatpush2.msra.mxu0 0.0
        %3529 = vmatprep.subr.mxu0 0.0
        %3530 = vmatpush2.msra.mxu0 0.0
        %3531 = vmatprep.mubr.f32.mxu0 0.0
        %3532 = vmatmul.mubr.f32.gmra.mxu0 %v3211
        %v3533 = vpop.f32.mrf.mxu0
        %v3534 = vadd.f32 %v3389, %v3533
        %v3535 = vpop.f32.mrf.mxu0
        %3536 = vmatprep.mubr.f32.mxu0 0.0
        %3537 = vmatmul.mubr.f32.gmra.mxu0 %v3217
        %v3538 = vpop.f32.mrf.mxu0
        %v3539 = vadd.f32 %v3394, %v3538
        %v3540 = vpop.f32.mrf.mxu0
        %3541 = vmatprep.mubr.f32.mxu0 0.0
        %3542 = vmatmul.mubr.f32.gmra.mxu0 %v3220
        %v3543 = vpop.f32.mrf.mxu0
        %v3544 = vadd.f32 %v3399, %v3543
        %v3545 = vpop.f32.mrf.mxu0
        %3546 = vmatprep.mubr.f32.mxu0 0.0
        %3547 = vmatmul.mubr.f32.gmra.mxu0 %v3222
        %v3548 = vpop.f32.mrf.mxu0
        %v3549 = vadd.f32 %v3404, %v3548
        %v3550 = vpop.f32.mrf.mxu0
        %3551 = vmatprep.mubr.f32.mxu0 0.0
        %3552 = vmatmul.mubr.f32.gmra.mxu0 %v3225
        %v3553 = vpop.f32.mrf.mxu0
        %v3554 = vadd.f32 %v3409, %v3553
        %v3555 = vpop.f32.mrf.mxu0
        %3556 = vmatprep.mubr.f32.mxu0 0.0
        %3557 = vmatmul.mubr.f32.gmra.mxu0 %v3227
        %v3558 = vpop.f32.mrf.mxu0
        %v3559 = vadd.f32 %v3414, %v3558
        %v3560 = vpop.f32.mrf.mxu0
        %3561 = vmatprep.mubr.f32.mxu0 0.0
        %3562 = vmatmul.mubr.f32.gmra.mxu0 %v3230
        %v3563 = vpop.f32.mrf.mxu0
        %v3564 = vadd.f32 %v3419, %v3563
        %v3565 = vpop.f32.mrf.mxu0
        %3566 = vmatprep.mubr.f32.mxu0 0.0
        %3567 = vmatmul.mubr.f32.gmra.mxu0 %v3232
        %v3568 = vpop.f32.mrf.mxu0
        %v3569 = vadd.f32 %v3424, %v3568
        %v3570 = vpop.f32.mrf.mxu0
        %3571 = vmatprep.mubr.f32.mxu0 0.0
        %3572 = vmatmul.mubr.f32.gmra.mxu0 %v3235
        %v3573 = vpop.f32.mrf.mxu0
        %v3574 = vadd.f32 %v3429, %v3573
        %v3575 = vpop.f32.mrf.mxu0
        %3576 = vmatprep.mubr.f32.mxu0 0.0
        %3577 = vmatmul.mubr.f32.gmra.mxu0 %v3237
        %v3578 = vpop.f32.mrf.mxu0
        %v3579 = vadd.f32 %v3434, %v3578
        %v3580 = vpop.f32.mrf.mxu0
        %3581 = vmatprep.mubr.f32.mxu0 0.0
        %3582 = vmatmul.mubr.f32.gmra.mxu0 %v3240
        %v3583 = vpop.f32.mrf.mxu0
        %v3584 = vadd.f32 %v3439, %v3583
        %v3585 = vpop.f32.mrf.mxu0
        %3586 = vmatprep.mubr.f32.mxu0 0.0
        %3587 = vmatmul.mubr.f32.gmra.mxu0 %v3242
        %v3588 = vpop.f32.mrf.mxu0
        %v3589 = vadd.f32 %v3444, %v3588
        %v3590 = vpop.f32.mrf.mxu0
        %3591 = vmatprep.mubr.f32.mxu0 0.0
        %3592 = vmatmul.mubr.f32.gmra.mxu0 %v3245
        %v3593 = vpop.f32.mrf.mxu0
        %v3594 = vadd.f32 %v3449, %v3593
        %v3595 = vpop.f32.mrf.mxu0
        %3596 = vmatprep.mubr.f32.mxu0 0.0
        %3597 = vmatmul.mubr.f32.gmra.mxu0 %v3247
        %v3598 = vpop.f32.mrf.mxu0
        %v3599 = vadd.f32 %v3454, %v3598
        %v3600 = vpop.f32.mrf.mxu0
        %3601 = vmatprep.mubr.f32.mxu0 0.0
        %3602 = vmatmul.mubr.f32.gmra.mxu0 %v3250
        %v3603 = vpop.f32.mrf.mxu0
        %v3604 = vadd.f32 %v3459, %v3603
        %v3605 = vpop.f32.mrf.mxu0
        %3606 = vmatprep.mubr.f32.mxu0 0.0
        %3607 = vmatmul.mubr.f32.gmra.mxu0 %v3252
        %v3608 = vpop.f32.mrf.mxu0
        %v3609 = vadd.f32 %v3464, %v3608
        %v3610 = vpop.f32.mrf.mxu0
        %3611 = vdwg.mxu0
        %v3612 = vadd.f32 %v3125, %v3534
        %v3613 = vadd.f32 %v3130, %v3539
        %v3614 = vadd.f32 %v3135, %v3544
        %v3615 = vadd.f32 %v3140, %v3549
        %v3616 = vadd.f32 %v3145, %v3554
        %v3617 = vadd.f32 %v3150, %v3559
        %v3618 = vadd.f32 %v3155, %v3564
        %v3619 = vadd.f32 %v3160, %v3569
        %v3620 = vadd.f32 %v3165, %v3574
        %v3621 = vadd.f32 %v3170, %v3579
        %v3622 = vadd.f32 %v3175, %v3584
        %v3623 = vadd.f32 %v3180, %v3589
        %v3624 = vadd.f32 %v3185, %v3594
        %v3625 = vadd.f32 %v3190, %v3599
        %v3626 = vadd.f32 %v3195, %v3604
        %v3627 = vadd.f32 %v3200, %v3609
        %v3652 = vrot.slane %v314, 2
        %v3653 = vrot.slane %v315, 2
        %v3654 = vsel %vm1528, %v3652, %v3653
        %v3655 = vrot.slane %v316, 2
        %v3656 = vsel %vm1528, %v3653, %v3655
        %v3657 = vrot.slane %v318, 2
        %v3658 = vrot.slane %v319, 2
        %v3659 = vsel %vm1528, %v3657, %v3658
        %v3660 = vrot.slane %v320, 2
        %v3661 = vsel %vm1528, %v3658, %v3660
        %v3662 = vrot.slane %v322, 2
        %v3663 = vrot.slane %v323, 2
        %v3664 = vsel %vm1528, %v3662, %v3663
        %v3665 = vrot.slane %v324, 2
        %v3666 = vsel %vm1528, %v3663, %v3665
        %v3667 = vrot.slane %v326, 2
        %v3668 = vrot.slane %v327, 2
        %v3669 = vsel %vm1528, %v3667, %v3668
        %v3670 = vrot.slane %v328, 2
        %v3671 = vsel %vm1528, %v3668, %v3670
        %v3672 = vrot.slane %v330, 2
        %v3673 = vrot.slane %v331, 2
        %v3674 = vsel %vm1528, %v3672, %v3673
        %v3675 = vrot.slane %v332, 2
        %v3676 = vsel %vm1528, %v3673, %v3675
        %v3677 = vrot.slane %v334, 2
        %v3678 = vrot.slane %v335, 2
        %v3679 = vsel %vm1528, %v3677, %v3678
        %v3680 = vrot.slane %v336, 2
        %v3681 = vsel %vm1528, %v3678, %v3680
        %v3682 = vrot.slane %v338, 2
        %v3683 = vrot.slane %v339, 2
        %v3684 = vsel %vm1528, %v3682, %v3683
        %v3685 = vrot.slane %v340, 2
        %v3686 = vsel %vm1528, %v3683, %v3685
        %v3687 = vrot.slane %v342, 2
        %v3688 = vrot.slane %v343, 2
        %v3689 = vsel %vm1528, %v3687, %v3688
        %v3690 = vrot.slane %v344, 2
        %v3691 = vsel %vm1528, %v3688, %v3690
        %v3708 = vld [vmem:[%s1] sm:$0xff]
        %v3709 = vld [vmem:[%s1 + $0x8] sm:$0xff]
        %v3710 = vld [vmem:[%s1 + $0x10] sm:$0xff]
        %v3711 = vld [vmem:[%s1 + $0x18] sm:$0xff]
        %v3712 = vld [vmem:[%s1 + $0x20] sm:$0xff]
        %v3713 = vld [vmem:[%s1 + $0x28] sm:$0xff]
        %v3714 = vld [vmem:[%s1 + $0x30] sm:$0xff]
        %v3715 = vld [vmem:[%s1 + $0x38] sm:$0xff]
        %v3716 = vld [vmem:[%s1 + $0x40] sm:$0xff]
        %v3717 = vld [vmem:[%s1 + $0x48] sm:$0xff]
        %v3718 = vld [vmem:[%s1 + $0x50] sm:$0xff]
        %v3719 = vld [vmem:[%s1 + $0x58] sm:$0xff]
        %v3720 = vld [vmem:[%s1 + $0x60] sm:$0xff]
        %v3721 = vld [vmem:[%s1 + $0x68] sm:$0xff]
        %v3722 = vld [vmem:[%s1 + $0x70] sm:$0xff]
        %v3723 = vld [vmem:[%s1 + $0x78] sm:$0xff]
        %v3724 = vld [vmem:[%s2] sm:$0x1]
        %v3726 = vlaneseq
        %v3727 = vshrl.u32 %v3726, 7
        %v3728 = vsub.s32 0, %v3727
        %v3729 = vrot.slane %v3724, %v3728
        %3731 = vmatprep.subr.mxu0 0.0
        %3732 = vmatpush1.msra.mxu0 %v3723
        %3733 = vmatprep.subr.mxu0 0.0
        %3734 = vmatpush1.msra.mxu0 %v3722
        %3735 = vmatprep.subr.mxu0 0.0
        %3736 = vmatpush1.msra.mxu0 %v3721
        %3737 = vmatprep.subr.mxu0 0.0
        %3738 = vmatpush1.msra.mxu0 %v3720
        %3739 = vmatprep.subr.mxu0 0.0
        %3740 = vmatpush1.msra.mxu0 %v3719
        %3741 = vmatprep.subr.mxu0 0.0
        %3742 = vmatpush1.msra.mxu0 %v3718
        %3743 = vmatprep.subr.mxu0 0.0
        %3744 = vmatpush1.msra.mxu0 %v3717
        %3745 = vmatprep.subr.mxu0 0.0
        %3746 = vmatpush1.msra.mxu0 %v3716
        %3747 = vmatprep.subr.mxu0 0.0
        %3748 = vmatpush1.msra.mxu0 %v3715
        %3749 = vmatprep.subr.mxu0 0.0
        %3750 = vmatpush1.msra.mxu0 %v3714
        %3751 = vmatprep.subr.mxu0 0.0
        %3752 = vmatpush1.msra.mxu0 %v3713
        %3753 = vmatprep.subr.mxu0 0.0
        %3754 = vmatpush1.msra.mxu0 %v3712
        %3755 = vmatprep.subr.mxu0 0.0
        %3756 = vmatpush1.msra.mxu0 %v3711
        %3757 = vmatprep.subr.mxu0 0.0
        %3758 = vmatpush1.msra.mxu0 %v3710
        %3759 = vmatprep.subr.mxu0 0.0
        %3760 = vmatpush1.msra.mxu0 %v3709
        %3761 = vmatprep.subr.mxu0 0.0
        %3762 = vmatpush1.msra.mxu0 %v3708
        %3763 = vmatprep.subr.mxu0 0.0
        %3764 = vmatpush2.msra.mxu0 0.0
        %3765 = vmatprep.subr.mxu0 0.0
        %3766 = vmatpush2.msra.mxu0 0.0
        %3767 = vmatprep.subr.mxu0 0.0
        %3768 = vmatpush2.msra.mxu0 0.0
        %3769 = vmatprep.subr.mxu0 0.0
        %3770 = vmatpush2.msra.mxu0 0.0
        %3771 = vmatprep.subr.mxu0 0.0
        %3772 = vmatpush2.msra.mxu0 0.0
        %3773 = vmatprep.subr.mxu0 0.0
        %3774 = vmatpush2.msra.mxu0 0.0
        %3775 = vmatprep.subr.mxu0 0.0
        %3776 = vmatpush2.msra.mxu0 0.0
        %3777 = vmatprep.subr.mxu0 0.0
        %3778 = vmatpush2.msra.mxu0 0.0
        %3779 = vmatprep.subr.mxu0 0.0
        %3780 = vmatpush2.msra.mxu0 0.0
        %3781 = vmatprep.subr.mxu0 0.0
        %3782 = vmatpush2.msra.mxu0 0.0
        %3783 = vmatprep.subr.mxu0 0.0
        %3784 = vmatpush2.msra.mxu0 0.0
        %3785 = vmatprep.subr.mxu0 0.0
        %3786 = vmatpush2.msra.mxu0 0.0
        %3787 = vmatprep.subr.mxu0 0.0
        %3788 = vmatpush2.msra.mxu0 0.0
        %3789 = vmatprep.subr.mxu0 0.0
        %3790 = vmatpush2.msra.mxu0 0.0
        %3791 = vmatprep.subr.mxu0 0.0
        %3792 = vmatpush2.msra.mxu0 0.0
        %3793 = vmatprep.subr.mxu0 0.0
        %3794 = vmatpush2.msra.mxu0 0.0
        %3795 = vmatprep.mubr.f32.mxu0 0.0
        %3796 = vmatmul.mubr.f32.gmra.mxu0 %v3654
        %v3797 = vpop.f32.mrf.mxu0
        %v3798 = vadd.f32 %v3729, %v3797
        %v3799 = vpop.f32.mrf.mxu0
        %3800 = vmatprep.mubr.f32.mxu0 0.0
        %3801 = vmatmul.mubr.f32.gmra.mxu0 %v3656
        %v3802 = vpop.f32.mrf.mxu0
        %v3803 = vadd.f32 %v3729, %v3802
        %v3804 = vpop.f32.mrf.mxu0
        %3805 = vmatprep.mubr.f32.mxu0 0.0
        %3806 = vmatmul.mubr.f32.gmra.mxu0 %v3659
        %v3807 = vpop.f32.mrf.mxu0
        %v3808 = vadd.f32 %v3729, %v3807
        %v3809 = vpop.f32.mrf.mxu0
        %3810 = vmatprep.mubr.f32.mxu0 0.0
        %3811 = vmatmul.mubr.f32.gmra.mxu0 %v3661
        %v3812 = vpop.f32.mrf.mxu0
        %v3813 = vadd.f32 %v3729, %v3812
        %v3814 = vpop.f32.mrf.mxu0
        %3815 = vmatprep.mubr.f32.mxu0 0.0
        %3816 = vmatmul.mubr.f32.gmra.mxu0 %v3664
        %v3817 = vpop.f32.mrf.mxu0
        %v3818 = vadd.f32 %v3729, %v3817
        %v3819 = vpop.f32.mrf.mxu0
        %3820 = vmatprep.mubr.f32.mxu0 0.0
        %3821 = vmatmul.mubr.f32.gmra.mxu0 %v3666
        %v3822 = vpop.f32.mrf.mxu0
        %v3823 = vadd.f32 %v3729, %v3822
        %v3824 = vpop.f32.mrf.mxu0
        %3825 = vmatprep.mubr.f32.mxu0 0.0
        %3826 = vmatmul.mubr.f32.gmra.mxu0 %v3669
        %v3827 = vpop.f32.mrf.mxu0
        %v3828 = vadd.f32 %v3729, %v3827
        %v3829 = vpop.f32.mrf.mxu0
        %3830 = vmatprep.mubr.f32.mxu0 0.0
        %3831 = vmatmul.mubr.f32.gmra.mxu0 %v3671
        %v3832 = vpop.f32.mrf.mxu0
        %v3833 = vadd.f32 %v3729, %v3832
        %v3834 = vpop.f32.mrf.mxu0
        %3835 = vmatprep.mubr.f32.mxu0 0.0
        %3836 = vmatmul.mubr.f32.gmra.mxu0 %v3674
        %v3837 = vpop.f32.mrf.mxu0
        %v3838 = vadd.f32 %v3729, %v3837
        %v3839 = vpop.f32.mrf.mxu0
        %3840 = vmatprep.mubr.f32.mxu0 0.0
        %3841 = vmatmul.mubr.f32.gmra.mxu0 %v3676
        %v3842 = vpop.f32.mrf.mxu0
        %v3843 = vadd.f32 %v3729, %v3842
        %v3844 = vpop.f32.mrf.mxu0
        %3845 = vmatprep.mubr.f32.mxu0 0.0
        %3846 = vmatmul.mubr.f32.gmra.mxu0 %v3679
        %v3847 = vpop.f32.mrf.mxu0
        %v3848 = vadd.f32 %v3729, %v3847
        %v3849 = vpop.f32.mrf.mxu0
        %3850 = vmatprep.mubr.f32.mxu0 0.0
        %3851 = vmatmul.mubr.f32.gmra.mxu0 %v3681
        %v3852 = vpop.f32.mrf.mxu0
        %v3853 = vadd.f32 %v3729, %v3852
        %v3854 = vpop.f32.mrf.mxu0
        %3855 = vmatprep.mubr.f32.mxu0 0.0
        %3856 = vmatmul.mubr.f32.gmra.mxu0 %v3684
        %v3857 = vpop.f32.mrf.mxu0
        %v3858 = vadd.f32 %v3729, %v3857
        %v3859 = vpop.f32.mrf.mxu0
        %3860 = vmatprep.mubr.f32.mxu0 0.0
        %3861 = vmatmul.mubr.f32.gmra.mxu0 %v3686
        %v3862 = vpop.f32.mrf.mxu0
        %v3863 = vadd.f32 %v3729, %v3862
        %v3864 = vpop.f32.mrf.mxu0
        %3865 = vmatprep.mubr.f32.mxu0 0.0
        %3866 = vmatmul.mubr.f32.gmra.mxu0 %v3689
        %v3867 = vpop.f32.mrf.mxu0
        %v3868 = vadd.f32 %v3729, %v3867
        %v3869 = vpop.f32.mrf.mxu0
        %3870 = vmatprep.mubr.f32.mxu0 0.0
        %3871 = vmatmul.mubr.f32.gmra.mxu0 %v3691
        %v3872 = vpop.f32.mrf.mxu0
        %v3873 = vadd.f32 %v3729, %v3872
        %v3874 = vpop.f32.mrf.mxu0
        %3875 = vdwg.mxu0
        %v3876 = vadd.f32 %v3798, %v3612
        %v3877 = vadd.f32 %v3803, %v3613
        %v3878 = vadd.f32 %v3808, %v3614
        %v3879 = vadd.f32 %v3813, %v3615
        %v3880 = vadd.f32 %v3818, %v3616
        %v3881 = vadd.f32 %v3823, %v3617
        %v3882 = vadd.f32 %v3828, %v3618
        %v3883 = vadd.f32 %v3833, %v3619
        %v3884 = vadd.f32 %v3838, %v3620
        %v3885 = vadd.f32 %v3843, %v3621
        %v3886 = vadd.f32 %v3848, %v3622
        %v3887 = vadd.f32 %v3853, %v3623
        %v3888 = vadd.f32 %v3858, %v3624
        %v3889 = vadd.f32 %v3863, %v3625
        %v3890 = vadd.f32 %v3868, %v3626
        %v3891 = vadd.f32 %v3873, %v3627
        %v3892 = vld [vmem:[%s6] sm:$0x1]
        %v3894 = vlaneseq
        %v3895 = vshrl.u32 %v3894, 7
        %v3896 = vsub.s32 0, %v3895
        %v3897 = vrot.slane %v3892, %v3896
        %v3899 = vadd.f32 %v3876, %v3897
        %v3900 = vadd.f32 %v3877, %v3897
        %v3901 = vadd.f32 %v3878, %v3897
        %v3902 = vadd.f32 %v3879, %v3897
        %v3903 = vadd.f32 %v3880, %v3897
        %v3904 = vadd.f32 %v3881, %v3897
        %v3905 = vadd.f32 %v3882, %v3897
        %v3906 = vadd.f32 %v3883, %v3897
        %v3907 = vadd.f32 %v3884, %v3897
        %v3908 = vadd.f32 %v3885, %v3897
        %v3909 = vadd.f32 %v3886, %v3897
        %v3910 = vadd.f32 %v3887, %v3897
        %v3911 = vadd.f32 %v3888, %v3897
        %v3912 = vadd.f32 %v3889, %v3897
        %v3913 = vadd.f32 %v3890, %v3897
        %v3914 = vadd.f32 %v3891, %v3897
        %v3915 = vadd.f32 %v3899, %v3901
        %v3916 = vadd.f32 %v3900, %v3902
        %v3917 = vadd.f32 %v3903, %v3905
        %v3918 = vadd.f32 %v3904, %v3906
        %v3919 = vadd.f32 %v3907, %v3909
        %v3920 = vadd.f32 %v3908, %v3910
        %v3921 = vadd.f32 %v3911, %v3913
        %v3922 = vadd.f32 %v3912, %v3914
        %3923 = vst [vmem:[#allocation2] sm:$0xff] %v3915
        %3924 = vst [vmem:[#allocation2 + $0x8] sm:$0xff] %v3916
        %3925 = vst [vmem:[#allocation2 + $0x10] sm:$0xff] %v3917
        %3926 = vst [vmem:[#allocation2 + $0x18] sm:$0xff] %v3918
        %3927 = vst [vmem:[#allocation2 + $0x20] sm:$0xff] %v3919
        %3928 = vst [vmem:[#allocation2 + $0x28] sm:$0xff] %v3920
        %3929 = vst [vmem:[#allocation2 + $0x30] sm:$0xff] %v3921
        %3930 = vst [vmem:[#allocation2 + $0x38] sm:$0xff] %v3922
        %v3931 = vld [vmem:[#allocation2] ss:$2 sm:$0xff]
        %s3932 = scalar_lea.vmem [#allocation2], 16
        %v3933 = vld [vmem:[%s3932] ss:$2 sm:$0xff]
        %s3934 = scalar_lea.vmem [#allocation2], 32
        %v3935 = vld [vmem:[%s3934] ss:$2 sm:$0xff]
        %s3936 = scalar_lea.vmem [#allocation2], 48
        %v3937 = vld [vmem:[%s3936] ss:$2 sm:$0xff]
        %s3938 = scalar_lea.vmem [#allocation2], 1
        %v3939 = vld [vmem:[%s3938] ss:$2 sm:$0xff]
        %s3940 = scalar_lea.vmem [#allocation2], 17
        %v3941 = vld [vmem:[%s3940] ss:$2 sm:$0xff]
        %s3942 = scalar_lea.vmem [#allocation2], 33
        %v3943 = vld [vmem:[%s3942] ss:$2 sm:$0xff]
        %s3944 = scalar_lea.vmem [#allocation2], 49
        %v3945 = vld [vmem:[%s3944] ss:$2 sm:$0xff]
        %v3946 = vadd.f32 %v3931, %v3939
        %v3947 = vadd.f32 %v3933, %v3941
        %v3948 = vadd.f32 %v3935, %v3943
        %v3949 = vadd.f32 %v3937, %v3945
        %v3950 = vmul.f32 %v3946, 0.25
        %v3951 = vmul.f32 %v3947, 0.25
        %v3952 = vmul.f32 %v3948, 0.25
        %v3953 = vmul.f32 %v3949, 0.25
        %3954 = vst [vmem:[%s295] sm:$0xff] %v3950
        %3955 = vst [vmem:[%s295 + $0x8] sm:$0xff] %v3951
        %3956 = vst [vmem:[%s295 + $0x10] sm:$0xff] %v3952
        %3957 = vst [vmem:[%s295 + $0x18] sm:$0xff] %v3953
        %s3958 = sand.u32 %s199, 1
        %s3959 = scalar_lea.sflag [#allocation4], %s3958
        %s3960 = sand.u32 %s199, 1
        %s3961 = smul.addr %s3960, 32
        %s3962 = scalar_lea.vmem [#allocation3], %s3961
        // Predicated region
        $region49: #{tpu_custom_call.1} parent=47 // pred_check
          %p3963 = pneg %p209
        $region50: #{tpu_custom_call.1} parent=47 // pred_check_branch
          %3965 = sbr.rel (%p3963) target = $region52
        $region51: #{tpu_custom_call.1} parent=47 // pred_region
          %s3966 = smul.u32 4, %s26
          %s3968 = ssub.s32 512, 512
          %3969 = vsyncadd %s3959, %s3968
          %s3970 = smul.addr %s25, 8
          %s3971 = sadd.s32 %s3966, %s3970
          %s3972 = smul.addr %s3971, 128
          %s3973 = scalar_lea.hbm %s7, %s3972
          %s3974 = sshll.u32 %s3962, 4
          %s3975 = int_to_ptr.vmem [resolvable:$true] %s3974
          %3980 = dma.vmem_to_hbm [thread:$0]  %s3975, 512, %s3973, %s3959, 128, 128, 8
        $region52: #{tpu_custom_call.1} parent=47 // pred_fallthru
          _
      $region48: #{tpu_custom_call.1} parent=5 // pred_fallthru
        _
      %p3981 = scmp.le.s32.totalorder 2, %s16
      // Predicated region
      $region53: #{tpu_custom_call.1} parent=5 // pred_check
        %p3982 = pneg %p3981
      $region54: #{tpu_custom_call.1} parent=5 // pred_check_branch
        %3984 = sbr.rel (%p3982) target = $region56
      $region55: #{tpu_custom_call.1} parent=5 // pred_region
        %s3985 = ssub.s32 %s16, 2
        // Predicated region
        $region57: #{tpu_custom_call.1} parent=55 // pred_check
          %p3986 = pneg %p215
        $region58: #{tpu_custom_call.1} parent=55 // pred_check_branch
          %3988 = sbr.rel (%p3986) target = $region60
        $region59: #{tpu_custom_call.1} parent=55 // pred_region
          %s3989 = sand.u32 %s200, 1
          %s3990 = scalar_lea.sflag [#allocation4], %s3989
          %s3991 = sand.u32 %s200, 1
          %s3992 = smul.addr %s3991, 32
          %s3993 = scalar_lea.vmem [#allocation3], %s3992
          %3994 = dma.done %s3990, 512
        $region60: #{tpu_custom_call.1} parent=55 // pred_fallthru
          _
      $region56: #{tpu_custom_call.1} parent=5 // pred_fallthru
        _
    $region6: #{tpu_custom_call.1} parent=1 // loop_footer
      %s20 = sadd.s32 1, %s16
    $region7: #{tpu_custom_call.1} parent=1 // loop_footer_branch
      %15 = sbr.rel target = $region3
    $region8: #{tpu_custom_call.1} parent=1 // loop_exit
      _
    %3995 = vsyncpa [#allocation4], 1
    %s3996 = scalar_lea.sflag [#allocation4], 1
    %3997 = vsyncpa %s3996, 1

</llo_original>
